<compile_context>
chip_gen: v5e
topology: v5e:2x2
jax: 0.10.0
libtpu: 0.0.40
codegen_flags: <defaults>
</compile_context>

<pallas_src>
import functools

import jax
import jax.numpy as jnp
from jax.experimental import pallas as pl
from jax.experimental.pallas import tpu as pltpu


_W_OFF = 8  # sublane-tile-aligned column offset of conv interiors inside the
            # padded VMEM scratch buffers.


# ----------------------------- in-kernel helpers -----------------------------

def _conv3x3_from_padded(xp, ho, wo, cread, w_taps):
    """Stride-1 3x3 conv from a zero-padded value.

    xp     : (ho+2, _W_OFF+wo+1, C>=cread) value; the conv input interior is
             at [1:ho+1, _W_OFF:_W_OFF+wo, :cread] with a zero border.
    w_taps : (9, cread, cout), tap t = kh*3 + kw.
    returns: (ho*wo, cout) f32 accumulator (initialized from the first tap's
             matmul -- no zero materialization / extra add).
    """
    m = ho * wo
    acc = None
    for kh in range(3):
        for kw in range(3):
            c0 = _W_OFF - 1 + kw
            tap = xp[kh:kh + ho, c0:c0 + wo, :cread].reshape(m, cread)
            d = jnp.dot(tap, w_taps[kh * 3 + kw],
                        preferred_element_type=jnp.float32)
            acc = d if acc is None else acc + d
    return acc


def _conv3x3_stride2_from_parity(xpp, ho, wo, cin, w_taps):
    """Stride-2 3x3 conv (padding 1) from the four parity planes of the input.

    xpp    : (4, ho+1, _W_OFF+wo, cin) value.  Plane p = 2*hp + wp holds
             x[hp::2, wp::2] at interior [p, 1:ho+1, _W_OFF:_W_OFF+wo, :];
             row 0 and column _W_OFF-1 are zero (the conv's zero padding).
    w_taps : (9, cin, cout), tap t = kh*3 + kw.

    For output pixel (i, j), tap (kh, kw) reads x[2i+kh-1, 2j+kw-1]:
      kh==1 -> even-row plane at row i;  kh==0 / kh==2 -> odd-row plane at
      row i-1 / i (the -1 shift realized through the zero border); same for
      kw / columns.  So every tap is a plain shifted window of one plane.
    """
    m = ho * wo
    acc = None
    for kh in range(3):
        for kw in range(3):
            pp = 2 * (0 if kh == 1 else 1) + (0 if kw == 1 else 1)
            r0 = 0 if kh == 0 else 1
            c0 = _W_OFF - 1 if kw == 0 else _W_OFF
            tap = xpp[pp, r0:r0 + ho, c0:c0 + wo, :].reshape(m, cin)
            d = jnp.dot(tap, w_taps[kh * 3 + kw],
                        preferred_element_type=jnp.float32)
            acc = d if acc is None else acc + d
    return acc


def _identity_block_body(cur, pad_main, params, ho, wo, cout):
    """One identity-shortcut BasicBlock on a VMEM/vreg-resident (m, cout) value."""
    s1, b1, w1, s2, b2, w2 = params
    xn = jnp.maximum(cur * s1 + b1, 0.0)                       # BN1 + ReLU
    pad_main[1:ho + 1, _W_OFF:_W_OFF + wo, :cout] = xn.reshape(ho, wo, cout)
    acc1 = _conv3x3_from_padded(pad_main[...], ho, wo, cout, w1)
    o2 = jnp.maximum(acc1 * s2 + b2, 0.0)                      # BN2 + ReLU
    pad_main[1:ho + 1, _W_OFF:_W_OFF + wo, :cout] = o2.reshape(ho, wo, cout)
    acc2 = _conv3x3_from_padded(pad_main[...], ho, wo, cout, w2)
    return cur + acc2                                          # identity residual


def _make_network_block_kernel(metas, ho, wo, cmain, use_parity):
    """Fused kernel for a full NetworkBlock (all BasicBlocks, one image/step).

    metas: per-layer static info {"cin", "cout", "proj"} (proj only layer 0).
    """
    nlayers = len(metas)
    m = ho * wo
    wp_main = _W_OFF + wo + 1

    def kernel(*refs):
        it = iter(refs)
        x_ref = next(it)
        layer_refs = []
        for mt in metas:
            cnt = 7 if mt["proj"] else 6
            layer_refs.append([next(it) for _ in range(cnt)])
        o_ref = next(it)
        pad_par = next(it) if use_parity else None
        pad_main = next(it)

        # Zero only the border strips the convolutions actually read; every
        # interior is fully rewritten before each conv consumes it.
        zrow = jnp.zeros((1, wp_main, cmain), jnp.float32)
        zcol = jnp.zeros((ho + 2, 1, cmain), jnp.float32)
        pad_main[0:1, :, :] = zrow
        pad_main[ho + 1:ho + 2, :, :] = zrow
        pad_main[:, _W_OFF - 1:_W_OFF, :] = zcol
        pad_main[:, _W_OFF + wo:_W_OFF + wo + 1, :] = zcol

        # ------------------------------ layer 0 ------------------------------
        mt0 = metas[0]
        cin0, cout = mt0["cin"], mt0["cout"]
        p0 = [r[...] for r in layer_refs[0]]
        if mt0["proj"]:
            s1, b1, w1, s2, b2, w2, ws = p0
            if use_parity:
                # stride-2 conv1 from the four parity planes of x.
                pad_par[:, 0:1, :, :] = jnp.zeros(
                    (4, 1, _W_OFF + wo, cin0), jnp.float32)
                pad_par[:, :, _W_OFF - 1:_W_OFF, :] = jnp.zeros(
                    (4, ho + 1, 1, cin0), jnp.float32)
                xall = x_ref[0]                                # (4*ho, wo, cin)
                xn = jnp.maximum(xall * s1 + b1, 0.0)          # BN1+ReLU once
                pad_par[:, 1:ho + 1, _W_OFF:_W_OFF + wo, :] = (
                    xn.reshape(4, ho, wo, cin0))
                acc1 = _conv3x3_stride2_from_parity(
                    pad_par[...], ho, wo, cin0, w1)
                # even/even plane == stride-2 subsampling of relu(bn1(x)),
                # i.e. exactly the 1x1-shortcut conv input.
                short_in = xn[0:ho].reshape(m, cin0)
            else:
                # stride-1 projection block (Cin != Cout, no downsampling).
                xv = x_ref[0]                                  # (ho, wo, cin)
                xn = jnp.maximum(xv * s1 + b1, 0.0)
                pad_main[1:ho + 1, _W_OFF:_W_OFF + wo, :cin0] = xn
                acc1 = _conv3x3_from_padded(pad_main[...], ho, wo, cin0, w1)
                short_in = xn.reshape(m, cin0)
            o2 = jnp.maximum(acc1 * s2 + b2, 0.0)              # BN2+ReLU fused
            pad_main[1:ho + 1, _W_OFF:_W_OFF + wo, :cout] = (
                o2.reshape(ho, wo, cout))
            acc2 = _conv3x3_from_padded(pad_main[...], ho, wo, cout, w2)
            # 1x1 shortcut matmul initializes the residual accumulator.
            cur = jnp.dot(short_in, ws,
                          preferred_element_type=jnp.float32) + acc2
        else:
            cur = x_ref[0].reshape(m, cout)
            cur = _identity_block_body(cur, pad_main, p0, ho, wo, cout)

        # ---------------------- layers 1 .. nb_layers-1 ----------------------
        # Activation stays resident in VMEM/vregs between blocks.
        for li in range(1, nlayers):
            pli = [r[...] for r in layer_refs[li]]
            cur = _identity_block_body(cur, pad_main, pli, ho, wo,
                                       metas[li]["cout"])

        o_ref[0] = cur.astype(o_ref.dtype)

    return kernel


# ----------------------------- wrapper glue -----------------------------

def _bn_fold_2d(scale, bias):
    return scale.reshape(1, -1), bias.reshape(1, -1)


def _w3x3_taps(w_oihw):
    cout, cin = w_oihw.shape[0], w_oihw.shape[1]
    # (Cout, Cin, KH, KW) -> (9, Cin, Cout), tap t = kh*3 + kw.
    return jnp.transpose(w_oihw, (2, 3, 1, 0)).reshape(9, cin, cout)


def _full_spec(shape):
    return pl.BlockSpec(shape, lambda i: (0,) * len(shape))


def network_block_forward(x_nchw, params_list, stride):
    """Forward pass of the whole NetworkBlock as a single fused pallas_call."""
    x = jnp.transpose(x_nchw, (0, 2, 3, 1))                   # NCHW -> NHWC
    n, h, w, cin = x.shape
    cout = params_list[0]["conv1_w"].shape[0]

    proj0 = cin != cout
    if not proj0 and stride != 1:
        raise ValueError("identity-shortcut BasicBlock requires stride == 1")
    if proj0 and stride not in (1, 2):
        raise NotImplementedError("projection BasicBlock: stride must be 1 or 2")
    use_parity = proj0 and stride == 2
    if use_parity and (h % 2 or w % 2):
        raise NotImplementedError("stride-2 path requires even H and W")

    ho = (h - 1) // stride + 1
    wo = (w - 1) // stride + 1
    m = ho * wo

    inputs, in_specs, metas = [], [], []

    if use_parity:
        # Parity decomposition of x (a partition -> exactly 1.0x HBM read, no
        # overlap, no mask): plane p = 2*hp + wp holds x[:, hp::2, wp::2, :].
        planes = [x[:, hp::2, wp::2, :] for hp in (0, 1) for wp in (0, 1)]
        xin = jnp.concatenate(planes, axis=1)                 # (n, 4*ho, wo, cin)
        in_specs.append(pl.BlockSpec((1, 4 * ho, wo, cin),
                                     lambda i: (i, 0, 0, 0)))
    else:
        xin = x
        in_specs.append(pl.BlockSpec((1, h, w, cin), lambda i: (i, 0, 0, 0)))
    inputs.append(xin)

    for li, p in enumerate(params_list):
        lcin = cin if li == 0 else cout
        proj = li == 0 and proj0
        metas.append({"cin": lcin, "cout": cout, "proj": proj})
        bn1_s, bn1_b = _bn_fold_2d(p["bn1_scale"], p["bn1_bias"])
        bn2_s, bn2_b = _bn_fold_2d(p["bn2_scale"], p["bn2_bias"])
        arrays = [bn1_s, bn1_b, _w3x3_taps(p["conv1_w"]),
                  bn2_s, bn2_b, _w3x3_taps(p["conv2_w"])]
        if proj:
            arrays.append(p["short_w"].reshape(cout, lcin).T)  # (Cin, Cout)
        for a in arrays:
            inputs.append(a)
            in_specs.append(_full_spec(a.shape))

    cmain = max(cin, cout) if (proj0 and stride == 1) else cout
    scratch = []
    if use_parity:
        scratch.append(pltpu.VMEM((4, ho + 1, _W_OFF + wo, cin), jnp.float32))
    scratch.append(pltpu.VMEM((ho + 2, _W_OFF + wo + 1, cmain), jnp.float32))

    kernel = _make_network_block_kernel(metas, ho, wo, cmain, use_parity)

    out = pl.pallas_call(
        kernel,
        out_shape=jax.ShapeDtypeStruct((n, m, cout), jnp.float32),
        grid=(n,),
        in_specs=in_specs,
        out_specs=pl.BlockSpec((1, m, cout), lambda i: (i, 0, 0)),
        scratch_shapes=scratch,
        compiler_params=pltpu.CompilerParams(
            dimension_semantics=("parallel",)),
    )(*inputs)

    out = out.reshape(n, ho, wo, cout)
    return jnp.transpose(out, (0, 3, 1, 2))                   # NHWC -> NCHW


# ----------------------------- pure-JAX reference -----------------------------

def _ref_conv(x, w_oihw, stride, pad):
    return jax.lax.conv_general_dilated(
        x, jnp.transpose(w_oihw, (2, 3, 1, 0)),
        window_strides=(stride, stride), padding=pad,
        dimension_numbers=("NHWC", "HWIO", "NHWC"))


def _ref_basic_block(x, p, stride):
    cin, cout = x.shape[-1], p["conv1_w"].shape[0]
    equal = cin == cout
    xn = jnp.maximum(x * p["bn1_scale"] + p["bn1_bias"], 0.0)
    c1 = _ref_conv(xn, p["conv1_w"], stride, ((1, 1), (1, 1)))
    o2 = jnp.maximum(c1 * p["bn2_scale"] + p["bn2_bias"], 0.0)
    c2 = _ref_conv(o2, p["conv2_w"], 1, ((1, 1), (1, 1)))
    res = x if equal else _ref_conv(xn, p["short_w"], stride, ((0, 0), (0, 0)))
    return res + c2


def ref_network_block(x_nchw, params_list, stride):
    x = jnp.transpose(x_nchw, (0, 2, 3, 1))
    for i, p in enumerate(params_list):
        x = _ref_basic_block(x, p, stride if i == 0 else 1)
    return jnp.transpose(x, (0, 3, 1, 2))


# ----------------------------- parameter init -----------------------------

def init_basic_block_params(key, cin, cout):
    ks = jax.random.split(key, 10)

    def conv_w(k, shape):
        fan = shape[1] * shape[2] * shape[3]
        return (jax.random.normal(k, shape, jnp.float32)
                * jnp.sqrt(2.0 / fan)).astype(jnp.float32)

    def bn_fold(kg, kb, km, kv, c):
        gamma = jax.random.uniform(kg, (c,), jnp.float32, 0.5, 1.5)
        beta = 0.1 * jax.random.normal(kb, (c,), jnp.float32)
        mean = 0.1 * jax.random.normal(km, (c,), jnp.float32)
        var = jax.random.uniform(kv, (c,), jnp.float32, 0.5, 1.5)
        scale = gamma / jnp.sqrt(var + 1e-5)
        bias = beta - mean * scale
        return scale, bias

    bn1_scale, bn1_bias = bn_fold(ks[0], ks[1], ks[2], ks[3], cin)
    bn2_scale, bn2_bias = bn_fold(ks[4], ks[5], ks[6], ks[7], cout)
    p = {
        "bn1_scale": bn1_scale, "bn1_bias": bn1_bias,
        "bn2_scale": bn2_scale, "bn2_bias": bn2_bias,
        "conv1_w": conv_w(ks[8], (cout, cin, 3, 3)),
        "conv2_w": conv_w(ks[9], (cout, cout, 3, 3)),
    }
    if cin != cout:
        p["short_w"] = conv_w(jax.random.fold_in(key, 99), (cout, cin, 1, 1))
    return p


def init_network_block_params(key, nb_layers, in_planes, out_planes):
    params = []
    for i in range(nb_layers):
        cin = in_planes if i == 0 else out_planes
        params.append(init_basic_block_params(jax.random.fold_in(key, i),
                                              cin, out_planes))
    return params


# ----------------------------- main -----------------------------

if __name__ == "__main__":
    key = jax.random.PRNGKey(0)
    kx, kp = jax.random.split(key)

    # NetworkBlock(nb_layers=2, in_planes=4, out_planes=8, block=BasicBlock,
    #              stride=2, dropRate=0.0) applied to x: NCHW (2, 4, 16, 16)
    batch, in_planes, out_planes, hw = 2, 4, 8, 16
    nb_layers, stride = 2, 2

    x = jax.random.normal(kx, (batch, in_planes, hw, hw), jnp.float32)
    params = init_network_block_params(kp, nb_layers, in_planes, out_planes)

    fwd = jax.jit(functools.partial(network_block_forward, stride=stride))
    out = jax.block_until_ready(fwd(x, params))

    ref_fn = jax.jit(functools.partial(ref_network_block, stride=stride))
    ref = jax.block_until_ready(ref_fn(x, params))

    assert out.shape == (batch, out_planes, hw // stride, hw // stride), out.shape
    assert jnp.allclose(out, ref, rtol=1e-4, atol=1e-4), "mismatch vs reference"

    print("KERNEL_OK")
</pallas_src>

<mosaic_0001>
module attributes {stable_mosaic.version = 11 : i64} {
  func.func @kernel(%arg0: i32, %arg1: memref<1x32x8x4xf32, #tpu.memory_space<vmem>>, %arg2: memref<1x4xf32, #tpu.memory_space<vmem>>, %arg3: memref<1x4xf32, #tpu.memory_space<vmem>>, %arg4: memref<9x4x8xf32, #tpu.memory_space<vmem>>, %arg5: memref<1x8xf32, #tpu.memory_space<vmem>>, %arg6: memref<1x8xf32, #tpu.memory_space<vmem>>, %arg7: memref<9x8x8xf32, #tpu.memory_space<vmem>>, %arg8: memref<4x8xf32, #tpu.memory_space<vmem>>, %arg9: memref<1x8xf32, #tpu.memory_space<vmem>>, %arg10: memref<1x8xf32, #tpu.memory_space<vmem>>, %arg11: memref<9x8x8xf32, #tpu.memory_space<vmem>>, %arg12: memref<1x8xf32, #tpu.memory_space<vmem>>, %arg13: memref<1x8xf32, #tpu.memory_space<vmem>>, %arg14: memref<9x8x8xf32, #tpu.memory_space<vmem>>, %arg15: memref<1x64x8xf32, #tpu.memory_space<vmem>>, %arg16: memref<4x9x16x4xf32, #tpu.memory_space<vmem>>, %arg17: memref<10x17x8xf32, #tpu.memory_space<vmem>>) attributes {dimension_semantics = [#tpu.dimension_semantics<parallel>], iteration_bounds = array<i64: 2>, scalar_prefetch = 0 : i64, scratch_operands = 2 : i64, tpu.core_type = #tpu.core_type<tc>, window_params = [{transform_indices = @transform_0, window_bounds = array<i64: 1, 32, 8, 4>}, {pipeline_mode = #tpu.pipeline_mode<synchronous>, transform_indices = @transform_1, window_bounds = array<i64: 1, 4>}, {pipeline_mode = #tpu.pipeline_mode<synchronous>, transform_indices = @transform_2, window_bounds = array<i64: 1, 4>}, {pipeline_mode = #tpu.pipeline_mode<synchronous>, transform_indices = @transform_3, window_bounds = array<i64: 9, 4, 8>}, {pipeline_mode = #tpu.pipeline_mode<synchronous>, transform_indices = @transform_4, window_bounds = array<i64: 1, 8>}, {pipeline_mode = #tpu.pipeline_mode<synchronous>, transform_indices = @transform_5, window_bounds = array<i64: 1, 8>}, {pipeline_mode = #tpu.pipeline_mode<synchronous>, transform_indices = @transform_6, window_bounds = array<i64: 9, 8, 8>}, {pipeline_mode = #tpu.pipeline_mode<synchronous>, transform_indices = @transform_7, window_bounds = array<i64: 4, 8>}, {pipeline_mode = #tpu.pipeline_mode<synchronous>, transform_indices = @transform_8, window_bounds = array<i64: 1, 8>}, {pipeline_mode = #tpu.pipeline_mode<synchronous>, transform_indices = @transform_9, window_bounds = array<i64: 1, 8>}, {pipeline_mode = #tpu.pipeline_mode<synchronous>, transform_indices = @transform_10, window_bounds = array<i64: 9, 8, 8>}, {pipeline_mode = #tpu.pipeline_mode<synchronous>, transform_indices = @transform_11, window_bounds = array<i64: 1, 8>}, {pipeline_mode = #tpu.pipeline_mode<synchronous>, transform_indices = @transform_12, window_bounds = array<i64: 1, 8>}, {pipeline_mode = #tpu.pipeline_mode<synchronous>, transform_indices = @transform_13, window_bounds = array<i64: 9, 8, 8>}, {transform_indices = @transform_14, window_bounds = array<i64: 1, 64, 8>}]} {
    %cst = arith.constant 0.000000e+00 : f32
    %0 = vector.broadcast %cst : f32 to vector<1x17x8xf32>
    %cst_0 = arith.constant 0.000000e+00 : f32
    %1 = vector.broadcast %cst_0 : f32 to vector<10x1x8xf32>
    %c0 = arith.constant 0 : index
    %c0_1 = arith.constant 0 : index
    %c0_2 = arith.constant 0 : index
    %2 = vector.load %arg17[%c0, %c0_1, %c0_2] : memref<10x17x8xf32, #tpu.memory_space<vmem>>, vector<1x17x8xf32>
    tpu.vector_store %arg17[%c0, %c0_1, %c0_2], %0 {strides = array<i32>} : memref<10x17x8xf32, #tpu.memory_space<vmem>>, vector<1x17x8xf32>,
    %c9 = arith.constant 9 : index
    %c0_3 = arith.constant 0 : index
    %c0_4 = arith.constant 0 : index
    %3 = vector.load %arg17[%c9, %c0_3, %c0_4] : memref<10x17x8xf32, #tpu.memory_space<vmem>>, vector<1x17x8xf32>
    tpu.vector_store %arg17[%c9, %c0_3, %c0_4], %0 {strides = array<i32>} : memref<10x17x8xf32, #tpu.memory_space<vmem>>, vector<1x17x8xf32>,
    %c0_5 = arith.constant 0 : index
    %c7 = arith.constant 7 : index
    %c0_6 = arith.constant 0 : index
    %4 = vector.load %arg17[%c0_5, %c7, %c0_6] : memref<10x17x8xf32, #tpu.memory_space<vmem>>, vector<10x1x8xf32>
    tpu.vector_store %arg17[%c0_5, %c7, %c0_6], %1 {strides = array<i32>} : memref<10x17x8xf32, #tpu.memory_space<vmem>>, vector<10x1x8xf32>,
    %c0_7 = arith.constant 0 : index
    %c16 = arith.constant 16 : index
    %c0_8 = arith.constant 0 : index
    %5 = vector.load %arg17[%c0_7, %c16, %c0_8] : memref<10x17x8xf32, #tpu.memory_space<vmem>>, vector<10x1x8xf32>
    tpu.vector_store %arg17[%c0_7, %c16, %c0_8], %1 {strides = array<i32>} : memref<10x17x8xf32, #tpu.memory_space<vmem>>, vector<10x1x8xf32>,
    %c0_9 = arith.constant 0 : index
    %c0_10 = arith.constant 0 : index
    %6 = vector.load %arg2[%c0_9, %c0_10] : memref<1x4xf32, #tpu.memory_space<vmem>>, vector<1x4xf32>
    %c0_11 = arith.constant 0 : index
    %c0_12 = arith.constant 0 : index
    %7 = vector.load %arg3[%c0_11, %c0_12] : memref<1x4xf32, #tpu.memory_space<vmem>>, vector<1x4xf32>
    %c0_13 = arith.constant 0 : index
    %c0_14 = arith.constant 0 : index
    %c0_15 = arith.constant 0 : index
    %8 = vector.load %arg4[%c0_13, %c0_14, %c0_15] : memref<9x4x8xf32, #tpu.memory_space<vmem>>, vector<9x4x8xf32>
    %c0_16 = arith.constant 0 : index
    %c0_17 = arith.constant 0 : index
    %9 = vector.load %arg5[%c0_16, %c0_17] : memref<1x8xf32, #tpu.memory_space<vmem>>, vector<1x8xf32>
    %c0_18 = arith.constant 0 : index
    %c0_19 = arith.constant 0 : index
    %10 = vector.load %arg6[%c0_18, %c0_19] : memref<1x8xf32, #tpu.memory_space<vmem>>, vector<1x8xf32>
    %c0_20 = arith.constant 0 : index
    %c0_21 = arith.constant 0 : index
    %c0_22 = arith.constant 0 : index
    %11 = vector.load %arg7[%c0_20, %c0_21, %c0_22] : memref<9x8x8xf32, #tpu.memory_space<vmem>>, vector<9x8x8xf32>
    %c0_23 = arith.constant 0 : index
    %c0_24 = arith.constant 0 : index
    %12 = vector.load %arg8[%c0_23, %c0_24] : memref<4x8xf32, #tpu.memory_space<vmem>>, vector<4x8xf32>
    %cst_25 = arith.constant 0.000000e+00 : f32
    %13 = vector.broadcast %cst_25 : f32 to vector<4x1x16x4xf32>
    %c0_26 = arith.constant 0 : index
    %c0_27 = arith.constant 0 : index
    %c0_28 = arith.constant 0 : index
    %c0_29 = arith.constant 0 : index
    %14 = vector.load %arg16[%c0_26, %c0_27, %c0_28, %c0_29] : memref<4x9x16x4xf32, #tpu.memory_space<vmem>>, vector<4x1x16x4xf32>
    tpu.vector_store %arg16[%c0_26, %c0_27, %c0_28, %c0_29], %13 {strides = array<i32>} : memref<4x9x16x4xf32, #tpu.memory_space<vmem>>, vector<4x1x16x4xf32>,
    %cst_30 = arith.constant 0.000000e+00 : f32
    %15 = vector.broadcast %cst_30 : f32 to vector<4x9x1x4xf32>
    %c0_31 = arith.constant 0 : index
    %c0_32 = arith.constant 0 : index
    %c7_33 = arith.constant 7 : index
    %c0_34 = arith.constant 0 : index
    %16 = vector.load %arg16[%c0_31, %c0_32, %c7_33, %c0_34] : memref<4x9x16x4xf32, #tpu.memory_space<vmem>>, vector<4x9x1x4xf32>
    tpu.vector_store %arg16[%c0_31, %c0_32, %c7_33, %c0_34], %15 {strides = array<i32>} : memref<4x9x16x4xf32, #tpu.memory_space<vmem>>, vector<4x9x1x4xf32>,
    %c0_35 = arith.constant 0 : index
    %c0_36 = arith.constant 0 : index
    %c0_37 = arith.constant 0 : index
    %c0_38 = arith.constant 0 : index
    %17 = vector.load %arg1[%c0_35, %c0_36, %c0_37, %c0_38] : memref<1x32x8x4xf32, #tpu.memory_space<vmem>>, vector<1x32x8x4xf32>
    %18 = vector.shape_cast %17 : vector<1x32x8x4xf32> to vector<32x8x4xf32>
    %19 = vector.shape_cast %6 : vector<1x4xf32> to vector<1x1x4xf32>
    %20 = vector.broadcast %19 : vector<1x1x4xf32> to vector<32x8x4xf32>
    %21 = arith.mulf %18, %20 : vector<32x8x4xf32>
    %22 = vector.shape_cast %7 : vector<1x4xf32> to vector<1x1x4xf32>
    %23 = vector.broadcast %22 : vector<1x1x4xf32> to vector<32x8x4xf32>
    %24 = arith.addf %21, %23 : vector<32x8x4xf32>
    %cst_39 = arith.constant 0.000000e+00 : f32
    %25 = vector.broadcast %cst_39 : f32 to vector<32x8x4xf32>
    %26 = arith.maximumf %24, %25 : vector<32x8x4xf32>
    %27 = vector.shape_cast %26 : vector<32x8x4xf32> to vector<4x8x8x4xf32>
    %c0_40 = arith.constant 0 : index
    %c1 = arith.constant 1 : index
    %c8 = arith.constant 8 : index
    %c0_41 = arith.constant 0 : index
    %28 = vector.load %arg16[%c0_40, %c1, %c8, %c0_41] : memref<4x9x16x4xf32, #tpu.memory_space<vmem>>, vector<4x8x8x4xf32>
    tpu.vector_store %arg16[%c0_40, %c1, %c8, %c0_41], %27 {strides = array<i32>} : memref<4x9x16x4xf32, #tpu.memory_space<vmem>>, vector<4x8x8x4xf32>,
    %c0_42 = arith.constant 0 : index
    %c0_43 = arith.constant 0 : index
    %c0_44 = arith.constant 0 : index
    %c0_45 = arith.constant 0 : index
    %29 = vector.load %arg16[%c0_42, %c0_43, %c0_44, %c0_45] : memref<4x9x16x4xf32, #tpu.memory_space<vmem>>, vector<4x9x16x4xf32>
    %30 = vector.extract_strided_slice %29 {offsets = [3, 0, 7, 0], sizes = [1, 8, 8, 4], strides = [1, 1, 1, 1]} : vector<4x9x16x4xf32> to vector<1x8x8x4xf32>
    %31 = vector.shape_cast %30 : vector<1x8x8x4xf32> to vector<8x8x4xf32>
    %32 = vector.shape_cast %31 : vector<8x8x4xf32> to vector<64x4xf32>
    %33 = vector.extract_strided_slice %8 {offsets = [0, 0, 0], sizes = [1, 4, 8], strides = [1, 1, 1]} : vector<9x4x8xf32> to vector<1x4x8xf32>
    %34 = vector.shape_cast %33 : vector<1x4x8xf32> to vector<4x8xf32>
    %cst_46 = arith.constant dense<0.000000e+00> : vector<64x8xf32>
    %35 = tpu.matmul %32, %34, %cst_46 {dimension_numbers = #tpu.dot_dimension_numbers<[1], [0], [0], [1], [0, 0, 1, 1], [], []>} : vector<64x4xf32>, vector<4x8xf32>, vector<64x8xf32> -> vector<64x8xf32>
    %36 = vector.extract_strided_slice %29 {offsets = [2, 0, 8, 0], sizes = [1, 8, 8, 4], strides = [1, 1, 1, 1]} : vector<4x9x16x4xf32> to vector<1x8x8x4xf32>
    %37 = vector.shape_cast %36 : vector<1x8x8x4xf32> to vector<8x8x4xf32>
    %38 = vector.shape_cast %37 : vector<8x8x4xf32> to vector<64x4xf32>
    %39 = vector.extract_strided_slice %8 {offsets = [1, 0, 0], sizes = [1, 4, 8], strides = [1, 1, 1]} : vector<9x4x8xf32> to vector<1x4x8xf32>
    %40 = vector.shape_cast %39 : vector<1x4x8xf32> to vector<4x8xf32>
    %cst_47 = arith.constant dense<0.000000e+00> : vector<64x8xf32>
    %41 = tpu.matmul %38, %40, %cst_47 {dimension_numbers = #tpu.dot_dimension_numbers<[1], [0], [0], [1], [0, 0, 1, 1], [], []>} : vector<64x4xf32>, vector<4x8xf32>, vector<64x8xf32> -> vector<64x8xf32>
    %42 = arith.addf %35, %41 : vector<64x8xf32>
    %43 = vector.extract_strided_slice %29 {offsets = [3, 0, 8, 0], sizes = [1, 8, 8, 4], strides = [1, 1, 1, 1]} : vector<4x9x16x4xf32> to vector<1x8x8x4xf32>
    %44 = vector.shape_cast %43 : vector<1x8x8x4xf32> to vector<8x8x4xf32>
    %45 = vector.shape_cast %44 : vector<8x8x4xf32> to vector<64x4xf32>
    %46 = vector.extract_strided_slice %8 {offsets = [2, 0, 0], sizes = [1, 4, 8], strides = [1, 1, 1]} : vector<9x4x8xf32> to vector<1x4x8xf32>
    %47 = vector.shape_cast %46 : vector<1x4x8xf32> to vector<4x8xf32>
    %cst_48 = arith.constant dense<0.000000e+00> : vector<64x8xf32>
    %48 = tpu.matmul %45, %47, %cst_48 {dimension_numbers = #tpu.dot_dimension_numbers<[1], [0], [0], [1], [0, 0, 1, 1], [], []>} : vector<64x4xf32>, vector<4x8xf32>, vector<64x8xf32> -> vector<64x8xf32>
    %49 = arith.addf %42, %48 : vector<64x8xf32>
    %50 = vector.extract_strided_slice %29 {offsets = [1, 1, 7, 0], sizes = [1, 8, 8, 4], strides = [1, 1, 1, 1]} : vector<4x9x16x4xf32> to vector<1x8x8x4xf32>
    %51 = vector.shape_cast %50 : vector<1x8x8x4xf32> to vector<8x8x4xf32>
    %52 = vector.shape_cast %51 : vector<8x8x4xf32> to vector<64x4xf32>
    %53 = vector.extract_strided_slice %8 {offsets = [3, 0, 0], sizes = [1, 4, 8], strides = [1, 1, 1]} : vector<9x4x8xf32> to vector<1x4x8xf32>
    %54 = vector.shape_cast %53 : vector<1x4x8xf32> to vector<4x8xf32>
    %cst_49 = arith.constant dense<0.000000e+00> : vector<64x8xf32>
    %55 = tpu.matmul %52, %54, %cst_49 {dimension_numbers = #tpu.dot_dimension_numbers<[1], [0], [0], [1], [0, 0, 1, 1], [], []>} : vector<64x4xf32>, vector<4x8xf32>, vector<64x8xf32> -> vector<64x8xf32>
    %56 = arith.addf %49, %55 : vector<64x8xf32>
    %57 = vector.extract_strided_slice %29 {offsets = [0, 1, 8, 0], sizes = [1, 8, 8, 4], strides = [1, 1, 1, 1]} : vector<4x9x16x4xf32> to vector<1x8x8x4xf32>
    %58 = vector.shape_cast %57 : vector<1x8x8x4xf32> to vector<8x8x4xf32>
    %59 = vector.shape_cast %58 : vector<8x8x4xf32> to vector<64x4xf32>
    %60 = vector.extract_strided_slice %8 {offsets = [4, 0, 0], sizes = [1, 4, 8], strides = [1, 1, 1]} : vector<9x4x8xf32> to vector<1x4x8xf32>
    %61 = vector.shape_cast %60 : vector<1x4x8xf32> to vector<4x8xf32>
    %cst_50 = arith.constant dense<0.000000e+00> : vector<64x8xf32>
    %62 = tpu.matmul %59, %61, %cst_50 {dimension_numbers = #tpu.dot_dimension_numbers<[1], [0], [0], [1], [0, 0, 1, 1], [], []>} : vector<64x4xf32>, vector<4x8xf32>, vector<64x8xf32> -> vector<64x8xf32>
    %63 = arith.addf %56, %62 : vector<64x8xf32>
    %64 = vector.extract_strided_slice %29 {offsets = [1, 1, 8, 0], sizes = [1, 8, 8, 4], strides = [1, 1, 1, 1]} : vector<4x9x16x4xf32> to vector<1x8x8x4xf32>
    %65 = vector.shape_cast %64 : vector<1x8x8x4xf32> to vector<8x8x4xf32>
    %66 = vector.shape_cast %65 : vector<8x8x4xf32> to vector<64x4xf32>
    %67 = vector.extract_strided_slice %8 {offsets = [5, 0, 0], sizes = [1, 4, 8], strides = [1, 1, 1]} : vector<9x4x8xf32> to vector<1x4x8xf32>
    %68 = vector.shape_cast %67 : vector<1x4x8xf32> to vector<4x8xf32>
    %cst_51 = arith.constant dense<0.000000e+00> : vector<64x8xf32>
    %69 = tpu.matmul %66, %68, %cst_51 {dimension_numbers = #tpu.dot_dimension_numbers<[1], [0], [0], [1], [0, 0, 1, 1], [], []>} : vector<64x4xf32>, vector<4x8xf32>, vector<64x8xf32> -> vector<64x8xf32>
    %70 = arith.addf %63, %69 : vector<64x8xf32>
    %71 = vector.extract_strided_slice %29 {offsets = [3, 1, 7, 0], sizes = [1, 8, 8, 4], strides = [1, 1, 1, 1]} : vector<4x9x16x4xf32> to vector<1x8x8x4xf32>
    %72 = vector.shape_cast %71 : vector<1x8x8x4xf32> to vector<8x8x4xf32>
    %73 = vector.shape_cast %72 : vector<8x8x4xf32> to vector<64x4xf32>
    %74 = vector.extract_strided_slice %8 {offsets = [6, 0, 0], sizes = [1, 4, 8], strides = [1, 1, 1]} : vector<9x4x8xf32> to vector<1x4x8xf32>
    %75 = vector.shape_cast %74 : vector<1x4x8xf32> to vector<4x8xf32>
    %cst_52 = arith.constant dense<0.000000e+00> : vector<64x8xf32>
    %76 = tpu.matmul %73, %75, %cst_52 {dimension_numbers = #tpu.dot_dimension_numbers<[1], [0], [0], [1], [0, 0, 1, 1], [], []>} : vector<64x4xf32>, vector<4x8xf32>, vector<64x8xf32> -> vector<64x8xf32>
    %77 = arith.addf %70, %76 : vector<64x8xf32>
    %78 = vector.extract_strided_slice %29 {offsets = [2, 1, 8, 0], sizes = [1, 8, 8, 4], strides = [1, 1, 1, 1]} : vector<4x9x16x4xf32> to vector<1x8x8x4xf32>
    %79 = vector.shape_cast %78 : vector<1x8x8x4xf32> to vector<8x8x4xf32>
    %80 = vector.shape_cast %79 : vector<8x8x4xf32> to vector<64x4xf32>
    %81 = vector.extract_strided_slice %8 {offsets = [7, 0, 0], sizes = [1, 4, 8], strides = [1, 1, 1]} : vector<9x4x8xf32> to vector<1x4x8xf32>
    %82 = vector.shape_cast %81 : vector<1x4x8xf32> to vector<4x8xf32>
    %cst_53 = arith.constant dense<0.000000e+00> : vector<64x8xf32>
    %83 = tpu.matmul %80, %82, %cst_53 {dimension_numbers = #tpu.dot_dimension_numbers<[1], [0], [0], [1], [0, 0, 1, 1], [], []>} : vector<64x4xf32>, vector<4x8xf32>, vector<64x8xf32> -> vector<64x8xf32>
    %84 = arith.addf %77, %83 : vector<64x8xf32>
    %85 = vector.extract_strided_slice %29 {offsets = [3, 1, 8, 0], sizes = [1, 8, 8, 4], strides = [1, 1, 1, 1]} : vector<4x9x16x4xf32> to vector<1x8x8x4xf32>
    %86 = vector.shape_cast %85 : vector<1x8x8x4xf32> to vector<8x8x4xf32>
    %87 = vector.shape_cast %86 : vector<8x8x4xf32> to vector<64x4xf32>
    %88 = vector.extract_strided_slice %8 {offsets = [8, 0, 0], sizes = [1, 4, 8], strides = [1, 1, 1]} : vector<9x4x8xf32> to vector<1x4x8xf32>
    %89 = vector.shape_cast %88 : vector<1x4x8xf32> to vector<4x8xf32>
    %cst_54 = arith.constant dense<0.000000e+00> : vector<64x8xf32>
    %90 = tpu.matmul %87, %89, %cst_54 {dimension_numbers = #tpu.dot_dimension_numbers<[1], [0], [0], [1], [0, 0, 1, 1], [], []>} : vector<64x4xf32>, vector<4x8xf32>, vector<64x8xf32> -> vector<64x8xf32>
    %91 = arith.addf %84, %90 : vector<64x8xf32>
    %92 = vector.extract_strided_slice %26 {offsets = [0, 0, 0], sizes = [8, 8, 4], strides = [1, 1, 1]} : vector<32x8x4xf32> to vector<8x8x4xf32>
    %93 = vector.shape_cast %92 : vector<8x8x4xf32> to vector<64x4xf32>
    %94 = vector.broadcast %9 : vector<1x8xf32> to vector<64x8xf32>
    %95 = arith.mulf %91, %94 : vector<64x8xf32>
    %96 = vector.broadcast %10 : vector<1x8xf32> to vector<64x8xf32>
    %97 = arith.addf %95, %96 : vector<64x8xf32>
    %cst_55 = arith.constant 0.000000e+00 : f32
    %98 = vector.broadcast %cst_55 : f32 to vector<64x8xf32>
    %99 = arith.maximumf %97, %98 : vector<64x8xf32>
    %100 = vector.shape_cast %99 : vector<64x8xf32> to vector<8x8x8xf32>
    %c1_56 = arith.constant 1 : index
    %c8_57 = arith.constant 8 : index
    %c0_58 = arith.constant 0 : index
    %101 = vector.load %arg17[%c1_56, %c8_57, %c0_58] : memref<10x17x8xf32, #tpu.memory_space<vmem>>, vector<8x8x8xf32>
    tpu.vector_store %arg17[%c1_56, %c8_57, %c0_58], %100 {strides = array<i32>} : memref<10x17x8xf32, #tpu.memory_space<vmem>>, vector<8x8x8xf32>,
    %c0_59 = arith.constant 0 : index
    %c0_60 = arith.constant 0 : index
    %c0_61 = arith.constant 0 : index
    %102 = vector.load %arg17[%c0_59, %c0_60, %c0_61] : memref<10x17x8xf32, #tpu.memory_space<vmem>>, vector<10x17x8xf32>
    %103 = vector.extract_strided_slice %102 {offsets = [0, 7, 0], sizes = [8, 8, 8], strides = [1, 1, 1]} : vector<10x17x8xf32> to vector<8x8x8xf32>
    %104 = vector.shape_cast %103 : vector<8x8x8xf32> to vector<64x8xf32>
    %105 = vector.extract_strided_slice %11 {offsets = [0, 0, 0], sizes = [1, 8, 8], strides = [1, 1, 1]} : vector<9x8x8xf32> to vector<1x8x8xf32>
    %106 = vector.shape_cast %105 : vector<1x8x8xf32> to vector<8x8xf32>
    %cst_62 = arith.constant dense<0.000000e+00> : vector<64x8xf32>
    %107 = tpu.matmul %104, %106, %cst_62 {dimension_numbers = #tpu.dot_dimension_numbers<[1], [0], [0], [1], [0, 0, 1, 1], [], []>} : vector<64x8xf32>, vector<8x8xf32>, vector<64x8xf32> -> vector<64x8xf32>
    %108 = vector.extract_strided_slice %102 {offsets = [0, 8, 0], sizes = [8, 8, 8], strides = [1, 1, 1]} : vector<10x17x8xf32> to vector<8x8x8xf32>
    %109 = vector.shape_cast %108 : vector<8x8x8xf32> to vector<64x8xf32>
    %110 = vector.extract_strided_slice %11 {offsets = [1, 0, 0], sizes = [1, 8, 8], strides = [1, 1, 1]} : vector<9x8x8xf32> to vector<1x8x8xf32>
    %111 = vector.shape_cast %110 : vector<1x8x8xf32> to vector<8x8xf32>
    %cst_63 = arith.constant dense<0.000000e+00> : vector<64x8xf32>
    %112 = tpu.matmul %109, %111, %cst_63 {dimension_numbers = #tpu.dot_dimension_numbers<[1], [0], [0], [1], [0, 0, 1, 1], [], []>} : vector<64x8xf32>, vector<8x8xf32>, vector<64x8xf32> -> vector<64x8xf32>
    %113 = arith.addf %107, %112 : vector<64x8xf32>
    %114 = vector.extract_strided_slice %102 {offsets = [0, 9, 0], sizes = [8, 8, 8], strides = [1, 1, 1]} : vector<10x17x8xf32> to vector<8x8x8xf32>
    %115 = vector.shape_cast %114 : vector<8x8x8xf32> to vector<64x8xf32>
    %116 = vector.extract_strided_slice %11 {offsets = [2, 0, 0], sizes = [1, 8, 8], strides = [1, 1, 1]} : vector<9x8x8xf32> to vector<1x8x8xf32>
    %117 = vector.shape_cast %116 : vector<1x8x8xf32> to vector<8x8xf32>
    %cst_64 = arith.constant dense<0.000000e+00> : vector<64x8xf32>
    %118 = tpu.matmul %115, %117, %cst_64 {dimension_numbers = #tpu.dot_dimension_numbers<[1], [0], [0], [1], [0, 0, 1, 1], [], []>} : vector<64x8xf32>, vector<8x8xf32>, vector<64x8xf32> -> vector<64x8xf32>
    %119 = arith.addf %113, %118 : vector<64x8xf32>
    %120 = vector.extract_strided_slice %102 {offsets = [1, 7, 0], sizes = [8, 8, 8], strides = [1, 1, 1]} : vector<10x17x8xf32> to vector<8x8x8xf32>
    %121 = vector.shape_cast %120 : vector<8x8x8xf32> to vector<64x8xf32>
    %122 = vector.extract_strided_slice %11 {offsets = [3, 0, 0], sizes = [1, 8, 8], strides = [1, 1, 1]} : vector<9x8x8xf32> to vector<1x8x8xf32>
    %123 = vector.shape_cast %122 : vector<1x8x8xf32> to vector<8x8xf32>
    %cst_65 = arith.constant dense<0.000000e+00> : vector<64x8xf32>
    %124 = tpu.matmul %121, %123, %cst_65 {dimension_numbers = #tpu.dot_dimension_numbers<[1], [0], [0], [1], [0, 0, 1, 1], [], []>} : vector<64x8xf32>, vector<8x8xf32>, vector<64x8xf32> -> vector<64x8xf32>
    %125 = arith.addf %119, %124 : vector<64x8xf32>
    %126 = vector.extract_strided_slice %102 {offsets = [1, 8, 0], sizes = [8, 8, 8], strides = [1, 1, 1]} : vector<10x17x8xf32> to vector<8x8x8xf32>
    %127 = vector.shape_cast %126 : vector<8x8x8xf32> to vector<64x8xf32>
    %128 = vector.extract_strided_slice %11 {offsets = [4, 0, 0], sizes = [1, 8, 8], strides = [1, 1, 1]} : vector<9x8x8xf32> to vector<1x8x8xf32>
    %129 = vector.shape_cast %128 : vector<1x8x8xf32> to vector<8x8xf32>
    %cst_66 = arith.constant dense<0.000000e+00> : vector<64x8xf32>
    %130 = tpu.matmul %127, %129, %cst_66 {dimension_numbers = #tpu.dot_dimension_numbers<[1], [0], [0], [1], [0, 0, 1, 1], [], []>} : vector<64x8xf32>, vector<8x8xf32>, vector<64x8xf32> -> vector<64x8xf32>
    %131 = arith.addf %125, %130 : vector<64x8xf32>
    %132 = vector.extract_strided_slice %102 {offsets = [1, 9, 0], sizes = [8, 8, 8], strides = [1, 1, 1]} : vector<10x17x8xf32> to vector<8x8x8xf32>
    %133 = vector.shape_cast %132 : vector<8x8x8xf32> to vector<64x8xf32>
    %134 = vector.extract_strided_slice %11 {offsets = [5, 0, 0], sizes = [1, 8, 8], strides = [1, 1, 1]} : vector<9x8x8xf32> to vector<1x8x8xf32>
    %135 = vector.shape_cast %134 : vector<1x8x8xf32> to vector<8x8xf32>
    %cst_67 = arith.constant dense<0.000000e+00> : vector<64x8xf32>
    %136 = tpu.matmul %133, %135, %cst_67 {dimension_numbers = #tpu.dot_dimension_numbers<[1], [0], [0], [1], [0, 0, 1, 1], [], []>} : vector<64x8xf32>, vector<8x8xf32>, vector<64x8xf32> -> vector<64x8xf32>
    %137 = arith.addf %131, %136 : vector<64x8xf32>
    %138 = vector.extract_strided_slice %102 {offsets = [2, 7, 0], sizes = [8, 8, 8], strides = [1, 1, 1]} : vector<10x17x8xf32> to vector<8x8x8xf32>
    %139 = vector.shape_cast %138 : vector<8x8x8xf32> to vector<64x8xf32>
    %140 = vector.extract_strided_slice %11 {offsets = [6, 0, 0], sizes = [1, 8, 8], strides = [1, 1, 1]} : vector<9x8x8xf32> to vector<1x8x8xf32>
    %141 = vector.shape_cast %140 : vector<1x8x8xf32> to vector<8x8xf32>
    %cst_68 = arith.constant dense<0.000000e+00> : vector<64x8xf32>
    %142 = tpu.matmul %139, %141, %cst_68 {dimension_numbers = #tpu.dot_dimension_numbers<[1], [0], [0], [1], [0, 0, 1, 1], [], []>} : vector<64x8xf32>, vector<8x8xf32>, vector<64x8xf32> -> vector<64x8xf32>
    %143 = arith.addf %137, %142 : vector<64x8xf32>
    %144 = vector.extract_strided_slice %102 {offsets = [2, 8, 0], sizes = [8, 8, 8], strides = [1, 1, 1]} : vector<10x17x8xf32> to vector<8x8x8xf32>
    %145 = vector.shape_cast %144 : vector<8x8x8xf32> to vector<64x8xf32>
    %146 = vector.extract_strided_slice %11 {offsets = [7, 0, 0], sizes = [1, 8, 8], strides = [1, 1, 1]} : vector<9x8x8xf32> to vector<1x8x8xf32>
    %147 = vector.shape_cast %146 : vector<1x8x8xf32> to vector<8x8xf32>
    %cst_69 = arith.constant dense<0.000000e+00> : vector<64x8xf32>
    %148 = tpu.matmul %145, %147, %cst_69 {dimension_numbers = #tpu.dot_dimension_numbers<[1], [0], [0], [1], [0, 0, 1, 1], [], []>} : vector<64x8xf32>, vector<8x8xf32>, vector<64x8xf32> -> vector<64x8xf32>
    %149 = arith.addf %143, %148 : vector<64x8xf32>
    %150 = vector.extract_strided_slice %102 {offsets = [2, 9, 0], sizes = [8, 8, 8], strides = [1, 1, 1]} : vector<10x17x8xf32> to vector<8x8x8xf32>
    %151 = vector.shape_cast %150 : vector<8x8x8xf32> to vector<64x8xf32>
    %152 = vector.extract_strided_slice %11 {offsets = [8, 0, 0], sizes = [1, 8, 8], strides = [1, 1, 1]} : vector<9x8x8xf32> to vector<1x8x8xf32>
    %153 = vector.shape_cast %152 : vector<1x8x8xf32> to vector<8x8xf32>
    %cst_70 = arith.constant dense<0.000000e+00> : vector<64x8xf32>
    %154 = tpu.matmul %151, %153, %cst_70 {dimension_numbers = #tpu.dot_dimension_numbers<[1], [0], [0], [1], [0, 0, 1, 1], [], []>} : vector<64x8xf32>, vector<8x8xf32>, vector<64x8xf32> -> vector<64x8xf32>
    %155 = arith.addf %149, %154 : vector<64x8xf32>
    %cst_71 = arith.constant dense<0.000000e+00> : vector<64x8xf32>
    %156 = tpu.matmul %93, %12, %cst_71 {dimension_numbers = #tpu.dot_dimension_numbers<[1], [0], [0], [1], [0, 0, 1, 1], [], []>} : vector<64x4xf32>, vector<4x8xf32>, vector<64x8xf32> -> vector<64x8xf32>
    %157 = arith.addf %156, %155 : vector<64x8xf32>
    %c0_72 = arith.constant 0 : index
    %c0_73 = arith.constant 0 : index
    %158 = vector.load %arg9[%c0_72, %c0_73] : memref<1x8xf32, #tpu.memory_space<vmem>>, vector<1x8xf32>
    %c0_74 = arith.constant 0 : index
    %c0_75 = arith.constant 0 : index
    %159 = vector.load %arg10[%c0_74, %c0_75] : memref<1x8xf32, #tpu.memory_space<vmem>>, vector<1x8xf32>
    %c0_76 = arith.constant 0 : index
    %c0_77 = arith.constant 0 : index
    %c0_78 = arith.constant 0 : index
    %160 = vector.load %arg11[%c0_76, %c0_77, %c0_78] : memref<9x8x8xf32, #tpu.memory_space<vmem>>, vector<9x8x8xf32>
    %c0_79 = arith.constant 0 : index
    %c0_80 = arith.constant 0 : index
    %161 = vector.load %arg12[%c0_79, %c0_80] : memref<1x8xf32, #tpu.memory_space<vmem>>, vector<1x8xf32>
    %c0_81 = arith.constant 0 : index
    %c0_82 = arith.constant 0 : index
    %162 = vector.load %arg13[%c0_81, %c0_82] : memref<1x8xf32, #tpu.memory_space<vmem>>, vector<1x8xf32>
    %c0_83 = arith.constant 0 : index
    %c0_84 = arith.constant 0 : index
    %c0_85 = arith.constant 0 : index
    %163 = vector.load %arg14[%c0_83, %c0_84, %c0_85] : memref<9x8x8xf32, #tpu.memory_space<vmem>>, vector<9x8x8xf32>
    %164 = vector.broadcast %158 : vector<1x8xf32> to vector<64x8xf32>
    %165 = arith.mulf %157, %164 : vector<64x8xf32>
    %166 = vector.broadcast %159 : vector<1x8xf32> to vector<64x8xf32>
    %167 = arith.addf %165, %166 : vector<64x8xf32>
    %cst_86 = arith.constant 0.000000e+00 : f32
    %168 = vector.broadcast %cst_86 : f32 to vector<64x8xf32>
    %169 = arith.maximumf %167, %168 : vector<64x8xf32>
    %170 = vector.shape_cast %169 : vector<64x8xf32> to vector<8x8x8xf32>
    %c1_87 = arith.constant 1 : index
    %c8_88 = arith.constant 8 : index
    %c0_89 = arith.constant 0 : index
    %171 = vector.load %arg17[%c1_87, %c8_88, %c0_89] : memref<10x17x8xf32, #tpu.memory_space<vmem>>, vector<8x8x8xf32>
    tpu.vector_store %arg17[%c1_87, %c8_88, %c0_89], %170 {strides = array<i32>} : memref<10x17x8xf32, #tpu.memory_space<vmem>>, vector<8x8x8xf32>,
    %c0_90 = arith.constant 0 : index
    %c0_91 = arith.constant 0 : index
    %c0_92 = arith.constant 0 : index
    %172 = vector.load %arg17[%c0_90, %c0_91, %c0_92] : memref<10x17x8xf32, #tpu.memory_space<vmem>>, vector<10x17x8xf32>
    %173 = vector.extract_strided_slice %172 {offsets = [0, 7, 0], sizes = [8, 8, 8], strides = [1, 1, 1]} : vector<10x17x8xf32> to vector<8x8x8xf32>
    %174 = vector.shape_cast %173 : vector<8x8x8xf32> to vector<64x8xf32>
    %175 = vector.extract_strided_slice %160 {offsets = [0, 0, 0], sizes = [1, 8, 8], strides = [1, 1, 1]} : vector<9x8x8xf32> to vector<1x8x8xf32>
    %176 = vector.shape_cast %175 : vector<1x8x8xf32> to vector<8x8xf32>
    %cst_93 = arith.constant dense<0.000000e+00> : vector<64x8xf32>
    %177 = tpu.matmul %174, %176, %cst_93 {dimension_numbers = #tpu.dot_dimension_numbers<[1], [0], [0], [1], [0, 0, 1, 1], [], []>} : vector<64x8xf32>, vector<8x8xf32>, vector<64x8xf32> -> vector<64x8xf32>
    %178 = vector.extract_strided_slice %172 {offsets = [0, 8, 0], sizes = [8, 8, 8], strides = [1, 1, 1]} : vector<10x17x8xf32> to vector<8x8x8xf32>
    %179 = vector.shape_cast %178 : vector<8x8x8xf32> to vector<64x8xf32>
    %180 = vector.extract_strided_slice %160 {offsets = [1, 0, 0], sizes = [1, 8, 8], strides = [1, 1, 1]} : vector<9x8x8xf32> to vector<1x8x8xf32>
    %181 = vector.shape_cast %180 : vector<1x8x8xf32> to vector<8x8xf32>
    %cst_94 = arith.constant dense<0.000000e+00> : vector<64x8xf32>
    %182 = tpu.matmul %179, %181, %cst_94 {dimension_numbers = #tpu.dot_dimension_numbers<[1], [0], [0], [1], [0, 0, 1, 1], [], []>} : vector<64x8xf32>, vector<8x8xf32>, vector<64x8xf32> -> vector<64x8xf32>
    %183 = arith.addf %177, %182 : vector<64x8xf32>
    %184 = vector.extract_strided_slice %172 {offsets = [0, 9, 0], sizes = [8, 8, 8], strides = [1, 1, 1]} : vector<10x17x8xf32> to vector<8x8x8xf32>
    %185 = vector.shape_cast %184 : vector<8x8x8xf32> to vector<64x8xf32>
    %186 = vector.extract_strided_slice %160 {offsets = [2, 0, 0], sizes = [1, 8, 8], strides = [1, 1, 1]} : vector<9x8x8xf32> to vector<1x8x8xf32>
    %187 = vector.shape_cast %186 : vector<1x8x8xf32> to vector<8x8xf32>
    %cst_95 = arith.constant dense<0.000000e+00> : vector<64x8xf32>
    %188 = tpu.matmul %185, %187, %cst_95 {dimension_numbers = #tpu.dot_dimension_numbers<[1], [0], [0], [1], [0, 0, 1, 1], [], []>} : vector<64x8xf32>, vector<8x8xf32>, vector<64x8xf32> -> vector<64x8xf32>
    %189 = arith.addf %183, %188 : vector<64x8xf32>
    %190 = vector.extract_strided_slice %172 {offsets = [1, 7, 0], sizes = [8, 8, 8], strides = [1, 1, 1]} : vector<10x17x8xf32> to vector<8x8x8xf32>
    %191 = vector.shape_cast %190 : vector<8x8x8xf32> to vector<64x8xf32>
    %192 = vector.extract_strided_slice %160 {offsets = [3, 0, 0], sizes = [1, 8, 8], strides = [1, 1, 1]} : vector<9x8x8xf32> to vector<1x8x8xf32>
    %193 = vector.shape_cast %192 : vector<1x8x8xf32> to vector<8x8xf32>
    %cst_96 = arith.constant dense<0.000000e+00> : vector<64x8xf32>
    %194 = tpu.matmul %191, %193, %cst_96 {dimension_numbers = #tpu.dot_dimension_numbers<[1], [0], [0], [1], [0, 0, 1, 1], [], []>} : vector<64x8xf32>, vector<8x8xf32>, vector<64x8xf32> -> vector<64x8xf32>
    %195 = arith.addf %189, %194 : vector<64x8xf32>
    %196 = vector.extract_strided_slice %172 {offsets = [1, 8, 0], sizes = [8, 8, 8], strides = [1, 1, 1]} : vector<10x17x8xf32> to vector<8x8x8xf32>
    %197 = vector.shape_cast %196 : vector<8x8x8xf32> to vector<64x8xf32>
    %198 = vector.extract_strided_slice %160 {offsets = [4, 0, 0], sizes = [1, 8, 8], strides = [1, 1, 1]} : vector<9x8x8xf32> to vector<1x8x8xf32>
    %199 = vector.shape_cast %198 : vector<1x8x8xf32> to vector<8x8xf32>
    %cst_97 = arith.constant dense<0.000000e+00> : vector<64x8xf32>
    %200 = tpu.matmul %197, %199, %cst_97 {dimension_numbers = #tpu.dot_dimension_numbers<[1], [0], [0], [1], [0, 0, 1, 1], [], []>} : vector<64x8xf32>, vector<8x8xf32>, vector<64x8xf32> -> vector<64x8xf32>
    %201 = arith.addf %195, %200 : vector<64x8xf32>
    %202 = vector.extract_strided_slice %172 {offsets = [1, 9, 0], sizes = [8, 8, 8], strides = [1, 1, 1]} : vector<10x17x8xf32> to vector<8x8x8xf32>
    %203 = vector.shape_cast %202 : vector<8x8x8xf32> to vector<64x8xf32>
    %204 = vector.extract_strided_slice %160 {offsets = [5, 0, 0], sizes = [1, 8, 8], strides = [1, 1, 1]} : vector<9x8x8xf32> to vector<1x8x8xf32>
    %205 = vector.shape_cast %204 : vector<1x8x8xf32> to vector<8x8xf32>
    %cst_98 = arith.constant dense<0.000000e+00> : vector<64x8xf32>
    %206 = tpu.matmul %203, %205, %cst_98 {dimension_numbers = #tpu.dot_dimension_numbers<[1], [0], [0], [1], [0, 0, 1, 1], [], []>} : vector<64x8xf32>, vector<8x8xf32>, vector<64x8xf32> -> vector<64x8xf32>
    %207 = arith.addf %201, %206 : vector<64x8xf32>
    %208 = vector.extract_strided_slice %172 {offsets = [2, 7, 0], sizes = [8, 8, 8], strides = [1, 1, 1]} : vector<10x17x8xf32> to vector<8x8x8xf32>
    %209 = vector.shape_cast %208 : vector<8x8x8xf32> to vector<64x8xf32>
    %210 = vector.extract_strided_slice %160 {offsets = [6, 0, 0], sizes = [1, 8, 8], strides = [1, 1, 1]} : vector<9x8x8xf32> to vector<1x8x8xf32>
    %211 = vector.shape_cast %210 : vector<1x8x8xf32> to vector<8x8xf32>
    %cst_99 = arith.constant dense<0.000000e+00> : vector<64x8xf32>
    %212 = tpu.matmul %209, %211, %cst_99 {dimension_numbers = #tpu.dot_dimension_numbers<[1], [0], [0], [1], [0, 0, 1, 1], [], []>} : vector<64x8xf32>, vector<8x8xf32>, vector<64x8xf32> -> vector<64x8xf32>
    %213 = arith.addf %207, %212 : vector<64x8xf32>
    %214 = vector.extract_strided_slice %172 {offsets = [2, 8, 0], sizes = [8, 8, 8], strides = [1, 1, 1]} : vector<10x17x8xf32> to vector<8x8x8xf32>
    %215 = vector.shape_cast %214 : vector<8x8x8xf32> to vector<64x8xf32>
    %216 = vector.extract_strided_slice %160 {offsets = [7, 0, 0], sizes = [1, 8, 8], strides = [1, 1, 1]} : vector<9x8x8xf32> to vector<1x8x8xf32>
    %217 = vector.shape_cast %216 : vector<1x8x8xf32> to vector<8x8xf32>
    %cst_100 = arith.constant dense<0.000000e+00> : vector<64x8xf32>
    %218 = tpu.matmul %215, %217, %cst_100 {dimension_numbers = #tpu.dot_dimension_numbers<[1], [0], [0], [1], [0, 0, 1, 1], [], []>} : vector<64x8xf32>, vector<8x8xf32>, vector<64x8xf32> -> vector<64x8xf32>
    %219 = arith.addf %213, %218 : vector<64x8xf32>
    %220 = vector.extract_strided_slice %172 {offsets = [2, 9, 0], sizes = [8, 8, 8], strides = [1, 1, 1]} : vector<10x17x8xf32> to vector<8x8x8xf32>
    %221 = vector.shape_cast %220 : vector<8x8x8xf32> to vector<64x8xf32>
    %222 = vector.extract_strided_slice %160 {offsets = [8, 0, 0], sizes = [1, 8, 8], strides = [1, 1, 1]} : vector<9x8x8xf32> to vector<1x8x8xf32>
    %223 = vector.shape_cast %222 : vector<1x8x8xf32> to vector<8x8xf32>
    %cst_101 = arith.constant dense<0.000000e+00> : vector<64x8xf32>
    %224 = tpu.matmul %221, %223, %cst_101 {dimension_numbers = #tpu.dot_dimension_numbers<[1], [0], [0], [1], [0, 0, 1, 1], [], []>} : vector<64x8xf32>, vector<8x8xf32>, vector<64x8xf32> -> vector<64x8xf32>
    %225 = arith.addf %219, %224 : vector<64x8xf32>
    %226 = vector.broadcast %161 : vector<1x8xf32> to vector<64x8xf32>
    %227 = arith.mulf %225, %226 : vector<64x8xf32>
    %228 = vector.broadcast %162 : vector<1x8xf32> to vector<64x8xf32>
    %229 = arith.addf %227, %228 : vector<64x8xf32>
    %cst_102 = arith.constant 0.000000e+00 : f32
    %230 = vector.broadcast %cst_102 : f32 to vector<64x8xf32>
    %231 = arith.maximumf %229, %230 : vector<64x8xf32>
    %232 = vector.shape_cast %231 : vector<64x8xf32> to vector<8x8x8xf32>
    %c1_103 = arith.constant 1 : index
    %c8_104 = arith.constant 8 : index
    %c0_105 = arith.constant 0 : index
    %233 = vector.load %arg17[%c1_103, %c8_104, %c0_105] : memref<10x17x8xf32, #tpu.memory_space<vmem>>, vector<8x8x8xf32>
    tpu.vector_store %arg17[%c1_103, %c8_104, %c0_105], %232 {strides = array<i32>} : memref<10x17x8xf32, #tpu.memory_space<vmem>>, vector<8x8x8xf32>,
    %c0_106 = arith.constant 0 : index
    %c0_107 = arith.constant 0 : index
    %c0_108 = arith.constant 0 : index
    %234 = vector.load %arg17[%c0_106, %c0_107, %c0_108] : memref<10x17x8xf32, #tpu.memory_space<vmem>>, vector<10x17x8xf32>
    %235 = vector.extract_strided_slice %234 {offsets = [0, 7, 0], sizes = [8, 8, 8], strides = [1, 1, 1]} : vector<10x17x8xf32> to vector<8x8x8xf32>
    %236 = vector.shape_cast %235 : vector<8x8x8xf32> to vector<64x8xf32>
    %237 = vector.extract_strided_slice %163 {offsets = [0, 0, 0], sizes = [1, 8, 8], strides = [1, 1, 1]} : vector<9x8x8xf32> to vector<1x8x8xf32>
    %238 = vector.shape_cast %237 : vector<1x8x8xf32> to vector<8x8xf32>
    %cst_109 = arith.constant dense<0.000000e+00> : vector<64x8xf32>
    %239 = tpu.matmul %236, %238, %cst_109 {dimension_numbers = #tpu.dot_dimension_numbers<[1], [0], [0], [1], [0, 0, 1, 1], [], []>} : vector<64x8xf32>, vector<8x8xf32>, vector<64x8xf32> -> vector<64x8xf32>
    %240 = vector.extract_strided_slice %234 {offsets = [0, 8, 0], sizes = [8, 8, 8], strides = [1, 1, 1]} : vector<10x17x8xf32> to vector<8x8x8xf32>
    %241 = vector.shape_cast %240 : vector<8x8x8xf32> to vector<64x8xf32>
    %242 = vector.extract_strided_slice %163 {offsets = [1, 0, 0], sizes = [1, 8, 8], strides = [1, 1, 1]} : vector<9x8x8xf32> to vector<1x8x8xf32>
    %243 = vector.shape_cast %242 : vector<1x8x8xf32> to vector<8x8xf32>
    %cst_110 = arith.constant dense<0.000000e+00> : vector<64x8xf32>
    %244 = tpu.matmul %241, %243, %cst_110 {dimension_numbers = #tpu.dot_dimension_numbers<[1], [0], [0], [1], [0, 0, 1, 1], [], []>} : vector<64x8xf32>, vector<8x8xf32>, vector<64x8xf32> -> vector<64x8xf32>
    %245 = arith.addf %239, %244 : vector<64x8xf32>
    %246 = vector.extract_strided_slice %234 {offsets = [0, 9, 0], sizes = [8, 8, 8], strides = [1, 1, 1]} : vector<10x17x8xf32> to vector<8x8x8xf32>
    %247 = vector.shape_cast %246 : vector<8x8x8xf32> to vector<64x8xf32>
    %248 = vector.extract_strided_slice %163 {offsets = [2, 0, 0], sizes = [1, 8, 8], strides = [1, 1, 1]} : vector<9x8x8xf32> to vector<1x8x8xf32>
    %249 = vector.shape_cast %248 : vector<1x8x8xf32> to vector<8x8xf32>
    %cst_111 = arith.constant dense<0.000000e+00> : vector<64x8xf32>
    %250 = tpu.matmul %247, %249, %cst_111 {dimension_numbers = #tpu.dot_dimension_numbers<[1], [0], [0], [1], [0, 0, 1, 1], [], []>} : vector<64x8xf32>, vector<8x8xf32>, vector<64x8xf32> -> vector<64x8xf32>
    %251 = arith.addf %245, %250 : vector<64x8xf32>
    %252 = vector.extract_strided_slice %234 {offsets = [1, 7, 0], sizes = [8, 8, 8], strides = [1, 1, 1]} : vector<10x17x8xf32> to vector<8x8x8xf32>
    %253 = vector.shape_cast %252 : vector<8x8x8xf32> to vector<64x8xf32>
    %254 = vector.extract_strided_slice %163 {offsets = [3, 0, 0], sizes = [1, 8, 8], strides = [1, 1, 1]} : vector<9x8x8xf32> to vector<1x8x8xf32>
    %255 = vector.shape_cast %254 : vector<1x8x8xf32> to vector<8x8xf32>
    %cst_112 = arith.constant dense<0.000000e+00> : vector<64x8xf32>
    %256 = tpu.matmul %253, %255, %cst_112 {dimension_numbers = #tpu.dot_dimension_numbers<[1], [0], [0], [1], [0, 0, 1, 1], [], []>} : vector<64x8xf32>, vector<8x8xf32>, vector<64x8xf32> -> vector<64x8xf32>
    %257 = arith.addf %251, %256 : vector<64x8xf32>
    %258 = vector.extract_strided_slice %234 {offsets = [1, 8, 0], sizes = [8, 8, 8], strides = [1, 1, 1]} : vector<10x17x8xf32> to vector<8x8x8xf32>
    %259 = vector.shape_cast %258 : vector<8x8x8xf32> to vector<64x8xf32>
    %260 = vector.extract_strided_slice %163 {offsets = [4, 0, 0], sizes = [1, 8, 8], strides = [1, 1, 1]} : vector<9x8x8xf32> to vector<1x8x8xf32>
    %261 = vector.shape_cast %260 : vector<1x8x8xf32> to vector<8x8xf32>
    %cst_113 = arith.constant dense<0.000000e+00> : vector<64x8xf32>
    %262 = tpu.matmul %259, %261, %cst_113 {dimension_numbers = #tpu.dot_dimension_numbers<[1], [0], [0], [1], [0, 0, 1, 1], [], []>} : vector<64x8xf32>, vector<8x8xf32>, vector<64x8xf32> -> vector<64x8xf32>
    %263 = arith.addf %257, %262 : vector<64x8xf32>
    %264 = vector.extract_strided_slice %234 {offsets = [1, 9, 0], sizes = [8, 8, 8], strides = [1, 1, 1]} : vector<10x17x8xf32> to vector<8x8x8xf32>
    %265 = vector.shape_cast %264 : vector<8x8x8xf32> to vector<64x8xf32>
    %266 = vector.extract_strided_slice %163 {offsets = [5, 0, 0], sizes = [1, 8, 8], strides = [1, 1, 1]} : vector<9x8x8xf32> to vector<1x8x8xf32>
    %267 = vector.shape_cast %266 : vector<1x8x8xf32> to vector<8x8xf32>
    %cst_114 = arith.constant dense<0.000000e+00> : vector<64x8xf32>
    %268 = tpu.matmul %265, %267, %cst_114 {dimension_numbers = #tpu.dot_dimension_numbers<[1], [0], [0], [1], [0, 0, 1, 1], [], []>} : vector<64x8xf32>, vector<8x8xf32>, vector<64x8xf32> -> vector<64x8xf32>
    %269 = arith.addf %263, %268 : vector<64x8xf32>
    %270 = vector.extract_strided_slice %234 {offsets = [2, 7, 0], sizes = [8, 8, 8], strides = [1, 1, 1]} : vector<10x17x8xf32> to vector<8x8x8xf32>
    %271 = vector.shape_cast %270 : vector<8x8x8xf32> to vector<64x8xf32>
    %272 = vector.extract_strided_slice %163 {offsets = [6, 0, 0], sizes = [1, 8, 8], strides = [1, 1, 1]} : vector<9x8x8xf32> to vector<1x8x8xf32>
    %273 = vector.shape_cast %272 : vector<1x8x8xf32> to vector<8x8xf32>
    %cst_115 = arith.constant dense<0.000000e+00> : vector<64x8xf32>
    %274 = tpu.matmul %271, %273, %cst_115 {dimension_numbers = #tpu.dot_dimension_numbers<[1], [0], [0], [1], [0, 0, 1, 1], [], []>} : vector<64x8xf32>, vector<8x8xf32>, vector<64x8xf32> -> vector<64x8xf32>
    %275 = arith.addf %269, %274 : vector<64x8xf32>
    %276 = vector.extract_strided_slice %234 {offsets = [2, 8, 0], sizes = [8, 8, 8], strides = [1, 1, 1]} : vector<10x17x8xf32> to vector<8x8x8xf32>
    %277 = vector.shape_cast %276 : vector<8x8x8xf32> to vector<64x8xf32>
    %278 = vector.extract_strided_slice %163 {offsets = [7, 0, 0], sizes = [1, 8, 8], strides = [1, 1, 1]} : vector<9x8x8xf32> to vector<1x8x8xf32>
    %279 = vector.shape_cast %278 : vector<1x8x8xf32> to vector<8x8xf32>
    %cst_116 = arith.constant dense<0.000000e+00> : vector<64x8xf32>
    %280 = tpu.matmul %277, %279, %cst_116 {dimension_numbers = #tpu.dot_dimension_numbers<[1], [0], [0], [1], [0, 0, 1, 1], [], []>} : vector<64x8xf32>, vector<8x8xf32>, vector<64x8xf32> -> vector<64x8xf32>
    %281 = arith.addf %275, %280 : vector<64x8xf32>
    %282 = vector.extract_strided_slice %234 {offsets = [2, 9, 0], sizes = [8, 8, 8], strides = [1, 1, 1]} : vector<10x17x8xf32> to vector<8x8x8xf32>
    %283 = vector.shape_cast %282 : vector<8x8x8xf32> to vector<64x8xf32>
    %284 = vector.extract_strided_slice %163 {offsets = [8, 0, 0], sizes = [1, 8, 8], strides = [1, 1, 1]} : vector<9x8x8xf32> to vector<1x8x8xf32>
    %285 = vector.shape_cast %284 : vector<1x8x8xf32> to vector<8x8xf32>
    %cst_117 = arith.constant dense<0.000000e+00> : vector<64x8xf32>
    %286 = tpu.matmul %283, %285, %cst_117 {dimension_numbers = #tpu.dot_dimension_numbers<[1], [0], [0], [1], [0, 0, 1, 1], [], []>} : vector<64x8xf32>, vector<8x8xf32>, vector<64x8xf32> -> vector<64x8xf32>
    %287 = arith.addf %281, %286 : vector<64x8xf32>
    %288 = arith.addf %157, %287 : vector<64x8xf32>
    %c0_118 = arith.constant 0 : index
    %c0_119 = arith.constant 0 : index
    %c0_120 = arith.constant 0 : index
    %289 = vector.load %arg15[%c0_118, %c0_119, %c0_120] : memref<1x64x8xf32, #tpu.memory_space<vmem>>, vector<1x64x8xf32>
    %290 = vector.shape_cast %289 : vector<1x64x8xf32> to vector<64x8xf32>
    %291 = vector.shape_cast %288 : vector<64x8xf32> to vector<1x64x8xf32>
    tpu.vector_store %arg15[%c0_118, %c0_119, %c0_120], %291 {strides = array<i32>} : memref<1x64x8xf32, #tpu.memory_space<vmem>>, vector<1x64x8xf32>,
    return
  }
  func.func @transform_0(%arg0: i32) -> (i32, i32, i32, i32) {
    %c0_i32 = arith.constant 0 : i32
    %c0_i32_0 = arith.constant 0 : i32
    %c0_i32_1 = arith.constant 0 : i32
    %c0_i32_2 = arith.constant 0 : i32
    return %arg0, %c0_i32, %c0_i32_0, %c0_i32_1 : i32, i32, i32, i32
  }
  func.func @transform_1(%arg0: i32) -> (i32, i32) {
    %c0_i32 = arith.constant 0 : i32
    %c0_i32_0 = arith.constant 0 : i32
    %c0_i32_1 = arith.constant 0 : i32
    return %c0_i32, %c0_i32_0 : i32, i32
  }
  func.func @transform_2(%arg0: i32) -> (i32, i32) {
    %c0_i32 = arith.constant 0 : i32
    %c0_i32_0 = arith.constant 0 : i32
    %c0_i32_1 = arith.constant 0 : i32
    return %c0_i32, %c0_i32_0 : i32, i32
  }
  func.func @transform_3(%arg0: i32) -> (i32, i32, i32) {
    %c0_i32 = arith.constant 0 : i32
    %c0_i32_0 = arith.constant 0 : i32
    %c0_i32_1 = arith.constant 0 : i32
    %c0_i32_2 = arith.constant 0 : i32
    return %c0_i32, %c0_i32_0, %c0_i32_1 : i32, i32, i32
  }
  func.func @transform_4(%arg0: i32) -> (i32, i32) {
    %c0_i32 = arith.constant 0 : i32
    %c0_i32_0 = arith.constant 0 : i32
    %c0_i32_1 = arith.constant 0 : i32
    return %c0_i32, %c0_i32_0 : i32, i32
  }
  func.func @transform_5(%arg0: i32) -> (i32, i32) {
    %c0_i32 = arith.constant 0 : i32
    %c0_i32_0 = arith.constant 0 : i32
    %c0_i32_1 = arith.constant 0 : i32
    return %c0_i32, %c0_i32_0 : i32, i32
  }
  func.func @transform_6(%arg0: i32) -> (i32, i32, i32) {
    %c0_i32 = arith.constant 0 : i32
    %c0_i32_0 = arith.constant 0 : i32
    %c0_i32_1 = arith.constant 0 : i32
    %c0_i32_2 = arith.constant 0 : i32
    return %c0_i32, %c0_i32_0, %c0_i32_1 : i32, i32, i32
  }
  func.func @transform_7(%arg0: i32) -> (i32, i32) {
    %c0_i32 = arith.constant 0 : i32
    %c0_i32_0 = arith.constant 0 : i32
    %c0_i32_1 = arith.constant 0 : i32
    return %c0_i32, %c0_i32_0 : i32, i32
  }
  func.func @transform_8(%arg0: i32) -> (i32, i32) {
    %c0_i32 = arith.constant 0 : i32
    %c0_i32_0 = arith.constant 0 : i32
    %c0_i32_1 = arith.constant 0 : i32
    return %c0_i32, %c0_i32_0 : i32, i32
  }
  func.func @transform_9(%arg0: i32) -> (i32, i32) {
    %c0_i32 = arith.constant 0 : i32
    %c0_i32_0 = arith.constant 0 : i32
    %c0_i32_1 = arith.constant 0 : i32
    return %c0_i32, %c0_i32_0 : i32, i32
  }
  func.func @transform_10(%arg0: i32) -> (i32, i32, i32) {
    %c0_i32 = arith.constant 0 : i32
    %c0_i32_0 = arith.constant 0 : i32
    %c0_i32_1 = arith.constant 0 : i32
    %c0_i32_2 = arith.constant 0 : i32
    return %c0_i32, %c0_i32_0, %c0_i32_1 : i32, i32, i32
  }
  func.func @transform_11(%arg0: i32) -> (i32, i32) {
    %c0_i32 = arith.constant 0 : i32
    %c0_i32_0 = arith.constant 0 : i32
    %c0_i32_1 = arith.constant 0 : i32
    return %c0_i32, %c0_i32_0 : i32, i32
  }
  func.func @transform_12(%arg0: i32) -> (i32, i32) {
    %c0_i32 = arith.constant 0 : i32
    %c0_i32_0 = arith.constant 0 : i32
    %c0_i32_1 = arith.constant 0 : i32
    return %c0_i32, %c0_i32_0 : i32, i32
  }
  func.func @transform_13(%arg0: i32) -> (i32, i32, i32) {
    %c0_i32 = arith.constant 0 : i32
    %c0_i32_0 = arith.constant 0 : i32
    %c0_i32_1 = arith.constant 0 : i32
    %c0_i32_2 = arith.constant 0 : i32
    return %c0_i32, %c0_i32_0, %c0_i32_1 : i32, i32, i32
  }
  func.func @transform_14(%arg0: i32) -> (i32, i32, i32) {
    %c0_i32 = arith.constant 0 : i32
    %c0_i32_0 = arith.constant 0 : i32
    %c0_i32_1 = arith.constant 0 : i32
    return %arg0, %c0_i32, %c0_i32_0 : i32, i32, i32
  }
}

</mosaic_0001>

<llo_original>
// kernel: network_block_forward.1
$region0: #{network_block_forward.1}
  #allocation0 [shape = 'u32[]', space=smem, size = 0x4, offset = 0x4, fixed_abs, tag = 'smem constant byte address 0x4 - core index']
  #allocation1 [shape = 'u32[72,128]{1,0:T(1,128)}', space=vmem, size = 0x9000, scoped, tag = 'internal scratch']
  #allocation2 [shape = 'f32[4,9,16,4]{3,2,1,0:T(8,128)}', space=vmem, size = 0x48000, scoped, tag = 'scratch operand']
  #allocation3 [shape = 'f32[10,17,8]{2,1,0:T(8,128)}', space=vmem, size = 0x1e000, scoped, tag = 'scratch operand']
  %s0 = inlined_call_operand.vmem [shape: f32[2,32,8,4], index: 0, kind: input, shape index: {}]
  %s1 = inlined_call_operand.vmem [shape: f32[1,4], index: 1, kind: input, shape index: {}]
  %s2 = inlined_call_operand.vmem [shape: f32[1,4], index: 2, kind: input, shape index: {}]
  %s3 = inlined_call_operand.vmem [shape: f32[9,4,8], index: 3, kind: input, shape index: {}]
  %s4 = inlined_call_operand.vmem [shape: f32[1,8], index: 4, kind: input, shape index: {}]
  %s5 = inlined_call_operand.vmem [shape: f32[1,8], index: 5, kind: input, shape index: {}]
  %s6 = inlined_call_operand.vmem [shape: f32[9,8,8], index: 6, kind: input, shape index: {}]
  %s7 = inlined_call_operand.vmem [shape: f32[4,8], index: 7, kind: input, shape index: {}]
  %s8 = inlined_call_operand.vmem [shape: f32[1,8], index: 8, kind: input, shape index: {}]
  %s9 = inlined_call_operand.vmem [shape: f32[1,8], index: 9, kind: input, shape index: {}]
  %s10 = inlined_call_operand.vmem [shape: f32[9,8,8], index: 10, kind: input, shape index: {}]
  %s11 = inlined_call_operand.vmem [shape: f32[1,8], index: 11, kind: input, shape index: {}]
  %s12 = inlined_call_operand.vmem [shape: f32[1,8], index: 12, kind: input, shape index: {}]
  %s13 = inlined_call_operand.vmem [shape: f32[9,8,8], index: 13, kind: input, shape index: {}]
  %s14 = inlined_call_operand.vmem [shape: f32[2,64,8], index: 14, kind: output, shape index: {}]
  %s15 = sld [smem:[#allocation0]]
  $region89: #{network_block_forward.1} parent=0
    _
  %s17 = ssub.s32 1, %s15
  %s18 = scalar_select 0, %s17, %s15
  loop: start=0, step=1, limit=4
  $region2: #{network_block_forward.1} parent=0 // loop_pre_header
    _
  $region3: #{network_block_forward.1} parent=0 // loop_header
    %s20 = sphi 0, %s24
    %p21 = scmp.ge.s32.totalorder %s20, 4
    %s30 = sphi 0, %s32
    %s33 = sphi 0, %s30
    %s34 = sphi 0, %s33
    %s50 = sphi 0, %s34
    %s54 = sphi 0, %s54
    %s56 = sphi 0, %s54
    %s57 = sphi 0, %s56
    %s71 = sphi 0, %s57
    %s75 = sphi 0, %s75
    %s77 = sphi 0, %s75
    %s78 = sphi 0, %s77
    %s92 = sphi 0, %s78
    %s96 = sphi 0, %s96
    %s98 = sphi 0, %s96
    %s99 = sphi 0, %s98
    %s113 = sphi 0, %s99
    %s117 = sphi 0, %s117
    %s119 = sphi 0, %s117
    %s120 = sphi 0, %s119
    %s134 = sphi 0, %s120
    %s138 = sphi 0, %s138
    %s140 = sphi 0, %s138
    %s141 = sphi 0, %s140
    %s155 = sphi 0, %s141
    %s159 = sphi 0, %s159
    %s161 = sphi 0, %s159
    %s162 = sphi 0, %s161
    %s176 = sphi 0, %s162
    %s180 = sphi 0, %s180
    %s182 = sphi 0, %s180
    %s183 = sphi 0, %s182
    %s197 = sphi 0, %s183
    %s201 = sphi 0, %s201
    %s203 = sphi 0, %s201
    %s204 = sphi 0, %s203
    %s218 = sphi 0, %s204
    %s222 = sphi 0, %s222
    %s224 = sphi 0, %s222
    %s225 = sphi 0, %s224
    %s239 = sphi 0, %s225
    %s243 = sphi 0, %s243
    %s245 = sphi 0, %s243
    %s246 = sphi 0, %s245
    %s260 = sphi 0, %s246
    %s264 = sphi 0, %s264
    %s266 = sphi 0, %s264
    %s267 = sphi 0, %s266
    %s281 = sphi 0, %s267
    %s285 = sphi 0, %s285
    %s287 = sphi 0, %s285
    %s288 = sphi 0, %s287
    %s302 = sphi 0, %s288
    %s306 = sphi 0, %s306
    %s308 = sphi 0, %s306
    %s309 = sphi 0, %s308
    %s323 = sphi 0, %s309
    %s329 = sphi 0, %s331
    %s332 = sphi 0, %s329
    %s333 = sphi 0, %s332
    %s349 = sphi 0, %s333
  $region4: #{network_block_forward.1} parent=0 // loop_header_branch
    %23 = sbr.rel (%p21) target = $region8
  $region5: #{network_block_forward.1} parent=0 // loop_body
    %s25 = ssub.s32 %s20, 1
    %s26 = ssub.s32 %s20, 2
    %s27 = sadd.s32 %s20, 1
    %s28 = ssub.s32 %s20, %s27
    %p29 = scmp.eq.s32.totalorder %s28, 0
    %s31 = sadd.s32 %s30, 1
    %s32 = scalar_select %p29, %s30, %s31
    %p35 = pneg %p29
    %p36 = scmp.eq.s32.totalorder %s20, 1
    %p37 = por %p35, %p36
    %p38 = scmp.ne.s32.totalorder %s30, %s33
    %p39 = scmp.eq.s32.totalorder %s20, 0
    %p40 = por %p38, %p39
    %p41 = scmp.ne.s32.totalorder %s30, %s33
    %p42 = scmp.eq.s32.totalorder %s25, 1
    %p43 = por %p41, %p42
    %p44 = scmp.ne.s32.totalorder %s33, %s34
    %p45 = scmp.eq.s32.totalorder %s25, 0
    %p46 = por %p44, %p45
    %p47 = scmp.ne.s32.totalorder %s33, %s34
    %p48 = scmp.eq.s32.totalorder %s26, 1
    %p49 = por %p47, %p48
    %p51 = scmp.ne.s32.totalorder %s34, %s50
    %p52 = scmp.eq.s32.totalorder %s26, 0
    %p53 = por %p51, %p52
    %s55 = sadd.s32 %s54, 1
    %p58 = scmp.eq.s32.totalorder %s20, 1
    %p59 = scmp.ne.s32.totalorder %s54, %s56
    %p60 = scmp.eq.s32.totalorder %s20, 0
    %p61 = por %p59, %p60
    %p62 = scmp.ne.s32.totalorder %s54, %s56
    %p63 = scmp.eq.s32.totalorder %s25, 1
    %p64 = por %p62, %p63
    %p65 = scmp.ne.s32.totalorder %s56, %s57
    %p66 = scmp.eq.s32.totalorder %s25, 0
    %p67 = por %p65, %p66
    %p68 = scmp.ne.s32.totalorder %s56, %s57
    %p69 = scmp.eq.s32.totalorder %s26, 1
    %p70 = por %p68, %p69
    %p72 = scmp.ne.s32.totalorder %s57, %s71
    %p73 = scmp.eq.s32.totalorder %s26, 0
    %p74 = por %p72, %p73
    %s76 = sadd.s32 %s75, 1
    %p79 = scmp.eq.s32.totalorder %s20, 1
    %p80 = scmp.ne.s32.totalorder %s75, %s77
    %p81 = scmp.eq.s32.totalorder %s20, 0
    %p82 = por %p80, %p81
    %p83 = scmp.ne.s32.totalorder %s75, %s77
    %p84 = scmp.eq.s32.totalorder %s25, 1
    %p85 = por %p83, %p84
    %p86 = scmp.ne.s32.totalorder %s77, %s78
    %p87 = scmp.eq.s32.totalorder %s25, 0
    %p88 = por %p86, %p87
    %p89 = scmp.ne.s32.totalorder %s77, %s78
    %p90 = scmp.eq.s32.totalorder %s26, 1
    %p91 = por %p89, %p90
    %p93 = scmp.ne.s32.totalorder %s78, %s92
    %p94 = scmp.eq.s32.totalorder %s26, 0
    %p95 = por %p93, %p94
    %s97 = sadd.s32 %s96, 1
    %p100 = scmp.eq.s32.totalorder %s20, 1
    %p101 = scmp.ne.s32.totalorder %s96, %s98
    %p102 = scmp.eq.s32.totalorder %s20, 0
    %p103 = por %p101, %p102
    %p104 = scmp.ne.s32.totalorder %s96, %s98
    %p105 = scmp.eq.s32.totalorder %s25, 1
    %p106 = por %p104, %p105
    %p107 = scmp.ne.s32.totalorder %s98, %s99
    %p108 = scmp.eq.s32.totalorder %s25, 0
    %p109 = por %p107, %p108
    %p110 = scmp.ne.s32.totalorder %s98, %s99
    %p111 = scmp.eq.s32.totalorder %s26, 1
    %p112 = por %p110, %p111
    %p114 = scmp.ne.s32.totalorder %s99, %s113
    %p115 = scmp.eq.s32.totalorder %s26, 0
    %p116 = por %p114, %p115
    %s118 = sadd.s32 %s117, 1
    %p121 = scmp.eq.s32.totalorder %s20, 1
    %p122 = scmp.ne.s32.totalorder %s117, %s119
    %p123 = scmp.eq.s32.totalorder %s20, 0
    %p124 = por %p122, %p123
    %p125 = scmp.ne.s32.totalorder %s117, %s119
    %p126 = scmp.eq.s32.totalorder %s25, 1
    %p127 = por %p125, %p126
    %p128 = scmp.ne.s32.totalorder %s119, %s120
    %p129 = scmp.eq.s32.totalorder %s25, 0
    %p130 = por %p128, %p129
    %p131 = scmp.ne.s32.totalorder %s119, %s120
    %p132 = scmp.eq.s32.totalorder %s26, 1
    %p133 = por %p131, %p132
    %p135 = scmp.ne.s32.totalorder %s120, %s134
    %p136 = scmp.eq.s32.totalorder %s26, 0
    %p137 = por %p135, %p136
    %s139 = sadd.s32 %s138, 1
    %p142 = scmp.eq.s32.totalorder %s20, 1
    %p143 = scmp.ne.s32.totalorder %s138, %s140
    %p144 = scmp.eq.s32.totalorder %s20, 0
    %p145 = por %p143, %p144
    %p146 = scmp.ne.s32.totalorder %s138, %s140
    %p147 = scmp.eq.s32.totalorder %s25, 1
    %p148 = por %p146, %p147
    %p149 = scmp.ne.s32.totalorder %s140, %s141
    %p150 = scmp.eq.s32.totalorder %s25, 0
    %p151 = por %p149, %p150
    %p152 = scmp.ne.s32.totalorder %s140, %s141
    %p153 = scmp.eq.s32.totalorder %s26, 1
    %p154 = por %p152, %p153
    %p156 = scmp.ne.s32.totalorder %s141, %s155
    %p157 = scmp.eq.s32.totalorder %s26, 0
    %p158 = por %p156, %p157
    %s160 = sadd.s32 %s159, 1
    %p163 = scmp.eq.s32.totalorder %s20, 1
    %p164 = scmp.ne.s32.totalorder %s159, %s161
    %p165 = scmp.eq.s32.totalorder %s20, 0
    %p166 = por %p164, %p165
    %p167 = scmp.ne.s32.totalorder %s159, %s161
    %p168 = scmp.eq.s32.totalorder %s25, 1
    %p169 = por %p167, %p168
    %p170 = scmp.ne.s32.totalorder %s161, %s162
    %p171 = scmp.eq.s32.totalorder %s25, 0
    %p172 = por %p170, %p171
    %p173 = scmp.ne.s32.totalorder %s161, %s162
    %p174 = scmp.eq.s32.totalorder %s26, 1
    %p175 = por %p173, %p174
    %p177 = scmp.ne.s32.totalorder %s162, %s176
    %p178 = scmp.eq.s32.totalorder %s26, 0
    %p179 = por %p177, %p178
    %s181 = sadd.s32 %s180, 1
    %p184 = scmp.eq.s32.totalorder %s20, 1
    %p185 = scmp.ne.s32.totalorder %s180, %s182
    %p186 = scmp.eq.s32.totalorder %s20, 0
    %p187 = por %p185, %p186
    %p188 = scmp.ne.s32.totalorder %s180, %s182
    %p189 = scmp.eq.s32.totalorder %s25, 1
    %p190 = por %p188, %p189
    %p191 = scmp.ne.s32.totalorder %s182, %s183
    %p192 = scmp.eq.s32.totalorder %s25, 0
    %p193 = por %p191, %p192
    %p194 = scmp.ne.s32.totalorder %s182, %s183
    %p195 = scmp.eq.s32.totalorder %s26, 1
    %p196 = por %p194, %p195
    %p198 = scmp.ne.s32.totalorder %s183, %s197
    %p199 = scmp.eq.s32.totalorder %s26, 0
    %p200 = por %p198, %p199
    %s202 = sadd.s32 %s201, 1
    %p205 = scmp.eq.s32.totalorder %s20, 1
    %p206 = scmp.ne.s32.totalorder %s201, %s203
    %p207 = scmp.eq.s32.totalorder %s20, 0
    %p208 = por %p206, %p207
    %p209 = scmp.ne.s32.totalorder %s201, %s203
    %p210 = scmp.eq.s32.totalorder %s25, 1
    %p211 = por %p209, %p210
    %p212 = scmp.ne.s32.totalorder %s203, %s204
    %p213 = scmp.eq.s32.totalorder %s25, 0
    %p214 = por %p212, %p213
    %p215 = scmp.ne.s32.totalorder %s203, %s204
    %p216 = scmp.eq.s32.totalorder %s26, 1
    %p217 = por %p215, %p216
    %p219 = scmp.ne.s32.totalorder %s204, %s218
    %p220 = scmp.eq.s32.totalorder %s26, 0
    %p221 = por %p219, %p220
    %s223 = sadd.s32 %s222, 1
    %p226 = scmp.eq.s32.totalorder %s20, 1
    %p227 = scmp.ne.s32.totalorder %s222, %s224
    %p228 = scmp.eq.s32.totalorder %s20, 0
    %p229 = por %p227, %p228
    %p230 = scmp.ne.s32.totalorder %s222, %s224
    %p231 = scmp.eq.s32.totalorder %s25, 1
    %p232 = por %p230, %p231
    %p233 = scmp.ne.s32.totalorder %s224, %s225
    %p234 = scmp.eq.s32.totalorder %s25, 0
    %p235 = por %p233, %p234
    %p236 = scmp.ne.s32.totalorder %s224, %s225
    %p237 = scmp.eq.s32.totalorder %s26, 1
    %p238 = por %p236, %p237
    %p240 = scmp.ne.s32.totalorder %s225, %s239
    %p241 = scmp.eq.s32.totalorder %s26, 0
    %p242 = por %p240, %p241
    %s244 = sadd.s32 %s243, 1
    %p247 = scmp.eq.s32.totalorder %s20, 1
    %p248 = scmp.ne.s32.totalorder %s243, %s245
    %p249 = scmp.eq.s32.totalorder %s20, 0
    %p250 = por %p248, %p249
    %p251 = scmp.ne.s32.totalorder %s243, %s245
    %p252 = scmp.eq.s32.totalorder %s25, 1
    %p253 = por %p251, %p252
    %p254 = scmp.ne.s32.totalorder %s245, %s246
    %p255 = scmp.eq.s32.totalorder %s25, 0
    %p256 = por %p254, %p255
    %p257 = scmp.ne.s32.totalorder %s245, %s246
    %p258 = scmp.eq.s32.totalorder %s26, 1
    %p259 = por %p257, %p258
    %p261 = scmp.ne.s32.totalorder %s246, %s260
    %p262 = scmp.eq.s32.totalorder %s26, 0
    %p263 = por %p261, %p262
    %s265 = sadd.s32 %s264, 1
    %p268 = scmp.eq.s32.totalorder %s20, 1
    %p269 = scmp.ne.s32.totalorder %s264, %s266
    %p270 = scmp.eq.s32.totalorder %s20, 0
    %p271 = por %p269, %p270
    %p272 = scmp.ne.s32.totalorder %s264, %s266
    %p273 = scmp.eq.s32.totalorder %s25, 1
    %p274 = por %p272, %p273
    %p275 = scmp.ne.s32.totalorder %s266, %s267
    %p276 = scmp.eq.s32.totalorder %s25, 0
    %p277 = por %p275, %p276
    %p278 = scmp.ne.s32.totalorder %s266, %s267
    %p279 = scmp.eq.s32.totalorder %s26, 1
    %p280 = por %p278, %p279
    %p282 = scmp.ne.s32.totalorder %s267, %s281
    %p283 = scmp.eq.s32.totalorder %s26, 0
    %p284 = por %p282, %p283
    %s286 = sadd.s32 %s285, 1
    %p289 = scmp.eq.s32.totalorder %s20, 1
    %p290 = scmp.ne.s32.totalorder %s285, %s287
    %p291 = scmp.eq.s32.totalorder %s20, 0
    %p292 = por %p290, %p291
    %p293 = scmp.ne.s32.totalorder %s285, %s287
    %p294 = scmp.eq.s32.totalorder %s25, 1
    %p295 = por %p293, %p294
    %p296 = scmp.ne.s32.totalorder %s287, %s288
    %p297 = scmp.eq.s32.totalorder %s25, 0
    %p298 = por %p296, %p297
    %p299 = scmp.ne.s32.totalorder %s287, %s288
    %p300 = scmp.eq.s32.totalorder %s26, 1
    %p301 = por %p299, %p300
    %p303 = scmp.ne.s32.totalorder %s288, %s302
    %p304 = scmp.eq.s32.totalorder %s26, 0
    %p305 = por %p303, %p304
    %s307 = sadd.s32 %s306, 1
    %p310 = scmp.eq.s32.totalorder %s20, 1
    %p311 = scmp.ne.s32.totalorder %s306, %s308
    %p312 = scmp.eq.s32.totalorder %s20, 0
    %p313 = por %p311, %p312
    %p314 = scmp.ne.s32.totalorder %s306, %s308
    %p315 = scmp.eq.s32.totalorder %s25, 1
    %p316 = por %p314, %p315
    %p317 = scmp.ne.s32.totalorder %s308, %s309
    %p318 = scmp.eq.s32.totalorder %s25, 0
    %p319 = por %p317, %p318
    %p320 = scmp.ne.s32.totalorder %s308, %s309
    %p321 = scmp.eq.s32.totalorder %s26, 1
    %p322 = por %p320, %p321
    %p324 = scmp.ne.s32.totalorder %s309, %s323
    %p325 = scmp.eq.s32.totalorder %s26, 0
    %p326 = por %p324, %p325
    %s327 = ssub.s32 %s20, %s27
    %p328 = scmp.eq.s32.totalorder %s327, 0
    %s330 = sadd.s32 %s329, 1
    %s331 = scalar_select %p328, %s329, %s330
    %p334 = pneg %p328
    %p335 = scmp.eq.s32.totalorder %s20, 1
    %p336 = por %p334, %p335
    %p337 = scmp.ne.s32.totalorder %s329, %s332
    %p338 = scmp.eq.s32.totalorder %s20, 0
    %p339 = por %p337, %p338
    %p340 = scmp.ne.s32.totalorder %s329, %s332
    %p341 = scmp.eq.s32.totalorder %s25, 1
    %p342 = por %p340, %p341
    %p343 = scmp.ne.s32.totalorder %s332, %s333
    %p344 = scmp.eq.s32.totalorder %s25, 0
    %p345 = por %p343, %p344
    %p346 = scmp.ne.s32.totalorder %s332, %s333
    %p347 = scmp.eq.s32.totalorder %s26, 1
    %p348 = por %p346, %p347
    %p350 = scmp.ne.s32.totalorder %s333, %s349
    %p351 = scmp.eq.s32.totalorder %s26, 0
    %p352 = por %p350, %p351
    %p353 = scmp.le.s32.totalorder 1, %s20
    %p354 = scmp.lt.s32.totalorder %s20, 3
    %p355 = pnand %p353, %p354
    %p356 = pneg %p355
    // Predicated region
    $region9: #{network_block_forward.1} parent=5 // pred_check
      _
    $region10: #{network_block_forward.1} parent=5 // pred_check_branch
      %358 = sbr.rel (%p355) target = $region12
    $region11: #{network_block_forward.1} parent=5 // pred_region
      %s359 = ssub.s32 %s20, 1
      // Predicated region
      $region13: #{network_block_forward.1} parent=11 // pred_check
        %p360 = pneg %p67
      $region14: #{network_block_forward.1} parent=11 // pred_check_branch
        %362 = sbr.rel (%p360) target = $region16
      $region15: #{network_block_forward.1} parent=11 // pred_region
        _
      $region16: #{network_block_forward.1} parent=11 // pred_fallthru
        _
      // Predicated region
      $region17: #{network_block_forward.1} parent=11 // pred_check
        %p363 = pneg %p88
      $region18: #{network_block_forward.1} parent=11 // pred_check_branch
        %365 = sbr.rel (%p363) target = $region20
      $region19: #{network_block_forward.1} parent=11 // pred_region
        _
      $region20: #{network_block_forward.1} parent=11 // pred_fallthru
        _
      // Predicated region
      $region21: #{network_block_forward.1} parent=11 // pred_check
        %p366 = pneg %p109
      $region22: #{network_block_forward.1} parent=11 // pred_check_branch
        %368 = sbr.rel (%p366) target = $region24
      $region23: #{network_block_forward.1} parent=11 // pred_region
        _
      $region24: #{network_block_forward.1} parent=11 // pred_fallthru
        _
      // Predicated region
      $region25: #{network_block_forward.1} parent=11 // pred_check
        %p369 = pneg %p130
      $region26: #{network_block_forward.1} parent=11 // pred_check_branch
        %371 = sbr.rel (%p369) target = $region28
      $region27: #{network_block_forward.1} parent=11 // pred_region
        _
      $region28: #{network_block_forward.1} parent=11 // pred_fallthru
        _
      // Predicated region
      $region29: #{network_block_forward.1} parent=11 // pred_check
        %p372 = pneg %p151
      $region30: #{network_block_forward.1} parent=11 // pred_check_branch
        %374 = sbr.rel (%p372) target = $region32
      $region31: #{network_block_forward.1} parent=11 // pred_region
        _
      $region32: #{network_block_forward.1} parent=11 // pred_fallthru
        _
      // Predicated region
      $region33: #{network_block_forward.1} parent=11 // pred_check
        %p375 = pneg %p172
      $region34: #{network_block_forward.1} parent=11 // pred_check_branch
        %377 = sbr.rel (%p375) target = $region36
      $region35: #{network_block_forward.1} parent=11 // pred_region
        _
      $region36: #{network_block_forward.1} parent=11 // pred_fallthru
        _
      // Predicated region
      $region37: #{network_block_forward.1} parent=11 // pred_check
        %p378 = pneg %p193
      $region38: #{network_block_forward.1} parent=11 // pred_check_branch
        %380 = sbr.rel (%p378) target = $region40
      $region39: #{network_block_forward.1} parent=11 // pred_region
        _
      $region40: #{network_block_forward.1} parent=11 // pred_fallthru
        _
      // Predicated region
      $region41: #{network_block_forward.1} parent=11 // pred_check
        %p381 = pneg %p214
      $region42: #{network_block_forward.1} parent=11 // pred_check_branch
        %383 = sbr.rel (%p381) target = $region44
      $region43: #{network_block_forward.1} parent=11 // pred_region
        _
      $region44: #{network_block_forward.1} parent=11 // pred_fallthru
        _
      // Predicated region
      $region45: #{network_block_forward.1} parent=11 // pred_check
        %p384 = pneg %p235
      $region46: #{network_block_forward.1} parent=11 // pred_check_branch
        %386 = sbr.rel (%p384) target = $region48
      $region47: #{network_block_forward.1} parent=11 // pred_region
        _
      $region48: #{network_block_forward.1} parent=11 // pred_fallthru
        _
      // Predicated region
      $region49: #{network_block_forward.1} parent=11 // pred_check
        %p387 = pneg %p256
      $region50: #{network_block_forward.1} parent=11 // pred_check_branch
        %389 = sbr.rel (%p387) target = $region52
      $region51: #{network_block_forward.1} parent=11 // pred_region
        _
      $region52: #{network_block_forward.1} parent=11 // pred_fallthru
        _
      // Predicated region
      $region53: #{network_block_forward.1} parent=11 // pred_check
        %p390 = pneg %p277
      $region54: #{network_block_forward.1} parent=11 // pred_check_branch
        %392 = sbr.rel (%p390) target = $region56
      $region55: #{network_block_forward.1} parent=11 // pred_region
        _
      $region56: #{network_block_forward.1} parent=11 // pred_fallthru
        _
      // Predicated region
      $region57: #{network_block_forward.1} parent=11 // pred_check
        %p393 = pneg %p298
      $region58: #{network_block_forward.1} parent=11 // pred_check_branch
        %395 = sbr.rel (%p393) target = $region60
      $region59: #{network_block_forward.1} parent=11 // pred_region
        _
      $region60: #{network_block_forward.1} parent=11 // pred_fallthru
        _
      // Predicated region
      $region61: #{network_block_forward.1} parent=11 // pred_check
        %p396 = pneg %p319
      $region62: #{network_block_forward.1} parent=11 // pred_check_branch
        %398 = sbr.rel (%p396) target = $region64
      $region63: #{network_block_forward.1} parent=11 // pred_region
        _
      $region64: #{network_block_forward.1} parent=11 // pred_fallthru
        _
    $region12: #{network_block_forward.1} parent=5 // pred_fallthru
      _
    %p399 = scmp.lt.s32.totalorder %s20, 2
    // Predicated region
    $region65: #{network_block_forward.1} parent=5 // pred_check
      %p400 = pneg %p399
    $region66: #{network_block_forward.1} parent=5 // pred_check_branch
      %402 = sbr.rel (%p400) target = $region68
    $region67: #{network_block_forward.1} parent=5 // pred_region
      // Predicated region
      $region69: #{network_block_forward.1} parent=67 // pred_check
        %p403 = pneg %p40
      $region70: #{network_block_forward.1} parent=67 // pred_check_branch
        %405 = sbr.rel (%p403) target = $region72
      $region71: #{network_block_forward.1} parent=67 // pred_region
        %p406 = scmp.lt.s32.totalorder %s20, 1
        %s407 = scalar_select %p406, %s20, 1
        %s408 = smul.addr %s407, 32
        %s409 = smul.addr %s408, 8
        %s410 = scalar_lea.vmem %s0, %s409
      $region72: #{network_block_forward.1} parent=67 // pred_fallthru
        _
    $region68: #{network_block_forward.1} parent=5 // pred_fallthru
      _
    %p411 = scmp.le.s32.totalorder 1, %s20
    %p412 = scmp.lt.s32.totalorder %s20, 3
    %p413 = pnand %p411, %p412
    %p414 = pneg %p413
    // Predicated region
    $region73: #{network_block_forward.1} parent=5 // pred_check
      _
    $region74: #{network_block_forward.1} parent=5 // pred_check_branch
      %416 = sbr.rel (%p413) target = $region76
    $region75: #{network_block_forward.1} parent=5 // pred_region
      %s417 = ssub.s32 %s20, 1
      %p418 = scmp.lt.s32.totalorder %s25, 1
      %s419 = scalar_select %p418, %s25, 1
      %s420 = smul.addr %s419, 32
      %s421 = smul.addr %s420, 8
      %s422 = scalar_lea.vmem %s0, %s421
      %p423 = pneg %p46
      %p424 = pneg %p43
      %p425 = pneg %p67
      %p426 = pneg %p64
      %p427 = pneg %p88
      %p428 = pneg %p85
      %p429 = pneg %p109
      %p430 = pneg %p106
      %p431 = pneg %p130
      %p432 = pneg %p127
      %p433 = pneg %p151
      %p434 = pneg %p148
      %p435 = pneg %p172
      %p436 = pneg %p169
      %p437 = pneg %p193
      %p438 = pneg %p190
      %p439 = pneg %p214
      %p440 = pneg %p211
      %p441 = pneg %p235
      %p442 = pneg %p232
      %p443 = pneg %p256
      %p444 = pneg %p253
      %p445 = pneg %p277
      %p446 = pneg %p274
      %p447 = pneg %p298
      %p448 = pneg %p295
      %p449 = pneg %p319
      %p450 = pneg %p316
      %p451 = pneg %p345
      %p452 = pneg %p342
      %p453 = scmp.lt.s32.totalorder %s25, 1
      %s454 = scalar_select %p453, %s25, 1
      %s455 = smul.addr %s454, 8
      %s456 = smul.addr %s455, 8
      %s457 = scalar_lea.vmem %s14, %s456
      %p458 = scmp.lt.s32.totalorder %s25, 1
      %s459 = scalar_select %p458, %s25, 1
      %s460 = smul.addr %s459, 32
      %s461 = smul.addr %s460, 8
      %s462 = scalar_lea.vmem %s0, %s461
      %p463 = scmp.lt.s32.totalorder %s25, 1
      %s464 = scalar_select %p463, %s25, 1
      %s465 = smul.addr %s464, 8
      %s466 = smul.addr %s465, 8
      %s467 = scalar_lea.vmem %s14, %s466
      %vm468 = vcmask 64512
      %469 = vst.msk [vmem:[#allocation3] sm:$0xff] %vm468, 0.0
      %470 = vst.msk [vmem:[#allocation3 + $0x8] sm:$0xff] %vm468, 0.0
      %vm471 = vcmask 57344
      %472 = vst.msk [vmem:[#allocation3 + $0x10] sm:$0x1] %vm471, 0.0
      %s473 = scalar_lea.vmem [#allocation3], 216
      %474 = vst.msk [vmem:[%s473] sm:$0xff] %vm468, 0.0
      %475 = vst.msk [vmem:[%s473 + $0x8] sm:$0xff] %vm468, 0.0
      %476 = vst.msk [vmem:[%s473 + $0x10] sm:$0x1] %vm471, 0.0
      %477 = vst.msk [vmem:[#allocation3 + $0x7] sm:$0x1] %vm471, 0.0
      %478 = vst.msk [vmem:[#allocation3 + $0x1f] sm:$0x1] %vm471, 0.0
      %479 = vst.msk [vmem:[#allocation3 + $0x37] sm:$0x1] %vm471, 0.0
      %480 = vst.msk [vmem:[#allocation3 + $0x4f] sm:$0x1] %vm471, 0.0
      %481 = vst.msk [vmem:[#allocation3 + $0x67] sm:$0x1] %vm471, 0.0
      %482 = vst.msk [vmem:[#allocation3 + $0x7f] sm:$0x1] %vm471, 0.0
      %483 = vst.msk [vmem:[#allocation3 + $0x97] sm:$0x1] %vm471, 0.0
      %484 = vst.msk [vmem:[#allocation3 + $0xaf] sm:$0x1] %vm471, 0.0
      %485 = vst.msk [vmem:[#allocation3 + $0xc7] sm:$0x1] %vm471, 0.0
      %486 = vst.msk [vmem:[#allocation3 + $0xdf] sm:$0x1] %vm471, 0.0
      %487 = vst.msk [vmem:[#allocation3 + $0x10] sm:$0x1] %vm471, 0.0
      %488 = vst.msk [vmem:[#allocation3 + $0x28] sm:$0x1] %vm471, 0.0
      %489 = vst.msk [vmem:[#allocation3 + $0x40] sm:$0x1] %vm471, 0.0
      %490 = vst.msk [vmem:[#allocation3 + $0x58] sm:$0x1] %vm471, 0.0
      %491 = vst.msk [vmem:[#allocation3 + $0x70] sm:$0x1] %vm471, 0.0
      %492 = vst.msk [vmem:[#allocation3 + $0x88] sm:$0x1] %vm471, 0.0
      %493 = vst.msk [vmem:[#allocation3 + $0xa0] sm:$0x1] %vm471, 0.0
      %494 = vst.msk [vmem:[#allocation3 + $0xb8] sm:$0x1] %vm471, 0.0
      %495 = vst.msk [vmem:[#allocation3 + $0xd0] sm:$0x1] %vm471, 0.0
      %496 = vst.msk [vmem:[#allocation3 + $0xe8] sm:$0x1] %vm471, 0.0
      %v497 = vld [vmem:[%s1] sm:$0x1]
      %v498 = vld [vmem:[%s2] sm:$0x1]
      %v499 = vld [vmem:[%s3] sm:$0xf]
      %v500 = vld [vmem:[%s3 + $0x4] sm:$0xf]
      %v501 = vld [vmem:[%s3 + $0x8] sm:$0xf]
      %v502 = vld [vmem:[%s3 + $0xc] sm:$0xf]
      %v503 = vld [vmem:[%s3 + $0x10] sm:$0xf]
      %v504 = vld [vmem:[%s3 + $0x14] sm:$0xf]
      %v505 = vld [vmem:[%s3 + $0x18] sm:$0xf]
      %v506 = vld [vmem:[%s3 + $0x1c] sm:$0xf]
      %v507 = vld [vmem:[%s3 + $0x20] sm:$0xf]
      %v508 = vld [vmem:[%s4] sm:$0x1]
      %v509 = vld [vmem:[%s5] sm:$0x1]
      %v510 = vld [vmem:[%s6] sm:$0xff]
      %v511 = vld [vmem:[%s6 + $0x8] sm:$0xff]
      %v512 = vld [vmem:[%s6 + $0x10] sm:$0xff]
      %v513 = vld [vmem:[%s6 + $0x18] sm:$0xff]
      %v514 = vld [vmem:[%s6 + $0x20] sm:$0xff]
      %v515 = vld [vmem:[%s6 + $0x28] sm:$0xff]
      %v516 = vld [vmem:[%s6 + $0x30] sm:$0xff]
      %v517 = vld [vmem:[%s6 + $0x38] sm:$0xff]
      %v518 = vld [vmem:[%s6 + $0x40] sm:$0xff]
      %v519 = vld [vmem:[%s7] sm:$0xf]
      %vm520 = vcmask 31744
      %521 = vst.msk [vmem:[#allocation2] sm:$0xff] %vm520, 0.0
      %522 = vst.msk [vmem:[#allocation2 + $0x8] sm:$0xff] %vm520, 0.0
      %523 = vst.msk [vmem:[#allocation2 + $0x90] sm:$0xff] %vm520, 0.0
      %524 = vst.msk [vmem:[#allocation2 + $0x98] sm:$0xff] %vm520, 0.0
      %525 = vst.msk [vmem:[#allocation2 + $0x120] sm:$0xff] %vm520, 0.0
      %526 = vst.msk [vmem:[#allocation2 + $0x128] sm:$0xff] %vm520, 0.0
      %527 = vst.msk [vmem:[#allocation2 + $0x1b0] sm:$0xff] %vm520, 0.0
      %528 = vst.msk [vmem:[#allocation2 + $0x1b8] sm:$0xff] %vm520, 0.0
      %vm529 = vcmask 24576
      %530 = vst.msk [vmem:[#allocation2 + $0x7] sm:$0x1] %vm529, 0.0
      %531 = vst.msk [vmem:[#allocation2 + $0x17] sm:$0x1] %vm529, 0.0
      %532 = vst.msk [vmem:[#allocation2 + $0x27] sm:$0x1] %vm529, 0.0
      %533 = vst.msk [vmem:[#allocation2 + $0x37] sm:$0x1] %vm529, 0.0
      %534 = vst.msk [vmem:[#allocation2 + $0x47] sm:$0x1] %vm529, 0.0
      %535 = vst.msk [vmem:[#allocation2 + $0x57] sm:$0x1] %vm529, 0.0
      %536 = vst.msk [vmem:[#allocation2 + $0x67] sm:$0x1] %vm529, 0.0
      %537 = vst.msk [vmem:[#allocation2 + $0x77] sm:$0x1] %vm529, 0.0
      %538 = vst.msk [vmem:[#allocation2 + $0x87] sm:$0x1] %vm529, 0.0
      %539 = vst.msk [vmem:[#allocation2 + $0x97] sm:$0x1] %vm529, 0.0
      %540 = vst.msk [vmem:[#allocation2 + $0xa7] sm:$0x1] %vm529, 0.0
      %541 = vst.msk [vmem:[#allocation2 + $0xb7] sm:$0x1] %vm529, 0.0
      %542 = vst.msk [vmem:[#allocation2 + $0xc7] sm:$0x1] %vm529, 0.0
      %543 = vst.msk [vmem:[#allocation2 + $0xd7] sm:$0x1] %vm529, 0.0
      %544 = vst.msk [vmem:[#allocation2 + $0xe7] sm:$0x1] %vm529, 0.0
      %545 = vst.msk [vmem:[#allocation2 + $0xf7] sm:$0x1] %vm529, 0.0
      %546 = vst.msk [vmem:[#allocation2 + $0x107] sm:$0x1] %vm529, 0.0
      %547 = vst.msk [vmem:[#allocation2 + $0x117] sm:$0x1] %vm529, 0.0
      %548 = vst.msk [vmem:[#allocation2 + $0x127] sm:$0x1] %vm529, 0.0
      %549 = vst.msk [vmem:[#allocation2 + $0x137] sm:$0x1] %vm529, 0.0
      %550 = vst.msk [vmem:[#allocation2 + $0x147] sm:$0x1] %vm529, 0.0
      %551 = vst.msk [vmem:[#allocation2 + $0x157] sm:$0x1] %vm529, 0.0
      %552 = vst.msk [vmem:[#allocation2 + $0x167] sm:$0x1] %vm529, 0.0
      %553 = vst.msk [vmem:[#allocation2 + $0x177] sm:$0x1] %vm529, 0.0
      %554 = vst.msk [vmem:[#allocation2 + $0x187] sm:$0x1] %vm529, 0.0
      %555 = vst.msk [vmem:[#allocation2 + $0x197] sm:$0x1] %vm529, 0.0
      %556 = vst.msk [vmem:[#allocation2 + $0x1a7] sm:$0x1] %vm529, 0.0
      %557 = vst.msk [vmem:[#allocation2 + $0x1b7] sm:$0x1] %vm529, 0.0
      %558 = vst.msk [vmem:[#allocation2 + $0x1c7] sm:$0x1] %vm529, 0.0
      %559 = vst.msk [vmem:[#allocation2 + $0x1d7] sm:$0x1] %vm529, 0.0
      %560 = vst.msk [vmem:[#allocation2 + $0x1e7] sm:$0x1] %vm529, 0.0
      %561 = vst.msk [vmem:[#allocation2 + $0x1f7] sm:$0x1] %vm529, 0.0
      %562 = vst.msk [vmem:[#allocation2 + $0x207] sm:$0x1] %vm529, 0.0
      %563 = vst.msk [vmem:[#allocation2 + $0x217] sm:$0x1] %vm529, 0.0
      %564 = vst.msk [vmem:[#allocation2 + $0x227] sm:$0x1] %vm529, 0.0
      %565 = vst.msk [vmem:[#allocation2 + $0x237] sm:$0x1] %vm529, 0.0
      %v566 = vld [vmem:[%s462] sm:$0xff]
      %v567 = vld [vmem:[%s462 + $0x8] sm:$0xff]
      %v568 = vld [vmem:[%s462 + $0x10] sm:$0xff]
      %v569 = vld [vmem:[%s462 + $0x18] sm:$0xff]
      %v570 = vld [vmem:[%s462 + $0x20] sm:$0xff]
      %v571 = vld [vmem:[%s462 + $0x28] sm:$0xff]
      %v572 = vld [vmem:[%s462 + $0x30] sm:$0xff]
      %v573 = vld [vmem:[%s462 + $0x38] sm:$0xff]
      %v574 = vld [vmem:[%s462 + $0x40] sm:$0xff]
      %v575 = vld [vmem:[%s462 + $0x48] sm:$0xff]
      %v576 = vld [vmem:[%s462 + $0x50] sm:$0xff]
      %v577 = vld [vmem:[%s462 + $0x58] sm:$0xff]
      %v578 = vld [vmem:[%s462 + $0x60] sm:$0xff]
      %v579 = vld [vmem:[%s462 + $0x68] sm:$0xff]
      %v580 = vld [vmem:[%s462 + $0x70] sm:$0xff]
      %v581 = vld [vmem:[%s462 + $0x78] sm:$0xff]
      %v582 = vld [vmem:[%s462 + $0x80] sm:$0xff]
      %v583 = vld [vmem:[%s462 + $0x88] sm:$0xff]
      %v584 = vld [vmem:[%s462 + $0x90] sm:$0xff]
      %v585 = vld [vmem:[%s462 + $0x98] sm:$0xff]
      %v586 = vld [vmem:[%s462 + $0xa0] sm:$0xff]
      %v587 = vld [vmem:[%s462 + $0xa8] sm:$0xff]
      %v588 = vld [vmem:[%s462 + $0xb0] sm:$0xff]
      %v589 = vld [vmem:[%s462 + $0xb8] sm:$0xff]
      %v590 = vld [vmem:[%s462 + $0xc0] sm:$0xff]
      %v591 = vld [vmem:[%s462 + $0xc8] sm:$0xff]
      %v592 = vld [vmem:[%s462 + $0xd0] sm:$0xff]
      %v593 = vld [vmem:[%s462 + $0xd8] sm:$0xff]
      %v594 = vld [vmem:[%s462 + $0xe0] sm:$0xff]
      %v595 = vld [vmem:[%s462 + $0xe8] sm:$0xff]
      %v596 = vld [vmem:[%s462 + $0xf0] sm:$0xff]
      %v597 = vld [vmem:[%s462 + $0xf8] sm:$0xff]
      %v599 = vperm.slane %v497, 0
      %v601 = vmul.f32 %v566, %v599
      %v602 = vmul.f32 %v567, %v599
      %v603 = vmul.f32 %v568, %v599
      %v604 = vmul.f32 %v569, %v599
      %v605 = vmul.f32 %v570, %v599
      %v606 = vmul.f32 %v571, %v599
      %v607 = vmul.f32 %v572, %v599
      %v608 = vmul.f32 %v573, %v599
      %v609 = vmul.f32 %v574, %v599
      %v610 = vmul.f32 %v575, %v599
      %v611 = vmul.f32 %v576, %v599
      %v612 = vmul.f32 %v577, %v599
      %v613 = vmul.f32 %v578, %v599
      %v614 = vmul.f32 %v579, %v599
      %v615 = vmul.f32 %v580, %v599
      %v616 = vmul.f32 %v581, %v599
      %v617 = vmul.f32 %v582, %v599
      %v618 = vmul.f32 %v583, %v599
      %v619 = vmul.f32 %v584, %v599
      %v620 = vmul.f32 %v585, %v599
      %v621 = vmul.f32 %v586, %v599
      %v622 = vmul.f32 %v587, %v599
      %v623 = vmul.f32 %v588, %v599
      %v624 = vmul.f32 %v589, %v599
      %v625 = vmul.f32 %v590, %v599
      %v626 = vmul.f32 %v591, %v599
      %v627 = vmul.f32 %v592, %v599
      %v628 = vmul.f32 %v593, %v599
      %v629 = vmul.f32 %v594, %v599
      %v630 = vmul.f32 %v595, %v599
      %v631 = vmul.f32 %v596, %v599
      %v632 = vmul.f32 %v597, %v599
      %v634 = vperm.slane %v498, 0
      %v636 = vadd.f32 %v601, %v634
      %v637 = vadd.f32 %v602, %v634
      %v638 = vadd.f32 %v603, %v634
      %v639 = vadd.f32 %v604, %v634
      %v640 = vadd.f32 %v605, %v634
      %v641 = vadd.f32 %v606, %v634
      %v642 = vadd.f32 %v607, %v634
      %v643 = vadd.f32 %v608, %v634
      %v644 = vadd.f32 %v609, %v634
      %v645 = vadd.f32 %v610, %v634
      %v646 = vadd.f32 %v611, %v634
      %v647 = vadd.f32 %v612, %v634
      %v648 = vadd.f32 %v613, %v634
      %v649 = vadd.f32 %v614, %v634
      %v650 = vadd.f32 %v615, %v634
      %v651 = vadd.f32 %v616, %v634
      %v652 = vadd.f32 %v617, %v634
      %v653 = vadd.f32 %v618, %v634
      %v654 = vadd.f32 %v619, %v634
      %v655 = vadd.f32 %v620, %v634
      %v656 = vadd.f32 %v621, %v634
      %v657 = vadd.f32 %v622, %v634
      %v658 = vadd.f32 %v623, %v634
      %v659 = vadd.f32 %v624, %v634
      %v660 = vadd.f32 %v625, %v634
      %v661 = vadd.f32 %v626, %v634
      %v662 = vadd.f32 %v627, %v634
      %v663 = vadd.f32 %v628, %v634
      %v664 = vadd.f32 %v629, %v634
      %v665 = vadd.f32 %v630, %v634
      %v666 = vadd.f32 %v631, %v634
      %v667 = vadd.f32 %v632, %v634
      %v668 = vmax.f32 %v636, 0.0
      %v669 = vmax.f32 %v637, 0.0
      %v670 = vmax.f32 %v638, 0.0
      %v671 = vmax.f32 %v639, 0.0
      %v672 = vmax.f32 %v640, 0.0
      %v673 = vmax.f32 %v641, 0.0
      %v674 = vmax.f32 %v642, 0.0
      %v675 = vmax.f32 %v643, 0.0
      %v676 = vmax.f32 %v644, 0.0
      %v677 = vmax.f32 %v645, 0.0
      %v678 = vmax.f32 %v646, 0.0
      %v679 = vmax.f32 %v647, 0.0
      %v680 = vmax.f32 %v648, 0.0
      %v681 = vmax.f32 %v649, 0.0
      %v682 = vmax.f32 %v650, 0.0
      %v683 = vmax.f32 %v651, 0.0
      %v684 = vmax.f32 %v652, 0.0
      %v685 = vmax.f32 %v653, 0.0
      %v686 = vmax.f32 %v654, 0.0
      %v687 = vmax.f32 %v655, 0.0
      %v688 = vmax.f32 %v656, 0.0
      %v689 = vmax.f32 %v657, 0.0
      %v690 = vmax.f32 %v658, 0.0
      %v691 = vmax.f32 %v659, 0.0
      %v692 = vmax.f32 %v660, 0.0
      %v693 = vmax.f32 %v661, 0.0
      %v694 = vmax.f32 %v662, 0.0
      %v695 = vmax.f32 %v663, 0.0
      %v696 = vmax.f32 %v664, 0.0
      %v697 = vmax.f32 %v665, 0.0
      %v698 = vmax.f32 %v666, 0.0
      %v699 = vmax.f32 %v667, 0.0
      %s700 = scalar_lea.vmem [#allocation2], 16
      %701 = vst.msk [vmem:[%s700 + $0x8] sm:$0xff] %vm520, %v668
      %702 = vst.msk [vmem:[%s700 + $0x18] sm:$0xff] %vm520, %v669
      %703 = vst.msk [vmem:[%s700 + $0x28] sm:$0xff] %vm520, %v670
      %704 = vst.msk [vmem:[%s700 + $0x38] sm:$0xff] %vm520, %v671
      %705 = vst.msk [vmem:[%s700 + $0x48] sm:$0xff] %vm520, %v672
      %706 = vst.msk [vmem:[%s700 + $0x58] sm:$0xff] %vm520, %v673
      %707 = vst.msk [vmem:[%s700 + $0x68] sm:$0xff] %vm520, %v674
      %708 = vst.msk [vmem:[%s700 + $0x78] sm:$0xff] %vm520, %v675
      %709 = vst.msk [vmem:[%s700 + $0x98] sm:$0xff] %vm520, %v676
      %710 = vst.msk [vmem:[%s700 + $0xa8] sm:$0xff] %vm520, %v677
      %711 = vst.msk [vmem:[%s700 + $0xb8] sm:$0xff] %vm520, %v678
      %712 = vst.msk [vmem:[%s700 + $0xc8] sm:$0xff] %vm520, %v679
      %713 = vst.msk [vmem:[%s700 + $0xd8] sm:$0xff] %vm520, %v680
      %714 = vst.msk [vmem:[%s700 + $0xe8] sm:$0xff] %vm520, %v681
      %715 = vst.msk [vmem:[%s700 + $0xf8] sm:$0xff] %vm520, %v682
      %716 = vst.msk [vmem:[%s700 + $0x108] sm:$0xff] %vm520, %v683
      %717 = vst.msk [vmem:[%s700 + $0x128] sm:$0xff] %vm520, %v684
      %718 = vst.msk [vmem:[%s700 + $0x138] sm:$0xff] %vm520, %v685
      %719 = vst.msk [vmem:[%s700 + $0x148] sm:$0xff] %vm520, %v686
      %720 = vst.msk [vmem:[%s700 + $0x158] sm:$0xff] %vm520, %v687
      %721 = vst.msk [vmem:[%s700 + $0x168] sm:$0xff] %vm520, %v688
      %722 = vst.msk [vmem:[%s700 + $0x178] sm:$0xff] %vm520, %v689
      %723 = vst.msk [vmem:[%s700 + $0x188] sm:$0xff] %vm520, %v690
      %724 = vst.msk [vmem:[%s700 + $0x198] sm:$0xff] %vm520, %v691
      %725 = vst.msk [vmem:[%s700 + $0x1b8] sm:$0xff] %vm520, %v692
      %726 = vst.msk [vmem:[%s700 + $0x1c8] sm:$0xff] %vm520, %v693
      %727 = vst.msk [vmem:[%s700 + $0x1d8] sm:$0xff] %vm520, %v694
      %728 = vst.msk [vmem:[%s700 + $0x1e8] sm:$0xff] %vm520, %v695
      %729 = vst.msk [vmem:[%s700 + $0x1f8] sm:$0xff] %vm520, %v696
      %730 = vst.msk [vmem:[%s700 + $0x208] sm:$0xff] %vm520, %v697
      %731 = vst.msk [vmem:[%s700 + $0x218] sm:$0xff] %vm520, %v698
      %732 = vst.msk [vmem:[%s700 + $0x228] sm:$0xff] %vm520, %v699
      %v733 = vld [vmem:[#allocation2 + $0x18] sm:$0xff]
      %v734 = vld [vmem:[#allocation2 + $0x28] sm:$0xff]
      %v735 = vld [vmem:[#allocation2 + $0x38] sm:$0xff]
      %v736 = vld [vmem:[#allocation2 + $0x48] sm:$0xff]
      %v737 = vld [vmem:[#allocation2 + $0x58] sm:$0xff]
      %v738 = vld [vmem:[#allocation2 + $0x68] sm:$0xff]
      %v739 = vld [vmem:[#allocation2 + $0x78] sm:$0xff]
      %v740 = vld [vmem:[#allocation2 + $0x88] sm:$0xff]
      %v741 = vld [vmem:[#allocation2 + $0xa0] sm:$0xff]
      %v742 = vld [vmem:[#allocation2 + $0xa8] sm:$0xff]
      %v743 = vld [vmem:[#allocation2 + $0xb0] sm:$0xff]
      %v744 = vld [vmem:[#allocation2 + $0xb8] sm:$0xff]
      %v745 = vld [vmem:[#allocation2 + $0xc0] sm:$0xff]
      %v746 = vld [vmem:[#allocation2 + $0xc8] sm:$0xff]
      %v747 = vld [vmem:[#allocation2 + $0xd0] sm:$0xff]
      %v748 = vld [vmem:[#allocation2 + $0xd8] sm:$0xff]
      %v749 = vld [vmem:[#allocation2 + $0xe0] sm:$0xff]
      %v750 = vld [vmem:[#allocation2 + $0xe8] sm:$0xff]
      %v751 = vld [vmem:[#allocation2 + $0xf0] sm:$0xff]
      %v752 = vld [vmem:[#allocation2 + $0xf8] sm:$0xff]
      %v753 = vld [vmem:[#allocation2 + $0x100] sm:$0xff]
      %v754 = vld [vmem:[#allocation2 + $0x108] sm:$0xff]
      %v755 = vld [vmem:[#allocation2 + $0x110] sm:$0xff]
      %v756 = vld [vmem:[#allocation2 + $0x118] sm:$0xff]
      %v757 = vld [vmem:[#allocation2 + $0x128] sm:$0xff]
      %v758 = vld [vmem:[#allocation2 + $0x138] sm:$0xff]
      %v759 = vld [vmem:[#allocation2 + $0x148] sm:$0xff]
      %v760 = vld [vmem:[#allocation2 + $0x158] sm:$0xff]
      %v761 = vld [vmem:[#allocation2 + $0x168] sm:$0xff]
      %v762 = vld [vmem:[#allocation2 + $0x178] sm:$0xff]
      %v763 = vld [vmem:[#allocation2 + $0x188] sm:$0xff]
      %v764 = vld [vmem:[#allocation2 + $0x198] sm:$0xff]
      %v765 = vld [vmem:[#allocation2 + $0x1a8] sm:$0xff]
      %v766 = vld [vmem:[#allocation2 + $0x1b0] sm:$0xff]
      %v767 = vld [vmem:[#allocation2 + $0x1b8] sm:$0xff]
      %v768 = vld [vmem:[#allocation2 + $0x1c0] sm:$0xff]
      %v769 = vld [vmem:[#allocation2 + $0x1c8] sm:$0xff]
      %v770 = vld [vmem:[#allocation2 + $0x1d0] sm:$0xff]
      %v771 = vld [vmem:[#allocation2 + $0x1d8] sm:$0xff]
      %v772 = vld [vmem:[#allocation2 + $0x1e0] sm:$0xff]
      %v773 = vld [vmem:[#allocation2 + $0x1e8] sm:$0xff]
      %v774 = vld [vmem:[#allocation2 + $0x1f0] sm:$0xff]
      %v775 = vld [vmem:[#allocation2 + $0x1f8] sm:$0xff]
      %v776 = vld [vmem:[#allocation2 + $0x200] sm:$0xff]
      %v777 = vld [vmem:[#allocation2 + $0x208] sm:$0xff]
      %v778 = vld [vmem:[#allocation2 + $0x210] sm:$0xff]
      %v779 = vld [vmem:[#allocation2 + $0x218] sm:$0xff]
      %v780 = vld [vmem:[#allocation2 + $0x220] sm:$0xff]
      %v781 = vld [vmem:[#allocation2 + $0x228] sm:$0xff]
      %v782 = vld [vmem:[#allocation2 + $0x230] sm:$0xff]
      %v783 = vld [vmem:[#allocation2 + $0x238] sm:$0xff]
      %vm800 = vcmask 1040384
      %v801 = vrot.slane %v766, 7
      %v802 = vrot.slane %v767, 7
      %v803 = vsel %vm800, %v801, %v802
      %v804 = vrot.slane %v768, 7
      %v805 = vrot.slane %v769, 7
      %v806 = vsel %vm800, %v804, %v805
      %v807 = vrot.slane %v770, 7
      %v808 = vrot.slane %v771, 7
      %v809 = vsel %vm800, %v807, %v808
      %v810 = vrot.slane %v772, 7
      %v811 = vrot.slane %v773, 7
      %v812 = vsel %vm800, %v810, %v811
      %v813 = vrot.slane %v774, 7
      %v814 = vrot.slane %v775, 7
      %v815 = vsel %vm800, %v813, %v814
      %v816 = vrot.slane %v776, 7
      %v817 = vrot.slane %v777, 7
      %v818 = vsel %vm800, %v816, %v817
      %v819 = vrot.slane %v778, 7
      %v820 = vrot.slane %v779, 7
      %v821 = vsel %vm800, %v819, %v820
      %v822 = vrot.slane %v780, 7
      %v823 = vrot.slane %v781, 7
      %v824 = vsel %vm800, %v822, %v823
      %v826 = vsel %vm520, %v757, 0
      %v829 = vsel %vm520, %v758, 0
      %v832 = vsel %vm520, %v759, 0
      %v835 = vsel %vm520, %v760, 0
      %v838 = vsel %vm520, %v761, 0
      %v841 = vsel %vm520, %v762, 0
      %v844 = vsel %vm520, %v763, 0
      %v847 = vsel %vm520, %v764, 0
      %vm849 = vcmask 1043456
      %v851 = vsel %vm849, %v500, 0
      %853 = vmatpush.msra.mxu0 0.0
      %854 = vmatpush.msra.mxu0 0.0
      %855 = vmatpush.msra.mxu0 0.0
      %856 = vmatpush.msra.mxu0 0.0
      %857 = vmatpush.msra.mxu0 0.0
      %858 = vmatpush.msra.mxu0 0.0
      %859 = vmatpush.msra.mxu0 0.0
      %860 = vmatpush.msra.mxu0 0.0
      %861 = vmatpush.msra.mxu0 0.0
      %862 = vmatpush.msra.mxu0 0.0
      %863 = vmatpush.msra.mxu0 0.0
      %864 = vmatpush.msra.mxu0 0.0
      %865 = vmatpush.msra.mxu0 0.0
      %866 = vmatpush.msra.mxu0 0.0
      %867 = vmatpush.msra.mxu0 0.0
      %868 = vmatpush.msra.mxu0 %v851
      %869 = vmatmul.f32.gmra.mxu0 %v826
      %v870 = vpop.f32.mrf.mxu0
      %v871 = vadd.f32 0.0, %v870
      %872 = vmatmul.f32.gmra.mxu0 %v829
      %v873 = vpop.f32.mrf.mxu0
      %v874 = vadd.f32 0.0, %v873
      %875 = vmatmul.f32.gmra.mxu0 %v832
      %v876 = vpop.f32.mrf.mxu0
      %v877 = vadd.f32 0.0, %v876
      %878 = vmatmul.f32.gmra.mxu0 %v835
      %v879 = vpop.f32.mrf.mxu0
      %v880 = vadd.f32 0.0, %v879
      %881 = vmatmul.f32.gmra.mxu0 %v838
      %v882 = vpop.f32.mrf.mxu0
      %v883 = vadd.f32 0.0, %v882
      %884 = vmatmul.f32.gmra.mxu0 %v841
      %v885 = vpop.f32.mrf.mxu0
      %v886 = vadd.f32 0.0, %v885
      %887 = vmatmul.f32.gmra.mxu0 %v844
      %v888 = vpop.f32.mrf.mxu0
      %v889 = vadd.f32 0.0, %v888
      %890 = vmatmul.f32.gmra.mxu0 %v847
      %v891 = vpop.f32.mrf.mxu0
      %v892 = vadd.f32 0.0, %v891
      %893 = vdwg.mxu0
      %v894 = vsel %vm520, %v803, 0
      %v896 = vsel %vm520, %v806, 0
      %v898 = vsel %vm520, %v809, 0
      %v900 = vsel %vm520, %v812, 0
      %v902 = vsel %vm520, %v815, 0
      %v904 = vsel %vm520, %v818, 0
      %v906 = vsel %vm520, %v821, 0
      %v908 = vsel %vm520, %v824, 0
      %v911 = vsel %vm849, %v499, 0
      %913 = vmatpush.msra.mxu0 0.0
      %914 = vmatpush.msra.mxu0 0.0
      %915 = vmatpush.msra.mxu0 0.0
      %916 = vmatpush.msra.mxu0 0.0
      %917 = vmatpush.msra.mxu0 0.0
      %918 = vmatpush.msra.mxu0 0.0
      %919 = vmatpush.msra.mxu0 0.0
      %920 = vmatpush.msra.mxu0 0.0
      %921 = vmatpush.msra.mxu0 0.0
      %922 = vmatpush.msra.mxu0 0.0
      %923 = vmatpush.msra.mxu0 0.0
      %924 = vmatpush.msra.mxu0 0.0
      %925 = vmatpush.msra.mxu0 0.0
      %926 = vmatpush.msra.mxu0 0.0
      %927 = vmatpush.msra.mxu0 0.0
      %928 = vmatpush.msra.mxu0 %v911
      %929 = vmatmul.f32.gmra.mxu0 %v894
      %v930 = vpop.f32.mrf.mxu0
      %v931 = vadd.f32 %v871, %v930
      %932 = vmatmul.f32.gmra.mxu0 %v896
      %v933 = vpop.f32.mrf.mxu0
      %v934 = vadd.f32 %v874, %v933
      %935 = vmatmul.f32.gmra.mxu0 %v898
      %v936 = vpop.f32.mrf.mxu0
      %v937 = vadd.f32 %v877, %v936
      %938 = vmatmul.f32.gmra.mxu0 %v900
      %v939 = vpop.f32.mrf.mxu0
      %v940 = vadd.f32 %v880, %v939
      %941 = vmatmul.f32.gmra.mxu0 %v902
      %v942 = vpop.f32.mrf.mxu0
      %v943 = vadd.f32 %v883, %v942
      %944 = vmatmul.f32.gmra.mxu0 %v904
      %v945 = vpop.f32.mrf.mxu0
      %v946 = vadd.f32 %v886, %v945
      %947 = vmatmul.f32.gmra.mxu0 %v906
      %v948 = vpop.f32.mrf.mxu0
      %v949 = vadd.f32 %v889, %v948
      %950 = vmatmul.f32.gmra.mxu0 %v908
      %v951 = vpop.f32.mrf.mxu0
      %v952 = vadd.f32 %v892, %v951
      %953 = vdwg.mxu0
      %v954 = vsel %vm520, %v767, 0
      %v956 = vsel %vm520, %v769, 0
      %v958 = vsel %vm520, %v771, 0
      %v960 = vsel %vm520, %v773, 0
      %v962 = vsel %vm520, %v775, 0
      %v964 = vsel %vm520, %v777, 0
      %v966 = vsel %vm520, %v779, 0
      %v968 = vsel %vm520, %v781, 0
      %v971 = vsel %vm849, %v501, 0
      %973 = vmatpush.msra.mxu0 0.0
      %974 = vmatpush.msra.mxu0 0.0
      %975 = vmatpush.msra.mxu0 0.0
      %976 = vmatpush.msra.mxu0 0.0
      %977 = vmatpush.msra.mxu0 0.0
      %978 = vmatpush.msra.mxu0 0.0
      %979 = vmatpush.msra.mxu0 0.0
      %980 = vmatpush.msra.mxu0 0.0
      %981 = vmatpush.msra.mxu0 0.0
      %982 = vmatpush.msra.mxu0 0.0
      %983 = vmatpush.msra.mxu0 0.0
      %984 = vmatpush.msra.mxu0 0.0
      %985 = vmatpush.msra.mxu0 0.0
      %986 = vmatpush.msra.mxu0 0.0
      %987 = vmatpush.msra.mxu0 0.0
      %988 = vmatpush.msra.mxu0 %v971
      %989 = vmatmul.f32.gmra.mxu0 %v954
      %v990 = vpop.f32.mrf.mxu0
      %v991 = vadd.f32 0.0, %v990
      %992 = vmatmul.f32.gmra.mxu0 %v956
      %v993 = vpop.f32.mrf.mxu0
      %v994 = vadd.f32 0.0, %v993
      %995 = vmatmul.f32.gmra.mxu0 %v958
      %v996 = vpop.f32.mrf.mxu0
      %v997 = vadd.f32 0.0, %v996
      %998 = vmatmul.f32.gmra.mxu0 %v960
      %v999 = vpop.f32.mrf.mxu0
      %v1000 = vadd.f32 0.0, %v999
      %1001 = vmatmul.f32.gmra.mxu0 %v962
      %v1002 = vpop.f32.mrf.mxu0
      %v1003 = vadd.f32 0.0, %v1002
      %1004 = vmatmul.f32.gmra.mxu0 %v964
      %v1005 = vpop.f32.mrf.mxu0
      %v1006 = vadd.f32 0.0, %v1005
      %1007 = vmatmul.f32.gmra.mxu0 %v966
      %v1008 = vpop.f32.mrf.mxu0
      %v1009 = vadd.f32 0.0, %v1008
      %1010 = vmatmul.f32.gmra.mxu0 %v968
      %v1011 = vpop.f32.mrf.mxu0
      %v1012 = vadd.f32 0.0, %v1011
      %1013 = vdwg.mxu0
      %v1014 = vadd.f32 %v931, %v991
      %v1015 = vadd.f32 %v934, %v994
      %v1016 = vadd.f32 %v937, %v997
      %v1017 = vadd.f32 %v940, %v1000
      %v1018 = vadd.f32 %v943, %v1003
      %v1019 = vadd.f32 %v946, %v1006
      %v1020 = vadd.f32 %v949, %v1009
      %v1021 = vadd.f32 %v952, %v1012
      %v1038 = vrot.slane %v741, 7
      %v1039 = vrot.slane %v742, 7
      %v1040 = vsel %vm800, %v1038, %v1039
      %v1041 = vrot.slane %v743, 7
      %v1042 = vrot.slane %v744, 7
      %v1043 = vsel %vm800, %v1041, %v1042
      %v1044 = vrot.slane %v745, 7
      %v1045 = vrot.slane %v746, 7
      %v1046 = vsel %vm800, %v1044, %v1045
      %v1047 = vrot.slane %v747, 7
      %v1048 = vrot.slane %v748, 7
      %v1049 = vsel %vm800, %v1047, %v1048
      %v1050 = vrot.slane %v749, 7
      %v1051 = vrot.slane %v750, 7
      %v1052 = vsel %vm800, %v1050, %v1051
      %v1053 = vrot.slane %v751, 7
      %v1054 = vrot.slane %v752, 7
      %v1055 = vsel %vm800, %v1053, %v1054
      %v1056 = vrot.slane %v753, 7
      %v1057 = vrot.slane %v754, 7
      %v1058 = vsel %vm800, %v1056, %v1057
      %v1059 = vrot.slane %v755, 7
      %v1060 = vrot.slane %v756, 7
      %v1061 = vsel %vm800, %v1059, %v1060
      %v1062 = vsel %vm520, %v1040, 0
      %v1064 = vsel %vm520, %v1043, 0
      %v1066 = vsel %vm520, %v1046, 0
      %v1068 = vsel %vm520, %v1049, 0
      %v1070 = vsel %vm520, %v1052, 0
      %v1072 = vsel %vm520, %v1055, 0
      %v1074 = vsel %vm520, %v1058, 0
      %v1076 = vsel %vm520, %v1061, 0
      %v1079 = vsel %vm849, %v502, 0
      %1081 = vmatpush.msra.mxu0 0.0
      %1082 = vmatpush.msra.mxu0 0.0
      %1083 = vmatpush.msra.mxu0 0.0
      %1084 = vmatpush.msra.mxu0 0.0
      %1085 = vmatpush.msra.mxu0 0.0
      %1086 = vmatpush.msra.mxu0 0.0
      %1087 = vmatpush.msra.mxu0 0.0
      %1088 = vmatpush.msra.mxu0 0.0
      %1089 = vmatpush.msra.mxu0 0.0
      %1090 = vmatpush.msra.mxu0 0.0
      %1091 = vmatpush.msra.mxu0 0.0
      %1092 = vmatpush.msra.mxu0 0.0
      %1093 = vmatpush.msra.mxu0 0.0
      %1094 = vmatpush.msra.mxu0 0.0
      %1095 = vmatpush.msra.mxu0 0.0
      %1096 = vmatpush.msra.mxu0 %v1079
      %1097 = vmatmul.f32.gmra.mxu0 %v1062
      %v1098 = vpop.f32.mrf.mxu0
      %v1099 = vadd.f32 0.0, %v1098
      %1100 = vmatmul.f32.gmra.mxu0 %v1064
      %v1101 = vpop.f32.mrf.mxu0
      %v1102 = vadd.f32 0.0, %v1101
      %1103 = vmatmul.f32.gmra.mxu0 %v1066
      %v1104 = vpop.f32.mrf.mxu0
      %v1105 = vadd.f32 0.0, %v1104
      %1106 = vmatmul.f32.gmra.mxu0 %v1068
      %v1107 = vpop.f32.mrf.mxu0
      %v1108 = vadd.f32 0.0, %v1107
      %1109 = vmatmul.f32.gmra.mxu0 %v1070
      %v1110 = vpop.f32.mrf.mxu0
      %v1111 = vadd.f32 0.0, %v1110
      %1112 = vmatmul.f32.gmra.mxu0 %v1072
      %v1113 = vpop.f32.mrf.mxu0
      %v1114 = vadd.f32 0.0, %v1113
      %1115 = vmatmul.f32.gmra.mxu0 %v1074
      %v1116 = vpop.f32.mrf.mxu0
      %v1117 = vadd.f32 0.0, %v1116
      %1118 = vmatmul.f32.gmra.mxu0 %v1076
      %v1119 = vpop.f32.mrf.mxu0
      %v1120 = vadd.f32 0.0, %v1119
      %1121 = vdwg.mxu0
      %v1122 = vadd.f32 %v1014, %v1099
      %v1123 = vadd.f32 %v1015, %v1102
      %v1124 = vadd.f32 %v1016, %v1105
      %v1125 = vadd.f32 %v1017, %v1108
      %v1126 = vadd.f32 %v1018, %v1111
      %v1127 = vadd.f32 %v1019, %v1114
      %v1128 = vadd.f32 %v1020, %v1117
      %v1129 = vadd.f32 %v1021, %v1120
      %v1131 = vsel %vm520, %v733, 0
      %v1134 = vsel %vm520, %v734, 0
      %v1137 = vsel %vm520, %v735, 0
      %v1140 = vsel %vm520, %v736, 0
      %v1143 = vsel %vm520, %v737, 0
      %v1146 = vsel %vm520, %v738, 0
      %v1149 = vsel %vm520, %v739, 0
      %v1152 = vsel %vm520, %v740, 0
      %v1155 = vsel %vm849, %v503, 0
      %1157 = vmatpush.msra.mxu0 0.0
      %1158 = vmatpush.msra.mxu0 0.0
      %1159 = vmatpush.msra.mxu0 0.0
      %1160 = vmatpush.msra.mxu0 0.0
      %1161 = vmatpush.msra.mxu0 0.0
      %1162 = vmatpush.msra.mxu0 0.0
      %1163 = vmatpush.msra.mxu0 0.0
      %1164 = vmatpush.msra.mxu0 0.0
      %1165 = vmatpush.msra.mxu0 0.0
      %1166 = vmatpush.msra.mxu0 0.0
      %1167 = vmatpush.msra.mxu0 0.0
      %1168 = vmatpush.msra.mxu0 0.0
      %1169 = vmatpush.msra.mxu0 0.0
      %1170 = vmatpush.msra.mxu0 0.0
      %1171 = vmatpush.msra.mxu0 0.0
      %1172 = vmatpush.msra.mxu0 %v1155
      %1173 = vmatmul.f32.gmra.mxu0 %v1131
      %v1174 = vpop.f32.mrf.mxu0
      %v1175 = vadd.f32 0.0, %v1174
      %1176 = vmatmul.f32.gmra.mxu0 %v1134
      %v1177 = vpop.f32.mrf.mxu0
      %v1178 = vadd.f32 0.0, %v1177
      %1179 = vmatmul.f32.gmra.mxu0 %v1137
      %v1180 = vpop.f32.mrf.mxu0
      %v1181 = vadd.f32 0.0, %v1180
      %1182 = vmatmul.f32.gmra.mxu0 %v1140
      %v1183 = vpop.f32.mrf.mxu0
      %v1184 = vadd.f32 0.0, %v1183
      %1185 = vmatmul.f32.gmra.mxu0 %v1143
      %v1186 = vpop.f32.mrf.mxu0
      %v1187 = vadd.f32 0.0, %v1186
      %1188 = vmatmul.f32.gmra.mxu0 %v1146
      %v1189 = vpop.f32.mrf.mxu0
      %v1190 = vadd.f32 0.0, %v1189
      %1191 = vmatmul.f32.gmra.mxu0 %v1149
      %v1192 = vpop.f32.mrf.mxu0
      %v1193 = vadd.f32 0.0, %v1192
      %1194 = vmatmul.f32.gmra.mxu0 %v1152
      %v1195 = vpop.f32.mrf.mxu0
      %v1196 = vadd.f32 0.0, %v1195
      %1197 = vdwg.mxu0
      %v1198 = vadd.f32 %v1122, %v1175
      %v1199 = vadd.f32 %v1123, %v1178
      %v1200 = vadd.f32 %v1124, %v1181
      %v1201 = vadd.f32 %v1125, %v1184
      %v1202 = vadd.f32 %v1126, %v1187
      %v1203 = vadd.f32 %v1127, %v1190
      %v1204 = vadd.f32 %v1128, %v1193
      %v1205 = vadd.f32 %v1129, %v1196
      %v1206 = vsel %vm520, %v742, 0
      %v1208 = vsel %vm520, %v744, 0
      %v1210 = vsel %vm520, %v746, 0
      %v1212 = vsel %vm520, %v748, 0
      %v1214 = vsel %vm520, %v750, 0
      %v1216 = vsel %vm520, %v752, 0
      %v1218 = vsel %vm520, %v754, 0
      %v1220 = vsel %vm520, %v756, 0
      %v1223 = vsel %vm849, %v504, 0
      %1225 = vmatpush.msra.mxu0 0.0
      %1226 = vmatpush.msra.mxu0 0.0
      %1227 = vmatpush.msra.mxu0 0.0
      %1228 = vmatpush.msra.mxu0 0.0
      %1229 = vmatpush.msra.mxu0 0.0
      %1230 = vmatpush.msra.mxu0 0.0
      %1231 = vmatpush.msra.mxu0 0.0
      %1232 = vmatpush.msra.mxu0 0.0
      %1233 = vmatpush.msra.mxu0 0.0
      %1234 = vmatpush.msra.mxu0 0.0
      %1235 = vmatpush.msra.mxu0 0.0
      %1236 = vmatpush.msra.mxu0 0.0
      %1237 = vmatpush.msra.mxu0 0.0
      %1238 = vmatpush.msra.mxu0 0.0
      %1239 = vmatpush.msra.mxu0 0.0
      %1240 = vmatpush.msra.mxu0 %v1223
      %1241 = vmatmul.f32.gmra.mxu0 %v1206
      %v1242 = vpop.f32.mrf.mxu0
      %v1243 = vadd.f32 0.0, %v1242
      %1244 = vmatmul.f32.gmra.mxu0 %v1208
      %v1245 = vpop.f32.mrf.mxu0
      %v1246 = vadd.f32 0.0, %v1245
      %1247 = vmatmul.f32.gmra.mxu0 %v1210
      %v1248 = vpop.f32.mrf.mxu0
      %v1249 = vadd.f32 0.0, %v1248
      %1250 = vmatmul.f32.gmra.mxu0 %v1212
      %v1251 = vpop.f32.mrf.mxu0
      %v1252 = vadd.f32 0.0, %v1251
      %1253 = vmatmul.f32.gmra.mxu0 %v1214
      %v1254 = vpop.f32.mrf.mxu0
      %v1255 = vadd.f32 0.0, %v1254
      %1256 = vmatmul.f32.gmra.mxu0 %v1216
      %v1257 = vpop.f32.mrf.mxu0
      %v1258 = vadd.f32 0.0, %v1257
      %1259 = vmatmul.f32.gmra.mxu0 %v1218
      %v1260 = vpop.f32.mrf.mxu0
      %v1261 = vadd.f32 0.0, %v1260
      %1262 = vmatmul.f32.gmra.mxu0 %v1220
      %v1263 = vpop.f32.mrf.mxu0
      %v1264 = vadd.f32 0.0, %v1263
      %1265 = vdwg.mxu0
      %v1266 = vadd.f32 %v1198, %v1243
      %v1267 = vadd.f32 %v1199, %v1246
      %v1268 = vadd.f32 %v1200, %v1249
      %v1269 = vadd.f32 %v1201, %v1252
      %v1270 = vadd.f32 %v1202, %v1255
      %v1271 = vadd.f32 %v1203, %v1258
      %v1272 = vadd.f32 %v1204, %v1261
      %v1273 = vadd.f32 %v1205, %v1264
      %v1276 = vrot.slane %v782, 7
      %v1277 = vrot.slane %v783, 7
      %v1278 = vsel %vm800, %v1276, %v1277
      %v1279 = vsel %vm520, %v1278, 0
      %v1282 = vsel %vm849, %v505, 0
      %1284 = vmatpush.msra.mxu0 0.0
      %1285 = vmatpush.msra.mxu0 0.0
      %1286 = vmatpush.msra.mxu0 0.0
      %1287 = vmatpush.msra.mxu0 0.0
      %1288 = vmatpush.msra.mxu0 0.0
      %1289 = vmatpush.msra.mxu0 0.0
      %1290 = vmatpush.msra.mxu0 0.0
      %1291 = vmatpush.msra.mxu0 0.0
      %1292 = vmatpush.msra.mxu0 0.0
      %1293 = vmatpush.msra.mxu0 0.0
      %1294 = vmatpush.msra.mxu0 0.0
      %1295 = vmatpush.msra.mxu0 0.0
      %1296 = vmatpush.msra.mxu0 0.0
      %1297 = vmatpush.msra.mxu0 0.0
      %1298 = vmatpush.msra.mxu0 0.0
      %1299 = vmatpush.msra.mxu0 %v1282
      %1300 = vmatmul.f32.gmra.mxu0 %v896
      %v1301 = vpop.f32.mrf.mxu0
      %v1302 = vadd.f32 0.0, %v1301
      %1303 = vmatmul.f32.gmra.mxu0 %v898
      %v1304 = vpop.f32.mrf.mxu0
      %v1305 = vadd.f32 0.0, %v1304
      %1306 = vmatmul.f32.gmra.mxu0 %v900
      %v1307 = vpop.f32.mrf.mxu0
      %v1308 = vadd.f32 0.0, %v1307
      %1309 = vmatmul.f32.gmra.mxu0 %v902
      %v1310 = vpop.f32.mrf.mxu0
      %v1311 = vadd.f32 0.0, %v1310
      %1312 = vmatmul.f32.gmra.mxu0 %v904
      %v1313 = vpop.f32.mrf.mxu0
      %v1314 = vadd.f32 0.0, %v1313
      %1315 = vmatmul.f32.gmra.mxu0 %v906
      %v1316 = vpop.f32.mrf.mxu0
      %v1317 = vadd.f32 0.0, %v1316
      %1318 = vmatmul.f32.gmra.mxu0 %v908
      %v1319 = vpop.f32.mrf.mxu0
      %v1320 = vadd.f32 0.0, %v1319
      %1321 = vmatmul.f32.gmra.mxu0 %v1279
      %v1322 = vpop.f32.mrf.mxu0
      %v1323 = vadd.f32 0.0, %v1322
      %1324 = vdwg.mxu0
      %v1325 = vadd.f32 %v1266, %v1302
      %v1326 = vadd.f32 %v1267, %v1305
      %v1327 = vadd.f32 %v1268, %v1308
      %v1328 = vadd.f32 %v1269, %v1311
      %v1329 = vadd.f32 %v1270, %v1314
      %v1330 = vadd.f32 %v1271, %v1317
      %v1331 = vadd.f32 %v1272, %v1320
      %v1332 = vadd.f32 %v1273, %v1323
      %v1334 = vsel %vm520, %v765, 0
      %v1337 = vsel %vm849, %v506, 0
      %1339 = vmatpush.msra.mxu0 0.0
      %1340 = vmatpush.msra.mxu0 0.0
      %1341 = vmatpush.msra.mxu0 0.0
      %1342 = vmatpush.msra.mxu0 0.0
      %1343 = vmatpush.msra.mxu0 0.0
      %1344 = vmatpush.msra.mxu0 0.0
      %1345 = vmatpush.msra.mxu0 0.0
      %1346 = vmatpush.msra.mxu0 0.0
      %1347 = vmatpush.msra.mxu0 0.0
      %1348 = vmatpush.msra.mxu0 0.0
      %1349 = vmatpush.msra.mxu0 0.0
      %1350 = vmatpush.msra.mxu0 0.0
      %1351 = vmatpush.msra.mxu0 0.0
      %1352 = vmatpush.msra.mxu0 0.0
      %1353 = vmatpush.msra.mxu0 0.0
      %1354 = vmatpush.msra.mxu0 %v1337
      %1355 = vmatmul.f32.gmra.mxu0 %v829
      %v1356 = vpop.f32.mrf.mxu0
      %v1357 = vadd.f32 0.0, %v1356
      %1358 = vmatmul.f32.gmra.mxu0 %v832
      %v1359 = vpop.f32.mrf.mxu0
      %v1360 = vadd.f32 0.0, %v1359
      %1361 = vmatmul.f32.gmra.mxu0 %v835
      %v1362 = vpop.f32.mrf.mxu0
      %v1363 = vadd.f32 0.0, %v1362
      %1364 = vmatmul.f32.gmra.mxu0 %v838
      %v1365 = vpop.f32.mrf.mxu0
      %v1366 = vadd.f32 0.0, %v1365
      %1367 = vmatmul.f32.gmra.mxu0 %v841
      %v1368 = vpop.f32.mrf.mxu0
      %v1369 = vadd.f32 0.0, %v1368
      %1370 = vmatmul.f32.gmra.mxu0 %v844
      %v1371 = vpop.f32.mrf.mxu0
      %v1372 = vadd.f32 0.0, %v1371
      %1373 = vmatmul.f32.gmra.mxu0 %v847
      %v1374 = vpop.f32.mrf.mxu0
      %v1375 = vadd.f32 0.0, %v1374
      %1376 = vmatmul.f32.gmra.mxu0 %v1334
      %v1377 = vpop.f32.mrf.mxu0
      %v1378 = vadd.f32 0.0, %v1377
      %1379 = vdwg.mxu0
      %v1380 = vadd.f32 %v1325, %v1357
      %v1381 = vadd.f32 %v1326, %v1360
      %v1382 = vadd.f32 %v1327, %v1363
      %v1383 = vadd.f32 %v1328, %v1366
      %v1384 = vadd.f32 %v1329, %v1369
      %v1385 = vadd.f32 %v1330, %v1372
      %v1386 = vadd.f32 %v1331, %v1375
      %v1387 = vadd.f32 %v1332, %v1378
      %v1388 = vsel %vm520, %v783, 0
      %v1391 = vsel %vm849, %v507, 0
      %1393 = vmatpush.msra.mxu0 0.0
      %1394 = vmatpush.msra.mxu0 0.0
      %1395 = vmatpush.msra.mxu0 0.0
      %1396 = vmatpush.msra.mxu0 0.0
      %1397 = vmatpush.msra.mxu0 0.0
      %1398 = vmatpush.msra.mxu0 0.0
      %1399 = vmatpush.msra.mxu0 0.0
      %1400 = vmatpush.msra.mxu0 0.0
      %1401 = vmatpush.msra.mxu0 0.0
      %1402 = vmatpush.msra.mxu0 0.0
      %1403 = vmatpush.msra.mxu0 0.0
      %1404 = vmatpush.msra.mxu0 0.0
      %1405 = vmatpush.msra.mxu0 0.0
      %1406 = vmatpush.msra.mxu0 0.0
      %1407 = vmatpush.msra.mxu0 0.0
      %1408 = vmatpush.msra.mxu0 %v1391
      %1409 = vmatmul.f32.gmra.mxu0 %v956
      %v1410 = vpop.f32.mrf.mxu0
      %v1411 = vadd.f32 0.0, %v1410
      %1412 = vmatmul.f32.gmra.mxu0 %v958
      %v1413 = vpop.f32.mrf.mxu0
      %v1414 = vadd.f32 0.0, %v1413
      %1415 = vmatmul.f32.gmra.mxu0 %v960
      %v1416 = vpop.f32.mrf.mxu0
      %v1417 = vadd.f32 0.0, %v1416
      %1418 = vmatmul.f32.gmra.mxu0 %v962
      %v1419 = vpop.f32.mrf.mxu0
      %v1420 = vadd.f32 0.0, %v1419
      %1421 = vmatmul.f32.gmra.mxu0 %v964
      %v1422 = vpop.f32.mrf.mxu0
      %v1423 = vadd.f32 0.0, %v1422
      %1424 = vmatmul.f32.gmra.mxu0 %v966
      %v1425 = vpop.f32.mrf.mxu0
      %v1426 = vadd.f32 0.0, %v1425
      %1427 = vmatmul.f32.gmra.mxu0 %v968
      %v1428 = vpop.f32.mrf.mxu0
      %v1429 = vadd.f32 0.0, %v1428
      %1430 = vmatmul.f32.gmra.mxu0 %v1388
      %v1431 = vpop.f32.mrf.mxu0
      %v1432 = vadd.f32 0.0, %v1431
      %1433 = vdwg.mxu0
      %v1434 = vadd.f32 %v1380, %v1411
      %v1435 = vadd.f32 %v1381, %v1414
      %v1436 = vadd.f32 %v1382, %v1417
      %v1437 = vadd.f32 %v1383, %v1420
      %v1438 = vadd.f32 %v1384, %v1423
      %v1439 = vadd.f32 %v1385, %v1426
      %v1440 = vadd.f32 %v1386, %v1429
      %v1441 = vadd.f32 %v1387, %v1432
      %v1443 = vperm.slane %v508, 0
      %v1445 = vmul.f32 %v1434, %v1443
      %v1446 = vmul.f32 %v1435, %v1443
      %v1447 = vmul.f32 %v1436, %v1443
      %v1448 = vmul.f32 %v1437, %v1443
      %v1449 = vmul.f32 %v1438, %v1443
      %v1450 = vmul.f32 %v1439, %v1443
      %v1451 = vmul.f32 %v1440, %v1443
      %v1452 = vmul.f32 %v1441, %v1443
      %v1454 = vperm.slane %v509, 0
      %v1456 = vadd.f32 %v1445, %v1454
      %v1457 = vadd.f32 %v1446, %v1454
      %v1458 = vadd.f32 %v1447, %v1454
      %v1459 = vadd.f32 %v1448, %v1454
      %v1460 = vadd.f32 %v1449, %v1454
      %v1461 = vadd.f32 %v1450, %v1454
      %v1462 = vadd.f32 %v1451, %v1454
      %v1463 = vadd.f32 %v1452, %v1454
      %v1464 = vmax.f32 %v1456, 0.0
      %v1465 = vmax.f32 %v1457, 0.0
      %v1466 = vmax.f32 %v1458, 0.0
      %v1467 = vmax.f32 %v1459, 0.0
      %v1468 = vmax.f32 %v1460, 0.0
      %v1469 = vmax.f32 %v1461, 0.0
      %v1470 = vmax.f32 %v1462, 0.0
      %v1471 = vmax.f32 %v1463, 0.0
      %s1472 = scalar_lea.vmem [#allocation3], 24
      %1473 = vst.msk [vmem:[%s1472 + $0x8] sm:$0xff] %vm468, %v1464
      %1474 = vst.msk [vmem:[%s1472 + $0x20] sm:$0xff] %vm468, %v1465
      %1475 = vst.msk [vmem:[%s1472 + $0x38] sm:$0xff] %vm468, %v1466
      %1476 = vst.msk [vmem:[%s1472 + $0x50] sm:$0xff] %vm468, %v1467
      %1477 = vst.msk [vmem:[%s1472 + $0x68] sm:$0xff] %vm468, %v1468
      %1478 = vst.msk [vmem:[%s1472 + $0x80] sm:$0xff] %vm468, %v1469
      %1479 = vst.msk [vmem:[%s1472 + $0x98] sm:$0xff] %vm468, %v1470
      %1480 = vst.msk [vmem:[%s1472 + $0xb0] sm:$0xff] %vm468, %v1471
      %v1481 = vld [vmem:[#allocation3] sm:$0xff]
      %v1482 = vld [vmem:[#allocation3 + $0x8] sm:$0xff]
      %v1483 = vld [vmem:[#allocation3 + $0x10] sm:$0x1]
      %v1484 = vld [vmem:[#allocation3 + $0x18] sm:$0xff]
      %v1485 = vld [vmem:[#allocation3 + $0x20] sm:$0xff]
      %v1486 = vld [vmem:[#allocation3 + $0x28] sm:$0x1]
      %v1487 = vld [vmem:[#allocation3 + $0x30] sm:$0xff]
      %v1488 = vld [vmem:[#allocation3 + $0x38] sm:$0xff]
      %v1489 = vld [vmem:[#allocation3 + $0x40] sm:$0x1]
      %v1490 = vld [vmem:[#allocation3 + $0x48] sm:$0xff]
      %v1491 = vld [vmem:[#allocation3 + $0x50] sm:$0xff]
      %v1492 = vld [vmem:[#allocation3 + $0x58] sm:$0x1]
      %v1493 = vld [vmem:[#allocation3 + $0x60] sm:$0xff]
      %v1494 = vld [vmem:[#allocation3 + $0x68] sm:$0xff]
      %v1495 = vld [vmem:[#allocation3 + $0x70] sm:$0x1]
      %v1496 = vld [vmem:[#allocation3 + $0x78] sm:$0xff]
      %v1497 = vld [vmem:[#allocation3 + $0x80] sm:$0xff]
      %v1498 = vld [vmem:[#allocation3 + $0x88] sm:$0x1]
      %v1499 = vld [vmem:[#allocation3 + $0x90] sm:$0xff]
      %v1500 = vld [vmem:[#allocation3 + $0x98] sm:$0xff]
      %v1501 = vld [vmem:[#allocation3 + $0xa0] sm:$0x1]
      %v1502 = vld [vmem:[#allocation3 + $0xa8] sm:$0xff]
      %v1503 = vld [vmem:[#allocation3 + $0xb0] sm:$0xff]
      %v1504 = vld [vmem:[#allocation3 + $0xb8] sm:$0x1]
      %v1505 = vld [vmem:[#allocation3 + $0xc0] sm:$0xff]
      %v1506 = vld [vmem:[#allocation3 + $0xc8] sm:$0xff]
      %v1507 = vld [vmem:[#allocation3 + $0xd0] sm:$0x1]
      %v1508 = vld [vmem:[#allocation3 + $0xd8] sm:$0xff]
      %v1509 = vld [vmem:[#allocation3 + $0xe0] sm:$0xff]
      %v1510 = vld [vmem:[#allocation3 + $0xe8] sm:$0x1]
      %v1527 = vrot.slane %v1481, 7
      %v1528 = vrot.slane %v1482, 7
      %v1529 = vsel %vm800, %v1527, %v1528
      %v1530 = vrot.slane %v1484, 7
      %v1531 = vrot.slane %v1485, 7
      %v1532 = vsel %vm800, %v1530, %v1531
      %v1533 = vrot.slane %v1487, 7
      %v1534 = vrot.slane %v1488, 7
      %v1535 = vsel %vm800, %v1533, %v1534
      %v1536 = vrot.slane %v1490, 7
      %v1537 = vrot.slane %v1491, 7
      %v1538 = vsel %vm800, %v1536, %v1537
      %v1539 = vrot.slane %v1493, 7
      %v1540 = vrot.slane %v1494, 7
      %v1541 = vsel %vm800, %v1539, %v1540
      %v1542 = vrot.slane %v1496, 7
      %v1543 = vrot.slane %v1497, 7
      %v1544 = vsel %vm800, %v1542, %v1543
      %v1545 = vrot.slane %v1499, 7
      %v1546 = vrot.slane %v1500, 7
      %v1547 = vsel %vm800, %v1545, %v1546
      %v1548 = vrot.slane %v1502, 7
      %v1549 = vrot.slane %v1503, 7
      %v1550 = vsel %vm800, %v1548, %v1549
      %v1551 = vsel %vm468, %v1482, 0
      %v1553 = vsel %vm468, %v1485, 0
      %v1555 = vsel %vm468, %v1488, 0
      %v1557 = vsel %vm468, %v1491, 0
      %v1559 = vsel %vm468, %v1494, 0
      %v1561 = vsel %vm468, %v1497, 0
      %v1563 = vsel %vm468, %v1500, 0
      %v1565 = vsel %vm468, %v1503, 0
      %1567 = vmatpush.msra.mxu0 0.0
      %1568 = vmatpush.msra.mxu0 0.0
      %1569 = vmatpush.msra.mxu0 0.0
      %1570 = vmatpush.msra.mxu0 0.0
      %1571 = vmatpush.msra.mxu0 0.0
      %1572 = vmatpush.msra.mxu0 0.0
      %1573 = vmatpush.msra.mxu0 0.0
      %1574 = vmatpush.msra.mxu0 0.0
      %1575 = vmatpush.msra.mxu0 0.0
      %1576 = vmatpush.msra.mxu0 0.0
      %1577 = vmatpush.msra.mxu0 0.0
      %1578 = vmatpush.msra.mxu0 0.0
      %1579 = vmatpush.msra.mxu0 0.0
      %1580 = vmatpush.msra.mxu0 0.0
      %1581 = vmatpush.msra.mxu0 0.0
      %1582 = vmatpush.msra.mxu0 %v511
      %1583 = vmatmul.f32.gmra.mxu0 %v1551
      %v1584 = vpop.f32.mrf.mxu0
      %v1585 = vadd.f32 0.0, %v1584
      %1586 = vmatmul.f32.gmra.mxu0 %v1553
      %v1587 = vpop.f32.mrf.mxu0
      %v1588 = vadd.f32 0.0, %v1587
      %1589 = vmatmul.f32.gmra.mxu0 %v1555
      %v1590 = vpop.f32.mrf.mxu0
      %v1591 = vadd.f32 0.0, %v1590
      %1592 = vmatmul.f32.gmra.mxu0 %v1557
      %v1593 = vpop.f32.mrf.mxu0
      %v1594 = vadd.f32 0.0, %v1593
      %1595 = vmatmul.f32.gmra.mxu0 %v1559
      %v1596 = vpop.f32.mrf.mxu0
      %v1597 = vadd.f32 0.0, %v1596
      %1598 = vmatmul.f32.gmra.mxu0 %v1561
      %v1599 = vpop.f32.mrf.mxu0
      %v1600 = vadd.f32 0.0, %v1599
      %1601 = vmatmul.f32.gmra.mxu0 %v1563
      %v1602 = vpop.f32.mrf.mxu0
      %v1603 = vadd.f32 0.0, %v1602
      %1604 = vmatmul.f32.gmra.mxu0 %v1565
      %v1605 = vpop.f32.mrf.mxu0
      %v1606 = vadd.f32 0.0, %v1605
      %1607 = vdwg.mxu0
      %v1608 = vsel %vm468, %v1529, 0
      %v1610 = vsel %vm468, %v1532, 0
      %v1612 = vsel %vm468, %v1535, 0
      %v1614 = vsel %vm468, %v1538, 0
      %v1616 = vsel %vm468, %v1541, 0
      %v1618 = vsel %vm468, %v1544, 0
      %v1620 = vsel %vm468, %v1547, 0
      %v1622 = vsel %vm468, %v1550, 0
      %1624 = vmatpush.msra.mxu0 0.0
      %1625 = vmatpush.msra.mxu0 0.0
      %1626 = vmatpush.msra.mxu0 0.0
      %1627 = vmatpush.msra.mxu0 0.0
      %1628 = vmatpush.msra.mxu0 0.0
      %1629 = vmatpush.msra.mxu0 0.0
      %1630 = vmatpush.msra.mxu0 0.0
      %1631 = vmatpush.msra.mxu0 0.0
      %1632 = vmatpush.msra.mxu0 0.0
      %1633 = vmatpush.msra.mxu0 0.0
      %1634 = vmatpush.msra.mxu0 0.0
      %1635 = vmatpush.msra.mxu0 0.0
      %1636 = vmatpush.msra.mxu0 0.0
      %1637 = vmatpush.msra.mxu0 0.0
      %1638 = vmatpush.msra.mxu0 0.0
      %1639 = vmatpush.msra.mxu0 %v510
      %1640 = vmatmul.f32.gmra.mxu0 %v1608
      %v1641 = vpop.f32.mrf.mxu0
      %v1642 = vadd.f32 %v1585, %v1641
      %1643 = vmatmul.f32.gmra.mxu0 %v1610
      %v1644 = vpop.f32.mrf.mxu0
      %v1645 = vadd.f32 %v1588, %v1644
      %1646 = vmatmul.f32.gmra.mxu0 %v1612
      %v1647 = vpop.f32.mrf.mxu0
      %v1648 = vadd.f32 %v1591, %v1647
      %1649 = vmatmul.f32.gmra.mxu0 %v1614
      %v1650 = vpop.f32.mrf.mxu0
      %v1651 = vadd.f32 %v1594, %v1650
      %1652 = vmatmul.f32.gmra.mxu0 %v1616
      %v1653 = vpop.f32.mrf.mxu0
      %v1654 = vadd.f32 %v1597, %v1653
      %1655 = vmatmul.f32.gmra.mxu0 %v1618
      %v1656 = vpop.f32.mrf.mxu0
      %v1657 = vadd.f32 %v1600, %v1656
      %1658 = vmatmul.f32.gmra.mxu0 %v1620
      %v1659 = vpop.f32.mrf.mxu0
      %v1660 = vadd.f32 %v1603, %v1659
      %1661 = vmatmul.f32.gmra.mxu0 %v1622
      %v1662 = vpop.f32.mrf.mxu0
      %v1663 = vadd.f32 %v1606, %v1662
      %1664 = vdwg.mxu0
      %vm1673 = vcmask 1046528
      %v1674 = vrot.slane %v1482, 1
      %v1675 = vrot.slane %v1483, 1
      %v1676 = vsel %vm1673, %v1674, %v1675
      %v1677 = vrot.slane %v1485, 1
      %v1678 = vrot.slane %v1486, 1
      %v1679 = vsel %vm1673, %v1677, %v1678
      %v1680 = vrot.slane %v1488, 1
      %v1681 = vrot.slane %v1489, 1
      %v1682 = vsel %vm1673, %v1680, %v1681
      %v1683 = vrot.slane %v1491, 1
      %v1684 = vrot.slane %v1492, 1
      %v1685 = vsel %vm1673, %v1683, %v1684
      %v1686 = vrot.slane %v1494, 1
      %v1687 = vrot.slane %v1495, 1
      %v1688 = vsel %vm1673, %v1686, %v1687
      %v1689 = vrot.slane %v1497, 1
      %v1690 = vrot.slane %v1498, 1
      %v1691 = vsel %vm1673, %v1689, %v1690
      %v1692 = vrot.slane %v1500, 1
      %v1693 = vrot.slane %v1501, 1
      %v1694 = vsel %vm1673, %v1692, %v1693
      %v1695 = vrot.slane %v1503, 1
      %v1696 = vrot.slane %v1504, 1
      %v1697 = vsel %vm1673, %v1695, %v1696
      %v1698 = vsel %vm468, %v1676, 0
      %v1700 = vsel %vm468, %v1679, 0
      %v1702 = vsel %vm468, %v1682, 0
      %v1704 = vsel %vm468, %v1685, 0
      %v1706 = vsel %vm468, %v1688, 0
      %v1708 = vsel %vm468, %v1691, 0
      %v1710 = vsel %vm468, %v1694, 0
      %v1712 = vsel %vm468, %v1697, 0
      %1714 = vmatpush.msra.mxu0 0.0
      %1715 = vmatpush.msra.mxu0 0.0
      %1716 = vmatpush.msra.mxu0 0.0
      %1717 = vmatpush.msra.mxu0 0.0
      %1718 = vmatpush.msra.mxu0 0.0
      %1719 = vmatpush.msra.mxu0 0.0
      %1720 = vmatpush.msra.mxu0 0.0
      %1721 = vmatpush.msra.mxu0 0.0
      %1722 = vmatpush.msra.mxu0 0.0
      %1723 = vmatpush.msra.mxu0 0.0
      %1724 = vmatpush.msra.mxu0 0.0
      %1725 = vmatpush.msra.mxu0 0.0
      %1726 = vmatpush.msra.mxu0 0.0
      %1727 = vmatpush.msra.mxu0 0.0
      %1728 = vmatpush.msra.mxu0 0.0
      %1729 = vmatpush.msra.mxu0 %v512
      %1730 = vmatmul.f32.gmra.mxu0 %v1698
      %v1731 = vpop.f32.mrf.mxu0
      %v1732 = vadd.f32 0.0, %v1731
      %1733 = vmatmul.f32.gmra.mxu0 %v1700
      %v1734 = vpop.f32.mrf.mxu0
      %v1735 = vadd.f32 0.0, %v1734
      %1736 = vmatmul.f32.gmra.mxu0 %v1702
      %v1737 = vpop.f32.mrf.mxu0
      %v1738 = vadd.f32 0.0, %v1737
      %1739 = vmatmul.f32.gmra.mxu0 %v1704
      %v1740 = vpop.f32.mrf.mxu0
      %v1741 = vadd.f32 0.0, %v1740
      %1742 = vmatmul.f32.gmra.mxu0 %v1706
      %v1743 = vpop.f32.mrf.mxu0
      %v1744 = vadd.f32 0.0, %v1743
      %1745 = vmatmul.f32.gmra.mxu0 %v1708
      %v1746 = vpop.f32.mrf.mxu0
      %v1747 = vadd.f32 0.0, %v1746
      %1748 = vmatmul.f32.gmra.mxu0 %v1710
      %v1749 = vpop.f32.mrf.mxu0
      %v1750 = vadd.f32 0.0, %v1749
      %1751 = vmatmul.f32.gmra.mxu0 %v1712
      %v1752 = vpop.f32.mrf.mxu0
      %v1753 = vadd.f32 0.0, %v1752
      %1754 = vdwg.mxu0
      %v1755 = vadd.f32 %v1642, %v1732
      %v1756 = vadd.f32 %v1645, %v1735
      %v1757 = vadd.f32 %v1648, %v1738
      %v1758 = vadd.f32 %v1651, %v1741
      %v1759 = vadd.f32 %v1654, %v1744
      %v1760 = vadd.f32 %v1657, %v1747
      %v1761 = vadd.f32 %v1660, %v1750
      %v1762 = vadd.f32 %v1663, %v1753
      %v1765 = vrot.slane %v1505, 7
      %v1766 = vrot.slane %v1506, 7
      %v1767 = vsel %vm800, %v1765, %v1766
      %v1768 = vsel %vm468, %v1767, 0
      %1770 = vmatpush.msra.mxu0 0.0
      %1771 = vmatpush.msra.mxu0 0.0
      %1772 = vmatpush.msra.mxu0 0.0
      %1773 = vmatpush.msra.mxu0 0.0
      %1774 = vmatpush.msra.mxu0 0.0
      %1775 = vmatpush.msra.mxu0 0.0
      %1776 = vmatpush.msra.mxu0 0.0
      %1777 = vmatpush.msra.mxu0 0.0
      %1778 = vmatpush.msra.mxu0 0.0
      %1779 = vmatpush.msra.mxu0 0.0
      %1780 = vmatpush.msra.mxu0 0.0
      %1781 = vmatpush.msra.mxu0 0.0
      %1782 = vmatpush.msra.mxu0 0.0
      %1783 = vmatpush.msra.mxu0 0.0
      %1784 = vmatpush.msra.mxu0 0.0
      %1785 = vmatpush.msra.mxu0 %v513
      %1786 = vmatmul.f32.gmra.mxu0 %v1610
      %v1787 = vpop.f32.mrf.mxu0
      %v1788 = vadd.f32 0.0, %v1787
      %1789 = vmatmul.f32.gmra.mxu0 %v1612
      %v1790 = vpop.f32.mrf.mxu0
      %v1791 = vadd.f32 0.0, %v1790
      %1792 = vmatmul.f32.gmra.mxu0 %v1614
      %v1793 = vpop.f32.mrf.mxu0
      %v1794 = vadd.f32 0.0, %v1793
      %1795 = vmatmul.f32.gmra.mxu0 %v1616
      %v1796 = vpop.f32.mrf.mxu0
      %v1797 = vadd.f32 0.0, %v1796
      %1798 = vmatmul.f32.gmra.mxu0 %v1618
      %v1799 = vpop.f32.mrf.mxu0
      %v1800 = vadd.f32 0.0, %v1799
      %1801 = vmatmul.f32.gmra.mxu0 %v1620
      %v1802 = vpop.f32.mrf.mxu0
      %v1803 = vadd.f32 0.0, %v1802
      %1804 = vmatmul.f32.gmra.mxu0 %v1622
      %v1805 = vpop.f32.mrf.mxu0
      %v1806 = vadd.f32 0.0, %v1805
      %1807 = vmatmul.f32.gmra.mxu0 %v1768
      %v1808 = vpop.f32.mrf.mxu0
      %v1809 = vadd.f32 0.0, %v1808
      %1810 = vdwg.mxu0
      %v1811 = vadd.f32 %v1755, %v1788
      %v1812 = vadd.f32 %v1756, %v1791
      %v1813 = vadd.f32 %v1757, %v1794
      %v1814 = vadd.f32 %v1758, %v1797
      %v1815 = vadd.f32 %v1759, %v1800
      %v1816 = vadd.f32 %v1760, %v1803
      %v1817 = vadd.f32 %v1761, %v1806
      %v1818 = vadd.f32 %v1762, %v1809
      %v1819 = vsel %vm468, %v1506, 0
      %1821 = vmatpush.msra.mxu0 0.0
      %1822 = vmatpush.msra.mxu0 0.0
      %1823 = vmatpush.msra.mxu0 0.0
      %1824 = vmatpush.msra.mxu0 0.0
      %1825 = vmatpush.msra.mxu0 0.0
      %1826 = vmatpush.msra.mxu0 0.0
      %1827 = vmatpush.msra.mxu0 0.0
      %1828 = vmatpush.msra.mxu0 0.0
      %1829 = vmatpush.msra.mxu0 0.0
      %1830 = vmatpush.msra.mxu0 0.0
      %1831 = vmatpush.msra.mxu0 0.0
      %1832 = vmatpush.msra.mxu0 0.0
      %1833 = vmatpush.msra.mxu0 0.0
      %1834 = vmatpush.msra.mxu0 0.0
      %1835 = vmatpush.msra.mxu0 0.0
      %1836 = vmatpush.msra.mxu0 %v514
      %1837 = vmatmul.f32.gmra.mxu0 %v1553
      %v1838 = vpop.f32.mrf.mxu0
      %v1839 = vadd.f32 0.0, %v1838
      %1840 = vmatmul.f32.gmra.mxu0 %v1555
      %v1841 = vpop.f32.mrf.mxu0
      %v1842 = vadd.f32 0.0, %v1841
      %1843 = vmatmul.f32.gmra.mxu0 %v1557
      %v1844 = vpop.f32.mrf.mxu0
      %v1845 = vadd.f32 0.0, %v1844
      %1846 = vmatmul.f32.gmra.mxu0 %v1559
      %v1847 = vpop.f32.mrf.mxu0
      %v1848 = vadd.f32 0.0, %v1847
      %1849 = vmatmul.f32.gmra.mxu0 %v1561
      %v1850 = vpop.f32.mrf.mxu0
      %v1851 = vadd.f32 0.0, %v1850
      %1852 = vmatmul.f32.gmra.mxu0 %v1563
      %v1853 = vpop.f32.mrf.mxu0
      %v1854 = vadd.f32 0.0, %v1853
      %1855 = vmatmul.f32.gmra.mxu0 %v1565
      %v1856 = vpop.f32.mrf.mxu0
      %v1857 = vadd.f32 0.0, %v1856
      %1858 = vmatmul.f32.gmra.mxu0 %v1819
      %v1859 = vpop.f32.mrf.mxu0
      %v1860 = vadd.f32 0.0, %v1859
      %1861 = vdwg.mxu0
      %v1862 = vadd.f32 %v1811, %v1839
      %v1863 = vadd.f32 %v1812, %v1842
      %v1864 = vadd.f32 %v1813, %v1845
      %v1865 = vadd.f32 %v1814, %v1848
      %v1866 = vadd.f32 %v1815, %v1851
      %v1867 = vadd.f32 %v1816, %v1854
      %v1868 = vadd.f32 %v1817, %v1857
      %v1869 = vadd.f32 %v1818, %v1860
      %v1871 = vrot.slane %v1506, 1
      %v1872 = vrot.slane %v1507, 1
      %v1873 = vsel %vm1673, %v1871, %v1872
      %v1874 = vsel %vm468, %v1873, 0
      %1876 = vmatpush.msra.mxu0 0.0
      %1877 = vmatpush.msra.mxu0 0.0
      %1878 = vmatpush.msra.mxu0 0.0
      %1879 = vmatpush.msra.mxu0 0.0
      %1880 = vmatpush.msra.mxu0 0.0
      %1881 = vmatpush.msra.mxu0 0.0
      %1882 = vmatpush.msra.mxu0 0.0
      %1883 = vmatpush.msra.mxu0 0.0
      %1884 = vmatpush.msra.mxu0 0.0
      %1885 = vmatpush.msra.mxu0 0.0
      %1886 = vmatpush.msra.mxu0 0.0
      %1887 = vmatpush.msra.mxu0 0.0
      %1888 = vmatpush.msra.mxu0 0.0
      %1889 = vmatpush.msra.mxu0 0.0
      %1890 = vmatpush.msra.mxu0 0.0
      %1891 = vmatpush.msra.mxu0 %v515
      %1892 = vmatmul.f32.gmra.mxu0 %v1700
      %v1893 = vpop.f32.mrf.mxu0
      %v1894 = vadd.f32 0.0, %v1893
      %1895 = vmatmul.f32.gmra.mxu0 %v1702
      %v1896 = vpop.f32.mrf.mxu0
      %v1897 = vadd.f32 0.0, %v1896
      %1898 = vmatmul.f32.gmra.mxu0 %v1704
      %v1899 = vpop.f32.mrf.mxu0
      %v1900 = vadd.f32 0.0, %v1899
      %1901 = vmatmul.f32.gmra.mxu0 %v1706
      %v1902 = vpop.f32.mrf.mxu0
      %v1903 = vadd.f32 0.0, %v1902
      %1904 = vmatmul.f32.gmra.mxu0 %v1708
      %v1905 = vpop.f32.mrf.mxu0
      %v1906 = vadd.f32 0.0, %v1905
      %1907 = vmatmul.f32.gmra.mxu0 %v1710
      %v1908 = vpop.f32.mrf.mxu0
      %v1909 = vadd.f32 0.0, %v1908
      %1910 = vmatmul.f32.gmra.mxu0 %v1712
      %v1911 = vpop.f32.mrf.mxu0
      %v1912 = vadd.f32 0.0, %v1911
      %1913 = vmatmul.f32.gmra.mxu0 %v1874
      %v1914 = vpop.f32.mrf.mxu0
      %v1915 = vadd.f32 0.0, %v1914
      %1916 = vdwg.mxu0
      %v1917 = vadd.f32 %v1862, %v1894
      %v1918 = vadd.f32 %v1863, %v1897
      %v1919 = vadd.f32 %v1864, %v1900
      %v1920 = vadd.f32 %v1865, %v1903
      %v1921 = vadd.f32 %v1866, %v1906
      %v1922 = vadd.f32 %v1867, %v1909
      %v1923 = vadd.f32 %v1868, %v1912
      %v1924 = vadd.f32 %v1869, %v1915
      %v1927 = vrot.slane %v1508, 7
      %v1928 = vrot.slane %v1509, 7
      %v1929 = vsel %vm800, %v1927, %v1928
      %v1930 = vsel %vm468, %v1929, 0
      %1932 = vmatpush.msra.mxu0 0.0
      %1933 = vmatpush.msra.mxu0 0.0
      %1934 = vmatpush.msra.mxu0 0.0
      %1935 = vmatpush.msra.mxu0 0.0
      %1936 = vmatpush.msra.mxu0 0.0
      %1937 = vmatpush.msra.mxu0 0.0
      %1938 = vmatpush.msra.mxu0 0.0
      %1939 = vmatpush.msra.mxu0 0.0
      %1940 = vmatpush.msra.mxu0 0.0
      %1941 = vmatpush.msra.mxu0 0.0
      %1942 = vmatpush.msra.mxu0 0.0
      %1943 = vmatpush.msra.mxu0 0.0
      %1944 = vmatpush.msra.mxu0 0.0
      %1945 = vmatpush.msra.mxu0 0.0
      %1946 = vmatpush.msra.mxu0 0.0
      %1947 = vmatpush.msra.mxu0 %v516
      %1948 = vmatmul.f32.gmra.mxu0 %v1612
      %v1949 = vpop.f32.mrf.mxu0
      %v1950 = vadd.f32 0.0, %v1949
      %1951 = vmatmul.f32.gmra.mxu0 %v1614
      %v1952 = vpop.f32.mrf.mxu0
      %v1953 = vadd.f32 0.0, %v1952
      %1954 = vmatmul.f32.gmra.mxu0 %v1616
      %v1955 = vpop.f32.mrf.mxu0
      %v1956 = vadd.f32 0.0, %v1955
      %1957 = vmatmul.f32.gmra.mxu0 %v1618
      %v1958 = vpop.f32.mrf.mxu0
      %v1959 = vadd.f32 0.0, %v1958
      %1960 = vmatmul.f32.gmra.mxu0 %v1620
      %v1961 = vpop.f32.mrf.mxu0
      %v1962 = vadd.f32 0.0, %v1961
      %1963 = vmatmul.f32.gmra.mxu0 %v1622
      %v1964 = vpop.f32.mrf.mxu0
      %v1965 = vadd.f32 0.0, %v1964
      %1966 = vmatmul.f32.gmra.mxu0 %v1768
      %v1967 = vpop.f32.mrf.mxu0
      %v1968 = vadd.f32 0.0, %v1967
      %1969 = vmatmul.f32.gmra.mxu0 %v1930
      %v1970 = vpop.f32.mrf.mxu0
      %v1971 = vadd.f32 0.0, %v1970
      %1972 = vdwg.mxu0
      %v1973 = vadd.f32 %v1917, %v1950
      %v1974 = vadd.f32 %v1918, %v1953
      %v1975 = vadd.f32 %v1919, %v1956
      %v1976 = vadd.f32 %v1920, %v1959
      %v1977 = vadd.f32 %v1921, %v1962
      %v1978 = vadd.f32 %v1922, %v1965
      %v1979 = vadd.f32 %v1923, %v1968
      %v1980 = vadd.f32 %v1924, %v1971
      %v1981 = vsel %vm468, %v1509, 0
      %1983 = vmatpush.msra.mxu0 0.0
      %1984 = vmatpush.msra.mxu0 0.0
      %1985 = vmatpush.msra.mxu0 0.0
      %1986 = vmatpush.msra.mxu0 0.0
      %1987 = vmatpush.msra.mxu0 0.0
      %1988 = vmatpush.msra.mxu0 0.0
      %1989 = vmatpush.msra.mxu0 0.0
      %1990 = vmatpush.msra.mxu0 0.0
      %1991 = vmatpush.msra.mxu0 0.0
      %1992 = vmatpush.msra.mxu0 0.0
      %1993 = vmatpush.msra.mxu0 0.0
      %1994 = vmatpush.msra.mxu0 0.0
      %1995 = vmatpush.msra.mxu0 0.0
      %1996 = vmatpush.msra.mxu0 0.0
      %1997 = vmatpush.msra.mxu0 0.0
      %1998 = vmatpush.msra.mxu0 %v517
      %1999 = vmatmul.f32.gmra.mxu0 %v1555
      %v2000 = vpop.f32.mrf.mxu0
      %v2001 = vadd.f32 0.0, %v2000
      %2002 = vmatmul.f32.gmra.mxu0 %v1557
      %v2003 = vpop.f32.mrf.mxu0
      %v2004 = vadd.f32 0.0, %v2003
      %2005 = vmatmul.f32.gmra.mxu0 %v1559
      %v2006 = vpop.f32.mrf.mxu0
      %v2007 = vadd.f32 0.0, %v2006
      %2008 = vmatmul.f32.gmra.mxu0 %v1561
      %v2009 = vpop.f32.mrf.mxu0
      %v2010 = vadd.f32 0.0, %v2009
      %2011 = vmatmul.f32.gmra.mxu0 %v1563
      %v2012 = vpop.f32.mrf.mxu0
      %v2013 = vadd.f32 0.0, %v2012
      %2014 = vmatmul.f32.gmra.mxu0 %v1565
      %v2015 = vpop.f32.mrf.mxu0
      %v2016 = vadd.f32 0.0, %v2015
      %2017 = vmatmul.f32.gmra.mxu0 %v1819
      %v2018 = vpop.f32.mrf.mxu0
      %v2019 = vadd.f32 0.0, %v2018
      %2020 = vmatmul.f32.gmra.mxu0 %v1981
      %v2021 = vpop.f32.mrf.mxu0
      %v2022 = vadd.f32 0.0, %v2021
      %2023 = vdwg.mxu0
      %v2024 = vadd.f32 %v1973, %v2001
      %v2025 = vadd.f32 %v1974, %v2004
      %v2026 = vadd.f32 %v1975, %v2007
      %v2027 = vadd.f32 %v1976, %v2010
      %v2028 = vadd.f32 %v1977, %v2013
      %v2029 = vadd.f32 %v1978, %v2016
      %v2030 = vadd.f32 %v1979, %v2019
      %v2031 = vadd.f32 %v1980, %v2022
      %v2033 = vrot.slane %v1509, 1
      %v2034 = vrot.slane %v1510, 1
      %v2035 = vsel %vm1673, %v2033, %v2034
      %v2036 = vsel %vm468, %v2035, 0
      %2038 = vmatpush.msra.mxu0 0.0
      %2039 = vmatpush.msra.mxu0 0.0
      %2040 = vmatpush.msra.mxu0 0.0
      %2041 = vmatpush.msra.mxu0 0.0
      %2042 = vmatpush.msra.mxu0 0.0
      %2043 = vmatpush.msra.mxu0 0.0
      %2044 = vmatpush.msra.mxu0 0.0
      %2045 = vmatpush.msra.mxu0 0.0
      %2046 = vmatpush.msra.mxu0 0.0
      %2047 = vmatpush.msra.mxu0 0.0
      %2048 = vmatpush.msra.mxu0 0.0
      %2049 = vmatpush.msra.mxu0 0.0
      %2050 = vmatpush.msra.mxu0 0.0
      %2051 = vmatpush.msra.mxu0 0.0
      %2052 = vmatpush.msra.mxu0 0.0
      %2053 = vmatpush.msra.mxu0 %v518
      %2054 = vmatmul.f32.gmra.mxu0 %v1702
      %v2055 = vpop.f32.mrf.mxu0
      %v2056 = vadd.f32 0.0, %v2055
      %2057 = vmatmul.f32.gmra.mxu0 %v1704
      %v2058 = vpop.f32.mrf.mxu0
      %v2059 = vadd.f32 0.0, %v2058
      %2060 = vmatmul.f32.gmra.mxu0 %v1706
      %v2061 = vpop.f32.mrf.mxu0
      %v2062 = vadd.f32 0.0, %v2061
      %2063 = vmatmul.f32.gmra.mxu0 %v1708
      %v2064 = vpop.f32.mrf.mxu0
      %v2065 = vadd.f32 0.0, %v2064
      %2066 = vmatmul.f32.gmra.mxu0 %v1710
      %v2067 = vpop.f32.mrf.mxu0
      %v2068 = vadd.f32 0.0, %v2067
      %2069 = vmatmul.f32.gmra.mxu0 %v1712
      %v2070 = vpop.f32.mrf.mxu0
      %v2071 = vadd.f32 0.0, %v2070
      %2072 = vmatmul.f32.gmra.mxu0 %v1874
      %v2073 = vpop.f32.mrf.mxu0
      %v2074 = vadd.f32 0.0, %v2073
      %2075 = vmatmul.f32.gmra.mxu0 %v2036
      %v2076 = vpop.f32.mrf.mxu0
      %v2077 = vadd.f32 0.0, %v2076
      %2078 = vdwg.mxu0
      %v2079 = vadd.f32 %v2024, %v2056
      %v2080 = vadd.f32 %v2025, %v2059
      %v2081 = vadd.f32 %v2026, %v2062
      %v2082 = vadd.f32 %v2027, %v2065
      %v2083 = vadd.f32 %v2028, %v2068
      %v2084 = vadd.f32 %v2029, %v2071
      %v2085 = vadd.f32 %v2030, %v2074
      %v2086 = vadd.f32 %v2031, %v2077
      %v2088 = vsel %vm520, %v668, 0
      %v2091 = vsel %vm520, %v669, 0
      %v2094 = vsel %vm520, %v670, 0
      %v2097 = vsel %vm520, %v671, 0
      %v2100 = vsel %vm520, %v672, 0
      %v2103 = vsel %vm520, %v673, 0
      %v2106 = vsel %vm520, %v674, 0
      %v2109 = vsel %vm520, %v675, 0
      %v2112 = vsel %vm849, %v519, 0
      %2114 = vmatpush.msra.mxu0 0.0
      %2115 = vmatpush.msra.mxu0 0.0
      %2116 = vmatpush.msra.mxu0 0.0
      %2117 = vmatpush.msra.mxu0 0.0
      %2118 = vmatpush.msra.mxu0 0.0
      %2119 = vmatpush.msra.mxu0 0.0
      %2120 = vmatpush.msra.mxu0 0.0
      %2121 = vmatpush.msra.mxu0 0.0
      %2122 = vmatpush.msra.mxu0 0.0
      %2123 = vmatpush.msra.mxu0 0.0
      %2124 = vmatpush.msra.mxu0 0.0
      %2125 = vmatpush.msra.mxu0 0.0
      %2126 = vmatpush.msra.mxu0 0.0
      %2127 = vmatpush.msra.mxu0 0.0
      %2128 = vmatpush.msra.mxu0 0.0
      %2129 = vmatpush.msra.mxu0 %v2112
      %2130 = vmatmul.f32.gmra.mxu0 %v2088
      %v2131 = vpop.f32.mrf.mxu0
      %v2132 = vadd.f32 %v2079, %v2131
      %2133 = vmatmul.f32.gmra.mxu0 %v2091
      %v2134 = vpop.f32.mrf.mxu0
      %v2135 = vadd.f32 %v2080, %v2134
      %2136 = vmatmul.f32.gmra.mxu0 %v2094
      %v2137 = vpop.f32.mrf.mxu0
      %v2138 = vadd.f32 %v2081, %v2137
      %2139 = vmatmul.f32.gmra.mxu0 %v2097
      %v2140 = vpop.f32.mrf.mxu0
      %v2141 = vadd.f32 %v2082, %v2140
      %2142 = vmatmul.f32.gmra.mxu0 %v2100
      %v2143 = vpop.f32.mrf.mxu0
      %v2144 = vadd.f32 %v2083, %v2143
      %2145 = vmatmul.f32.gmra.mxu0 %v2103
      %v2146 = vpop.f32.mrf.mxu0
      %v2147 = vadd.f32 %v2084, %v2146
      %2148 = vmatmul.f32.gmra.mxu0 %v2106
      %v2149 = vpop.f32.mrf.mxu0
      %v2150 = vadd.f32 %v2085, %v2149
      %2151 = vmatmul.f32.gmra.mxu0 %v2109
      %v2152 = vpop.f32.mrf.mxu0
      %v2153 = vadd.f32 %v2086, %v2152
      %2154 = vdwg.mxu0
      %v2155 = vld [vmem:[%s8] sm:$0x1]
      %v2156 = vld [vmem:[%s9] sm:$0x1]
      %v2157 = vld [vmem:[%s10] sm:$0xff]
      %v2158 = vld [vmem:[%s10 + $0x8] sm:$0xff]
      %v2159 = vld [vmem:[%s10 + $0x10] sm:$0xff]
      %v2160 = vld [vmem:[%s10 + $0x18] sm:$0xff]
      %v2161 = vld [vmem:[%s10 + $0x20] sm:$0xff]
      %v2162 = vld [vmem:[%s10 + $0x28] sm:$0xff]
      %v2163 = vld [vmem:[%s10 + $0x30] sm:$0xff]
      %v2164 = vld [vmem:[%s10 + $0x38] sm:$0xff]
      %v2165 = vld [vmem:[%s10 + $0x40] sm:$0xff]
      %v2166 = vld [vmem:[%s11] sm:$0x1]
      %v2167 = vld [vmem:[%s12] sm:$0x1]
      %v2168 = vld [vmem:[%s13] sm:$0xff]
      %v2169 = vld [vmem:[%s13 + $0x8] sm:$0xff]
      %v2170 = vld [vmem:[%s13 + $0x10] sm:$0xff]
      %v2171 = vld [vmem:[%s13 + $0x18] sm:$0xff]
      %v2172 = vld [vmem:[%s13 + $0x20] sm:$0xff]
      %v2173 = vld [vmem:[%s13 + $0x28] sm:$0xff]
      %v2174 = vld [vmem:[%s13 + $0x30] sm:$0xff]
      %v2175 = vld [vmem:[%s13 + $0x38] sm:$0xff]
      %v2176 = vld [vmem:[%s13 + $0x40] sm:$0xff]
      %v2178 = vperm.slane %v2155, 0
      %v2180 = vmul.f32 %v2132, %v2178
      %v2181 = vmul.f32 %v2135, %v2178
      %v2182 = vmul.f32 %v2138, %v2178
      %v2183 = vmul.f32 %v2141, %v2178
      %v2184 = vmul.f32 %v2144, %v2178
      %v2185 = vmul.f32 %v2147, %v2178
      %v2186 = vmul.f32 %v2150, %v2178
      %v2187 = vmul.f32 %v2153, %v2178
      %v2189 = vperm.slane %v2156, 0
      %v2191 = vadd.f32 %v2180, %v2189
      %v2192 = vadd.f32 %v2181, %v2189
      %v2193 = vadd.f32 %v2182, %v2189
      %v2194 = vadd.f32 %v2183, %v2189
      %v2195 = vadd.f32 %v2184, %v2189
      %v2196 = vadd.f32 %v2185, %v2189
      %v2197 = vadd.f32 %v2186, %v2189
      %v2198 = vadd.f32 %v2187, %v2189
      %v2199 = vmax.f32 %v2191, 0.0
      %v2200 = vmax.f32 %v2192, 0.0
      %v2201 = vmax.f32 %v2193, 0.0
      %v2202 = vmax.f32 %v2194, 0.0
      %v2203 = vmax.f32 %v2195, 0.0
      %v2204 = vmax.f32 %v2196, 0.0
      %v2205 = vmax.f32 %v2197, 0.0
      %v2206 = vmax.f32 %v2198, 0.0
      %2207 = vst.msk [vmem:[%s1472 + $0x8] sm:$0xff] %vm468, %v2199
      %2208 = vst.msk [vmem:[%s1472 + $0x20] sm:$0xff] %vm468, %v2200
      %2209 = vst.msk [vmem:[%s1472 + $0x38] sm:$0xff] %vm468, %v2201
      %2210 = vst.msk [vmem:[%s1472 + $0x50] sm:$0xff] %vm468, %v2202
      %2211 = vst.msk [vmem:[%s1472 + $0x68] sm:$0xff] %vm468, %v2203
      %2212 = vst.msk [vmem:[%s1472 + $0x80] sm:$0xff] %vm468, %v2204
      %2213 = vst.msk [vmem:[%s1472 + $0x98] sm:$0xff] %vm468, %v2205
      %2214 = vst.msk [vmem:[%s1472 + $0xb0] sm:$0xff] %vm468, %v2206
      %v2215 = vld [vmem:[#allocation3] sm:$0xff]
      %v2216 = vld [vmem:[#allocation3 + $0x8] sm:$0xff]
      %v2217 = vld [vmem:[#allocation3 + $0x10] sm:$0x1]
      %v2218 = vld [vmem:[#allocation3 + $0x18] sm:$0xff]
      %v2219 = vld [vmem:[#allocation3 + $0x20] sm:$0xff]
      %v2220 = vld [vmem:[#allocation3 + $0x28] sm:$0x1]
      %v2221 = vld [vmem:[#allocation3 + $0x30] sm:$0xff]
      %v2222 = vld [vmem:[#allocation3 + $0x38] sm:$0xff]
      %v2223 = vld [vmem:[#allocation3 + $0x40] sm:$0x1]
      %v2224 = vld [vmem:[#allocation3 + $0x48] sm:$0xff]
      %v2225 = vld [vmem:[#allocation3 + $0x50] sm:$0xff]
      %v2226 = vld [vmem:[#allocation3 + $0x58] sm:$0x1]
      %v2227 = vld [vmem:[#allocation3 + $0x60] sm:$0xff]
      %v2228 = vld [vmem:[#allocation3 + $0x68] sm:$0xff]
      %v2229 = vld [vmem:[#allocation3 + $0x70] sm:$0x1]
      %v2230 = vld [vmem:[#allocation3 + $0x78] sm:$0xff]
      %v2231 = vld [vmem:[#allocation3 + $0x80] sm:$0xff]
      %v2232 = vld [vmem:[#allocation3 + $0x88] sm:$0x1]
      %v2233 = vld [vmem:[#allocation3 + $0x90] sm:$0xff]
      %v2234 = vld [vmem:[#allocation3 + $0x98] sm:$0xff]
      %v2235 = vld [vmem:[#allocation3 + $0xa0] sm:$0x1]
      %v2236 = vld [vmem:[#allocation3 + $0xa8] sm:$0xff]
      %v2237 = vld [vmem:[#allocation3 + $0xb0] sm:$0xff]
      %v2238 = vld [vmem:[#allocation3 + $0xb8] sm:$0x1]
      %v2239 = vld [vmem:[#allocation3 + $0xc0] sm:$0xff]
      %v2240 = vld [vmem:[#allocation3 + $0xc8] sm:$0xff]
      %v2241 = vld [vmem:[#allocation3 + $0xd0] sm:$0x1]
      %v2242 = vld [vmem:[#allocation3 + $0xd8] sm:$0xff]
      %v2243 = vld [vmem:[#allocation3 + $0xe0] sm:$0xff]
      %v2244 = vld [vmem:[#allocation3 + $0xe8] sm:$0x1]
      %v2261 = vrot.slane %v2215, 7
      %v2262 = vrot.slane %v2216, 7
      %v2263 = vsel %vm800, %v2261, %v2262
      %v2264 = vrot.slane %v2218, 7
      %v2265 = vrot.slane %v2219, 7
      %v2266 = vsel %vm800, %v2264, %v2265
      %v2267 = vrot.slane %v2221, 7
      %v2268 = vrot.slane %v2222, 7
      %v2269 = vsel %vm800, %v2267, %v2268
      %v2270 = vrot.slane %v2224, 7
      %v2271 = vrot.slane %v2225, 7
      %v2272 = vsel %vm800, %v2270, %v2271
      %v2273 = vrot.slane %v2227, 7
      %v2274 = vrot.slane %v2228, 7
      %v2275 = vsel %vm800, %v2273, %v2274
      %v2276 = vrot.slane %v2230, 7
      %v2277 = vrot.slane %v2231, 7
      %v2278 = vsel %vm800, %v2276, %v2277
      %v2279 = vrot.slane %v2233, 7
      %v2280 = vrot.slane %v2234, 7
      %v2281 = vsel %vm800, %v2279, %v2280
      %v2282 = vrot.slane %v2236, 7
      %v2283 = vrot.slane %v2237, 7
      %v2284 = vsel %vm800, %v2282, %v2283
      %v2285 = vsel %vm468, %v2216, 0
      %v2287 = vsel %vm468, %v2219, 0
      %v2289 = vsel %vm468, %v2222, 0
      %v2291 = vsel %vm468, %v2225, 0
      %v2293 = vsel %vm468, %v2228, 0
      %v2295 = vsel %vm468, %v2231, 0
      %v2297 = vsel %vm468, %v2234, 0
      %v2299 = vsel %vm468, %v2237, 0
      %2301 = vmatpush.msra.mxu0 0.0
      %2302 = vmatpush.msra.mxu0 0.0
      %2303 = vmatpush.msra.mxu0 0.0
      %2304 = vmatpush.msra.mxu0 0.0
      %2305 = vmatpush.msra.mxu0 0.0
      %2306 = vmatpush.msra.mxu0 0.0
      %2307 = vmatpush.msra.mxu0 0.0
      %2308 = vmatpush.msra.mxu0 0.0
      %2309 = vmatpush.msra.mxu0 0.0
      %2310 = vmatpush.msra.mxu0 0.0
      %2311 = vmatpush.msra.mxu0 0.0
      %2312 = vmatpush.msra.mxu0 0.0
      %2313 = vmatpush.msra.mxu0 0.0
      %2314 = vmatpush.msra.mxu0 0.0
      %2315 = vmatpush.msra.mxu0 0.0
      %2316 = vmatpush.msra.mxu0 %v2158
      %2317 = vmatmul.f32.gmra.mxu0 %v2285
      %v2318 = vpop.f32.mrf.mxu0
      %v2319 = vadd.f32 0.0, %v2318
      %2320 = vmatmul.f32.gmra.mxu0 %v2287
      %v2321 = vpop.f32.mrf.mxu0
      %v2322 = vadd.f32 0.0, %v2321
      %2323 = vmatmul.f32.gmra.mxu0 %v2289
      %v2324 = vpop.f32.mrf.mxu0
      %v2325 = vadd.f32 0.0, %v2324
      %2326 = vmatmul.f32.gmra.mxu0 %v2291
      %v2327 = vpop.f32.mrf.mxu0
      %v2328 = vadd.f32 0.0, %v2327
      %2329 = vmatmul.f32.gmra.mxu0 %v2293
      %v2330 = vpop.f32.mrf.mxu0
      %v2331 = vadd.f32 0.0, %v2330
      %2332 = vmatmul.f32.gmra.mxu0 %v2295
      %v2333 = vpop.f32.mrf.mxu0
      %v2334 = vadd.f32 0.0, %v2333
      %2335 = vmatmul.f32.gmra.mxu0 %v2297
      %v2336 = vpop.f32.mrf.mxu0
      %v2337 = vadd.f32 0.0, %v2336
      %2338 = vmatmul.f32.gmra.mxu0 %v2299
      %v2339 = vpop.f32.mrf.mxu0
      %v2340 = vadd.f32 0.0, %v2339
      %2341 = vdwg.mxu0
      %v2342 = vsel %vm468, %v2263, 0
      %v2344 = vsel %vm468, %v2266, 0
      %v2346 = vsel %vm468, %v2269, 0
      %v2348 = vsel %vm468, %v2272, 0
      %v2350 = vsel %vm468, %v2275, 0
      %v2352 = vsel %vm468, %v2278, 0
      %v2354 = vsel %vm468, %v2281, 0
      %v2356 = vsel %vm468, %v2284, 0
      %2358 = vmatpush.msra.mxu0 0.0
      %2359 = vmatpush.msra.mxu0 0.0
      %2360 = vmatpush.msra.mxu0 0.0
      %2361 = vmatpush.msra.mxu0 0.0
      %2362 = vmatpush.msra.mxu0 0.0
      %2363 = vmatpush.msra.mxu0 0.0
      %2364 = vmatpush.msra.mxu0 0.0
      %2365 = vmatpush.msra.mxu0 0.0
      %2366 = vmatpush.msra.mxu0 0.0
      %2367 = vmatpush.msra.mxu0 0.0
      %2368 = vmatpush.msra.mxu0 0.0
      %2369 = vmatpush.msra.mxu0 0.0
      %2370 = vmatpush.msra.mxu0 0.0
      %2371 = vmatpush.msra.mxu0 0.0
      %2372 = vmatpush.msra.mxu0 0.0
      %2373 = vmatpush.msra.mxu0 %v2157
      %2374 = vmatmul.f32.gmra.mxu0 %v2342
      %v2375 = vpop.f32.mrf.mxu0
      %v2376 = vadd.f32 %v2319, %v2375
      %2377 = vmatmul.f32.gmra.mxu0 %v2344
      %v2378 = vpop.f32.mrf.mxu0
      %v2379 = vadd.f32 %v2322, %v2378
      %2380 = vmatmul.f32.gmra.mxu0 %v2346
      %v2381 = vpop.f32.mrf.mxu0
      %v2382 = vadd.f32 %v2325, %v2381
      %2383 = vmatmul.f32.gmra.mxu0 %v2348
      %v2384 = vpop.f32.mrf.mxu0
      %v2385 = vadd.f32 %v2328, %v2384
      %2386 = vmatmul.f32.gmra.mxu0 %v2350
      %v2387 = vpop.f32.mrf.mxu0
      %v2388 = vadd.f32 %v2331, %v2387
      %2389 = vmatmul.f32.gmra.mxu0 %v2352
      %v2390 = vpop.f32.mrf.mxu0
      %v2391 = vadd.f32 %v2334, %v2390
      %2392 = vmatmul.f32.gmra.mxu0 %v2354
      %v2393 = vpop.f32.mrf.mxu0
      %v2394 = vadd.f32 %v2337, %v2393
      %2395 = vmatmul.f32.gmra.mxu0 %v2356
      %v2396 = vpop.f32.mrf.mxu0
      %v2397 = vadd.f32 %v2340, %v2396
      %2398 = vdwg.mxu0
      %v2407 = vrot.slane %v2216, 1
      %v2408 = vrot.slane %v2217, 1
      %v2409 = vsel %vm1673, %v2407, %v2408
      %v2410 = vrot.slane %v2219, 1
      %v2411 = vrot.slane %v2220, 1
      %v2412 = vsel %vm1673, %v2410, %v2411
      %v2413 = vrot.slane %v2222, 1
      %v2414 = vrot.slane %v2223, 1
      %v2415 = vsel %vm1673, %v2413, %v2414
      %v2416 = vrot.slane %v2225, 1
      %v2417 = vrot.slane %v2226, 1
      %v2418 = vsel %vm1673, %v2416, %v2417
      %v2419 = vrot.slane %v2228, 1
      %v2420 = vrot.slane %v2229, 1
      %v2421 = vsel %vm1673, %v2419, %v2420
      %v2422 = vrot.slane %v2231, 1
      %v2423 = vrot.slane %v2232, 1
      %v2424 = vsel %vm1673, %v2422, %v2423
      %v2425 = vrot.slane %v2234, 1
      %v2426 = vrot.slane %v2235, 1
      %v2427 = vsel %vm1673, %v2425, %v2426
      %v2428 = vrot.slane %v2237, 1
      %v2429 = vrot.slane %v2238, 1
      %v2430 = vsel %vm1673, %v2428, %v2429
      %v2431 = vsel %vm468, %v2409, 0
      %v2433 = vsel %vm468, %v2412, 0
      %v2435 = vsel %vm468, %v2415, 0
      %v2437 = vsel %vm468, %v2418, 0
      %v2439 = vsel %vm468, %v2421, 0
      %v2441 = vsel %vm468, %v2424, 0
      %v2443 = vsel %vm468, %v2427, 0
      %v2445 = vsel %vm468, %v2430, 0
      %2447 = vmatpush.msra.mxu0 0.0
      %2448 = vmatpush.msra.mxu0 0.0
      %2449 = vmatpush.msra.mxu0 0.0
      %2450 = vmatpush.msra.mxu0 0.0
      %2451 = vmatpush.msra.mxu0 0.0
      %2452 = vmatpush.msra.mxu0 0.0
      %2453 = vmatpush.msra.mxu0 0.0
      %2454 = vmatpush.msra.mxu0 0.0
      %2455 = vmatpush.msra.mxu0 0.0
      %2456 = vmatpush.msra.mxu0 0.0
      %2457 = vmatpush.msra.mxu0 0.0
      %2458 = vmatpush.msra.mxu0 0.0
      %2459 = vmatpush.msra.mxu0 0.0
      %2460 = vmatpush.msra.mxu0 0.0
      %2461 = vmatpush.msra.mxu0 0.0
      %2462 = vmatpush.msra.mxu0 %v2159
      %2463 = vmatmul.f32.gmra.mxu0 %v2431
      %v2464 = vpop.f32.mrf.mxu0
      %v2465 = vadd.f32 0.0, %v2464
      %2466 = vmatmul.f32.gmra.mxu0 %v2433
      %v2467 = vpop.f32.mrf.mxu0
      %v2468 = vadd.f32 0.0, %v2467
      %2469 = vmatmul.f32.gmra.mxu0 %v2435
      %v2470 = vpop.f32.mrf.mxu0
      %v2471 = vadd.f32 0.0, %v2470
      %2472 = vmatmul.f32.gmra.mxu0 %v2437
      %v2473 = vpop.f32.mrf.mxu0
      %v2474 = vadd.f32 0.0, %v2473
      %2475 = vmatmul.f32.gmra.mxu0 %v2439
      %v2476 = vpop.f32.mrf.mxu0
      %v2477 = vadd.f32 0.0, %v2476
      %2478 = vmatmul.f32.gmra.mxu0 %v2441
      %v2479 = vpop.f32.mrf.mxu0
      %v2480 = vadd.f32 0.0, %v2479
      %2481 = vmatmul.f32.gmra.mxu0 %v2443
      %v2482 = vpop.f32.mrf.mxu0
      %v2483 = vadd.f32 0.0, %v2482
      %2484 = vmatmul.f32.gmra.mxu0 %v2445
      %v2485 = vpop.f32.mrf.mxu0
      %v2486 = vadd.f32 0.0, %v2485
      %2487 = vdwg.mxu0
      %v2488 = vadd.f32 %v2376, %v2465
      %v2489 = vadd.f32 %v2379, %v2468
      %v2490 = vadd.f32 %v2382, %v2471
      %v2491 = vadd.f32 %v2385, %v2474
      %v2492 = vadd.f32 %v2388, %v2477
      %v2493 = vadd.f32 %v2391, %v2480
      %v2494 = vadd.f32 %v2394, %v2483
      %v2495 = vadd.f32 %v2397, %v2486
      %v2498 = vrot.slane %v2239, 7
      %v2499 = vrot.slane %v2240, 7
      %v2500 = vsel %vm800, %v2498, %v2499
      %v2501 = vsel %vm468, %v2500, 0
      %2503 = vmatpush.msra.mxu0 0.0
      %2504 = vmatpush.msra.mxu0 0.0
      %2505 = vmatpush.msra.mxu0 0.0
      %2506 = vmatpush.msra.mxu0 0.0
      %2507 = vmatpush.msra.mxu0 0.0
      %2508 = vmatpush.msra.mxu0 0.0
      %2509 = vmatpush.msra.mxu0 0.0
      %2510 = vmatpush.msra.mxu0 0.0
      %2511 = vmatpush.msra.mxu0 0.0
      %2512 = vmatpush.msra.mxu0 0.0
      %2513 = vmatpush.msra.mxu0 0.0
      %2514 = vmatpush.msra.mxu0 0.0
      %2515 = vmatpush.msra.mxu0 0.0
      %2516 = vmatpush.msra.mxu0 0.0
      %2517 = vmatpush.msra.mxu0 0.0
      %2518 = vmatpush.msra.mxu0 %v2160
      %2519 = vmatmul.f32.gmra.mxu0 %v2344
      %v2520 = vpop.f32.mrf.mxu0
      %v2521 = vadd.f32 0.0, %v2520
      %2522 = vmatmul.f32.gmra.mxu0 %v2346
      %v2523 = vpop.f32.mrf.mxu0
      %v2524 = vadd.f32 0.0, %v2523
      %2525 = vmatmul.f32.gmra.mxu0 %v2348
      %v2526 = vpop.f32.mrf.mxu0
      %v2527 = vadd.f32 0.0, %v2526
      %2528 = vmatmul.f32.gmra.mxu0 %v2350
      %v2529 = vpop.f32.mrf.mxu0
      %v2530 = vadd.f32 0.0, %v2529
      %2531 = vmatmul.f32.gmra.mxu0 %v2352
      %v2532 = vpop.f32.mrf.mxu0
      %v2533 = vadd.f32 0.0, %v2532
      %2534 = vmatmul.f32.gmra.mxu0 %v2354
      %v2535 = vpop.f32.mrf.mxu0
      %v2536 = vadd.f32 0.0, %v2535
      %2537 = vmatmul.f32.gmra.mxu0 %v2356
      %v2538 = vpop.f32.mrf.mxu0
      %v2539 = vadd.f32 0.0, %v2538
      %2540 = vmatmul.f32.gmra.mxu0 %v2501
      %v2541 = vpop.f32.mrf.mxu0
      %v2542 = vadd.f32 0.0, %v2541
      %2543 = vdwg.mxu0
      %v2544 = vadd.f32 %v2488, %v2521
      %v2545 = vadd.f32 %v2489, %v2524
      %v2546 = vadd.f32 %v2490, %v2527
      %v2547 = vadd.f32 %v2491, %v2530
      %v2548 = vadd.f32 %v2492, %v2533
      %v2549 = vadd.f32 %v2493, %v2536
      %v2550 = vadd.f32 %v2494, %v2539
      %v2551 = vadd.f32 %v2495, %v2542
      %v2552 = vsel %vm468, %v2240, 0
      %2554 = vmatpush.msra.mxu0 0.0
      %2555 = vmatpush.msra.mxu0 0.0
      %2556 = vmatpush.msra.mxu0 0.0
      %2557 = vmatpush.msra.mxu0 0.0
      %2558 = vmatpush.msra.mxu0 0.0
      %2559 = vmatpush.msra.mxu0 0.0
      %2560 = vmatpush.msra.mxu0 0.0
      %2561 = vmatpush.msra.mxu0 0.0
      %2562 = vmatpush.msra.mxu0 0.0
      %2563 = vmatpush.msra.mxu0 0.0
      %2564 = vmatpush.msra.mxu0 0.0
      %2565 = vmatpush.msra.mxu0 0.0
      %2566 = vmatpush.msra.mxu0 0.0
      %2567 = vmatpush.msra.mxu0 0.0
      %2568 = vmatpush.msra.mxu0 0.0
      %2569 = vmatpush.msra.mxu0 %v2161
      %2570 = vmatmul.f32.gmra.mxu0 %v2287
      %v2571 = vpop.f32.mrf.mxu0
      %v2572 = vadd.f32 0.0, %v2571
      %2573 = vmatmul.f32.gmra.mxu0 %v2289
      %v2574 = vpop.f32.mrf.mxu0
      %v2575 = vadd.f32 0.0, %v2574
      %2576 = vmatmul.f32.gmra.mxu0 %v2291
      %v2577 = vpop.f32.mrf.mxu0
      %v2578 = vadd.f32 0.0, %v2577
      %2579 = vmatmul.f32.gmra.mxu0 %v2293
      %v2580 = vpop.f32.mrf.mxu0
      %v2581 = vadd.f32 0.0, %v2580
      %2582 = vmatmul.f32.gmra.mxu0 %v2295
      %v2583 = vpop.f32.mrf.mxu0
      %v2584 = vadd.f32 0.0, %v2583
      %2585 = vmatmul.f32.gmra.mxu0 %v2297
      %v2586 = vpop.f32.mrf.mxu0
      %v2587 = vadd.f32 0.0, %v2586
      %2588 = vmatmul.f32.gmra.mxu0 %v2299
      %v2589 = vpop.f32.mrf.mxu0
      %v2590 = vadd.f32 0.0, %v2589
      %2591 = vmatmul.f32.gmra.mxu0 %v2552
      %v2592 = vpop.f32.mrf.mxu0
      %v2593 = vadd.f32 0.0, %v2592
      %2594 = vdwg.mxu0
      %v2595 = vadd.f32 %v2544, %v2572
      %v2596 = vadd.f32 %v2545, %v2575
      %v2597 = vadd.f32 %v2546, %v2578
      %v2598 = vadd.f32 %v2547, %v2581
      %v2599 = vadd.f32 %v2548, %v2584
      %v2600 = vadd.f32 %v2549, %v2587
      %v2601 = vadd.f32 %v2550, %v2590
      %v2602 = vadd.f32 %v2551, %v2593
      %v2604 = vrot.slane %v2240, 1
      %v2605 = vrot.slane %v2241, 1
      %v2606 = vsel %vm1673, %v2604, %v2605
      %v2607 = vsel %vm468, %v2606, 0
      %2609 = vmatpush.msra.mxu0 0.0
      %2610 = vmatpush.msra.mxu0 0.0
      %2611 = vmatpush.msra.mxu0 0.0
      %2612 = vmatpush.msra.mxu0 0.0
      %2613 = vmatpush.msra.mxu0 0.0
      %2614 = vmatpush.msra.mxu0 0.0
      %2615 = vmatpush.msra.mxu0 0.0
      %2616 = vmatpush.msra.mxu0 0.0
      %2617 = vmatpush.msra.mxu0 0.0
      %2618 = vmatpush.msra.mxu0 0.0
      %2619 = vmatpush.msra.mxu0 0.0
      %2620 = vmatpush.msra.mxu0 0.0
      %2621 = vmatpush.msra.mxu0 0.0
      %2622 = vmatpush.msra.mxu0 0.0
      %2623 = vmatpush.msra.mxu0 0.0
      %2624 = vmatpush.msra.mxu0 %v2162
      %2625 = vmatmul.f32.gmra.mxu0 %v2433
      %v2626 = vpop.f32.mrf.mxu0
      %v2627 = vadd.f32 0.0, %v2626
      %2628 = vmatmul.f32.gmra.mxu0 %v2435
      %v2629 = vpop.f32.mrf.mxu0
      %v2630 = vadd.f32 0.0, %v2629
      %2631 = vmatmul.f32.gmra.mxu0 %v2437
      %v2632 = vpop.f32.mrf.mxu0
      %v2633 = vadd.f32 0.0, %v2632
      %2634 = vmatmul.f32.gmra.mxu0 %v2439
      %v2635 = vpop.f32.mrf.mxu0
      %v2636 = vadd.f32 0.0, %v2635
      %2637 = vmatmul.f32.gmra.mxu0 %v2441
      %v2638 = vpop.f32.mrf.mxu0
      %v2639 = vadd.f32 0.0, %v2638
      %2640 = vmatmul.f32.gmra.mxu0 %v2443
      %v2641 = vpop.f32.mrf.mxu0
      %v2642 = vadd.f32 0.0, %v2641
      %2643 = vmatmul.f32.gmra.mxu0 %v2445
      %v2644 = vpop.f32.mrf.mxu0
      %v2645 = vadd.f32 0.0, %v2644
      %2646 = vmatmul.f32.gmra.mxu0 %v2607
      %v2647 = vpop.f32.mrf.mxu0
      %v2648 = vadd.f32 0.0, %v2647
      %2649 = vdwg.mxu0
      %v2650 = vadd.f32 %v2595, %v2627
      %v2651 = vadd.f32 %v2596, %v2630
      %v2652 = vadd.f32 %v2597, %v2633
      %v2653 = vadd.f32 %v2598, %v2636
      %v2654 = vadd.f32 %v2599, %v2639
      %v2655 = vadd.f32 %v2600, %v2642
      %v2656 = vadd.f32 %v2601, %v2645
      %v2657 = vadd.f32 %v2602, %v2648
      %v2660 = vrot.slane %v2242, 7
      %v2661 = vrot.slane %v2243, 7
      %v2662 = vsel %vm800, %v2660, %v2661
      %v2663 = vsel %vm468, %v2662, 0
      %2665 = vmatpush.msra.mxu0 0.0
      %2666 = vmatpush.msra.mxu0 0.0
      %2667 = vmatpush.msra.mxu0 0.0
      %2668 = vmatpush.msra.mxu0 0.0
      %2669 = vmatpush.msra.mxu0 0.0
      %2670 = vmatpush.msra.mxu0 0.0
      %2671 = vmatpush.msra.mxu0 0.0
      %2672 = vmatpush.msra.mxu0 0.0
      %2673 = vmatpush.msra.mxu0 0.0
      %2674 = vmatpush.msra.mxu0 0.0
      %2675 = vmatpush.msra.mxu0 0.0
      %2676 = vmatpush.msra.mxu0 0.0
      %2677 = vmatpush.msra.mxu0 0.0
      %2678 = vmatpush.msra.mxu0 0.0
      %2679 = vmatpush.msra.mxu0 0.0
      %2680 = vmatpush.msra.mxu0 %v2163
      %2681 = vmatmul.f32.gmra.mxu0 %v2346
      %v2682 = vpop.f32.mrf.mxu0
      %v2683 = vadd.f32 0.0, %v2682
      %2684 = vmatmul.f32.gmra.mxu0 %v2348
      %v2685 = vpop.f32.mrf.mxu0
      %v2686 = vadd.f32 0.0, %v2685
      %2687 = vmatmul.f32.gmra.mxu0 %v2350
      %v2688 = vpop.f32.mrf.mxu0
      %v2689 = vadd.f32 0.0, %v2688
      %2690 = vmatmul.f32.gmra.mxu0 %v2352
      %v2691 = vpop.f32.mrf.mxu0
      %v2692 = vadd.f32 0.0, %v2691
      %2693 = vmatmul.f32.gmra.mxu0 %v2354
      %v2694 = vpop.f32.mrf.mxu0
      %v2695 = vadd.f32 0.0, %v2694
      %2696 = vmatmul.f32.gmra.mxu0 %v2356
      %v2697 = vpop.f32.mrf.mxu0
      %v2698 = vadd.f32 0.0, %v2697
      %2699 = vmatmul.f32.gmra.mxu0 %v2501
      %v2700 = vpop.f32.mrf.mxu0
      %v2701 = vadd.f32 0.0, %v2700
      %2702 = vmatmul.f32.gmra.mxu0 %v2663
      %v2703 = vpop.f32.mrf.mxu0
      %v2704 = vadd.f32 0.0, %v2703
      %2705 = vdwg.mxu0
      %v2706 = vadd.f32 %v2650, %v2683
      %v2707 = vadd.f32 %v2651, %v2686
      %v2708 = vadd.f32 %v2652, %v2689
      %v2709 = vadd.f32 %v2653, %v2692
      %v2710 = vadd.f32 %v2654, %v2695
      %v2711 = vadd.f32 %v2655, %v2698
      %v2712 = vadd.f32 %v2656, %v2701
      %v2713 = vadd.f32 %v2657, %v2704
      %v2714 = vsel %vm468, %v2243, 0
      %2716 = vmatpush.msra.mxu0 0.0
      %2717 = vmatpush.msra.mxu0 0.0
      %2718 = vmatpush.msra.mxu0 0.0
      %2719 = vmatpush.msra.mxu0 0.0
      %2720 = vmatpush.msra.mxu0 0.0
      %2721 = vmatpush.msra.mxu0 0.0
      %2722 = vmatpush.msra.mxu0 0.0
      %2723 = vmatpush.msra.mxu0 0.0
      %2724 = vmatpush.msra.mxu0 0.0
      %2725 = vmatpush.msra.mxu0 0.0
      %2726 = vmatpush.msra.mxu0 0.0
      %2727 = vmatpush.msra.mxu0 0.0
      %2728 = vmatpush.msra.mxu0 0.0
      %2729 = vmatpush.msra.mxu0 0.0
      %2730 = vmatpush.msra.mxu0 0.0
      %2731 = vmatpush.msra.mxu0 %v2164
      %2732 = vmatmul.f32.gmra.mxu0 %v2289
      %v2733 = vpop.f32.mrf.mxu0
      %v2734 = vadd.f32 0.0, %v2733
      %2735 = vmatmul.f32.gmra.mxu0 %v2291
      %v2736 = vpop.f32.mrf.mxu0
      %v2737 = vadd.f32 0.0, %v2736
      %2738 = vmatmul.f32.gmra.mxu0 %v2293
      %v2739 = vpop.f32.mrf.mxu0
      %v2740 = vadd.f32 0.0, %v2739
      %2741 = vmatmul.f32.gmra.mxu0 %v2295
      %v2742 = vpop.f32.mrf.mxu0
      %v2743 = vadd.f32 0.0, %v2742
      %2744 = vmatmul.f32.gmra.mxu0 %v2297
      %v2745 = vpop.f32.mrf.mxu0
      %v2746 = vadd.f32 0.0, %v2745
      %2747 = vmatmul.f32.gmra.mxu0 %v2299
      %v2748 = vpop.f32.mrf.mxu0
      %v2749 = vadd.f32 0.0, %v2748
      %2750 = vmatmul.f32.gmra.mxu0 %v2552
      %v2751 = vpop.f32.mrf.mxu0
      %v2752 = vadd.f32 0.0, %v2751
      %2753 = vmatmul.f32.gmra.mxu0 %v2714
      %v2754 = vpop.f32.mrf.mxu0
      %v2755 = vadd.f32 0.0, %v2754
      %2756 = vdwg.mxu0
      %v2757 = vadd.f32 %v2706, %v2734
      %v2758 = vadd.f32 %v2707, %v2737
      %v2759 = vadd.f32 %v2708, %v2740
      %v2760 = vadd.f32 %v2709, %v2743
      %v2761 = vadd.f32 %v2710, %v2746
      %v2762 = vadd.f32 %v2711, %v2749
      %v2763 = vadd.f32 %v2712, %v2752
      %v2764 = vadd.f32 %v2713, %v2755
      %v2766 = vrot.slane %v2243, 1
      %v2767 = vrot.slane %v2244, 1
      %v2768 = vsel %vm1673, %v2766, %v2767
      %v2769 = vsel %vm468, %v2768, 0
      %2771 = vmatpush.msra.mxu0 0.0
      %2772 = vmatpush.msra.mxu0 0.0
      %2773 = vmatpush.msra.mxu0 0.0
      %2774 = vmatpush.msra.mxu0 0.0
      %2775 = vmatpush.msra.mxu0 0.0
      %2776 = vmatpush.msra.mxu0 0.0
      %2777 = vmatpush.msra.mxu0 0.0
      %2778 = vmatpush.msra.mxu0 0.0
      %2779 = vmatpush.msra.mxu0 0.0
      %2780 = vmatpush.msra.mxu0 0.0
      %2781 = vmatpush.msra.mxu0 0.0
      %2782 = vmatpush.msra.mxu0 0.0
      %2783 = vmatpush.msra.mxu0 0.0
      %2784 = vmatpush.msra.mxu0 0.0
      %2785 = vmatpush.msra.mxu0 0.0
      %2786 = vmatpush.msra.mxu0 %v2165
      %2787 = vmatmul.f32.gmra.mxu0 %v2435
      %v2788 = vpop.f32.mrf.mxu0
      %v2789 = vadd.f32 0.0, %v2788
      %2790 = vmatmul.f32.gmra.mxu0 %v2437
      %v2791 = vpop.f32.mrf.mxu0
      %v2792 = vadd.f32 0.0, %v2791
      %2793 = vmatmul.f32.gmra.mxu0 %v2439
      %v2794 = vpop.f32.mrf.mxu0
      %v2795 = vadd.f32 0.0, %v2794
      %2796 = vmatmul.f32.gmra.mxu0 %v2441
      %v2797 = vpop.f32.mrf.mxu0
      %v2798 = vadd.f32 0.0, %v2797
      %2799 = vmatmul.f32.gmra.mxu0 %v2443
      %v2800 = vpop.f32.mrf.mxu0
      %v2801 = vadd.f32 0.0, %v2800
      %2802 = vmatmul.f32.gmra.mxu0 %v2445
      %v2803 = vpop.f32.mrf.mxu0
      %v2804 = vadd.f32 0.0, %v2803
      %2805 = vmatmul.f32.gmra.mxu0 %v2607
      %v2806 = vpop.f32.mrf.mxu0
      %v2807 = vadd.f32 0.0, %v2806
      %2808 = vmatmul.f32.gmra.mxu0 %v2769
      %v2809 = vpop.f32.mrf.mxu0
      %v2810 = vadd.f32 0.0, %v2809
      %2811 = vdwg.mxu0
      %v2812 = vadd.f32 %v2757, %v2789
      %v2813 = vadd.f32 %v2758, %v2792
      %v2814 = vadd.f32 %v2759, %v2795
      %v2815 = vadd.f32 %v2760, %v2798
      %v2816 = vadd.f32 %v2761, %v2801
      %v2817 = vadd.f32 %v2762, %v2804
      %v2818 = vadd.f32 %v2763, %v2807
      %v2819 = vadd.f32 %v2764, %v2810
      %v2821 = vperm.slane %v2166, 0
      %v2823 = vmul.f32 %v2812, %v2821
      %v2824 = vmul.f32 %v2813, %v2821
      %v2825 = vmul.f32 %v2814, %v2821
      %v2826 = vmul.f32 %v2815, %v2821
      %v2827 = vmul.f32 %v2816, %v2821
      %v2828 = vmul.f32 %v2817, %v2821
      %v2829 = vmul.f32 %v2818, %v2821
      %v2830 = vmul.f32 %v2819, %v2821
      %v2832 = vperm.slane %v2167, 0
      %v2834 = vadd.f32 %v2823, %v2832
      %v2835 = vadd.f32 %v2824, %v2832
      %v2836 = vadd.f32 %v2825, %v2832
      %v2837 = vadd.f32 %v2826, %v2832
      %v2838 = vadd.f32 %v2827, %v2832
      %v2839 = vadd.f32 %v2828, %v2832
      %v2840 = vadd.f32 %v2829, %v2832
      %v2841 = vadd.f32 %v2830, %v2832
      %v2842 = vmax.f32 %v2834, 0.0
      %v2843 = vmax.f32 %v2835, 0.0
      %v2844 = vmax.f32 %v2836, 0.0
      %v2845 = vmax.f32 %v2837, 0.0
      %v2846 = vmax.f32 %v2838, 0.0
      %v2847 = vmax.f32 %v2839, 0.0
      %v2848 = vmax.f32 %v2840, 0.0
      %v2849 = vmax.f32 %v2841, 0.0
      %2850 = vst.msk [vmem:[%s1472 + $0x8] sm:$0xff] %vm468, %v2842
      %2851 = vst.msk [vmem:[%s1472 + $0x20] sm:$0xff] %vm468, %v2843
      %2852 = vst.msk [vmem:[%s1472 + $0x38] sm:$0xff] %vm468, %v2844
      %2853 = vst.msk [vmem:[%s1472 + $0x50] sm:$0xff] %vm468, %v2845
      %2854 = vst.msk [vmem:[%s1472 + $0x68] sm:$0xff] %vm468, %v2846
      %2855 = vst.msk [vmem:[%s1472 + $0x80] sm:$0xff] %vm468, %v2847
      %2856 = vst.msk [vmem:[%s1472 + $0x98] sm:$0xff] %vm468, %v2848
      %2857 = vst.msk [vmem:[%s1472 + $0xb0] sm:$0xff] %vm468, %v2849
      %v2858 = vld [vmem:[#allocation3] sm:$0xff]
      %v2859 = vld [vmem:[#allocation3 + $0x8] sm:$0xff]
      %v2860 = vld [vmem:[#allocation3 + $0x10] sm:$0x1]
      %v2861 = vld [vmem:[#allocation3 + $0x18] sm:$0xff]
      %v2862 = vld [vmem:[#allocation3 + $0x20] sm:$0xff]
      %v2863 = vld [vmem:[#allocation3 + $0x28] sm:$0x1]
      %v2864 = vld [vmem:[#allocation3 + $0x30] sm:$0xff]
      %v2865 = vld [vmem:[#allocation3 + $0x38] sm:$0xff]
      %v2866 = vld [vmem:[#allocation3 + $0x40] sm:$0x1]
      %v2867 = vld [vmem:[#allocation3 + $0x48] sm:$0xff]
      %v2868 = vld [vmem:[#allocation3 + $0x50] sm:$0xff]
      %v2869 = vld [vmem:[#allocation3 + $0x58] sm:$0x1]
      %v2870 = vld [vmem:[#allocation3 + $0x60] sm:$0xff]
      %v2871 = vld [vmem:[#allocation3 + $0x68] sm:$0xff]
      %v2872 = vld [vmem:[#allocation3 + $0x70] sm:$0x1]
      %v2873 = vld [vmem:[#allocation3 + $0x78] sm:$0xff]
      %v2874 = vld [vmem:[#allocation3 + $0x80] sm:$0xff]
      %v2875 = vld [vmem:[#allocation3 + $0x88] sm:$0x1]
      %v2876 = vld [vmem:[#allocation3 + $0x90] sm:$0xff]
      %v2877 = vld [vmem:[#allocation3 + $0x98] sm:$0xff]
      %v2878 = vld [vmem:[#allocation3 + $0xa0] sm:$0x1]
      %v2879 = vld [vmem:[#allocation3 + $0xa8] sm:$0xff]
      %v2880 = vld [vmem:[#allocation3 + $0xb0] sm:$0xff]
      %v2881 = vld [vmem:[#allocation3 + $0xb8] sm:$0x1]
      %v2882 = vld [vmem:[#allocation3 + $0xc0] sm:$0xff]
      %v2883 = vld [vmem:[#allocation3 + $0xc8] sm:$0xff]
      %v2884 = vld [vmem:[#allocation3 + $0xd0] sm:$0x1]
      %v2885 = vld [vmem:[#allocation3 + $0xd8] sm:$0xff]
      %v2886 = vld [vmem:[#allocation3 + $0xe0] sm:$0xff]
      %v2887 = vld [vmem:[#allocation3 + $0xe8] sm:$0x1]
      %v2904 = vrot.slane %v2858, 7
      %v2905 = vrot.slane %v2859, 7
      %v2906 = vsel %vm800, %v2904, %v2905
      %v2907 = vrot.slane %v2861, 7
      %v2908 = vrot.slane %v2862, 7
      %v2909 = vsel %vm800, %v2907, %v2908
      %v2910 = vrot.slane %v2864, 7
      %v2911 = vrot.slane %v2865, 7
      %v2912 = vsel %vm800, %v2910, %v2911
      %v2913 = vrot.slane %v2867, 7
      %v2914 = vrot.slane %v2868, 7
      %v2915 = vsel %vm800, %v2913, %v2914
      %v2916 = vrot.slane %v2870, 7
      %v2917 = vrot.slane %v2871, 7
      %v2918 = vsel %vm800, %v2916, %v2917
      %v2919 = vrot.slane %v2873, 7
      %v2920 = vrot.slane %v2874, 7
      %v2921 = vsel %vm800, %v2919, %v2920
      %v2922 = vrot.slane %v2876, 7
      %v2923 = vrot.slane %v2877, 7
      %v2924 = vsel %vm800, %v2922, %v2923
      %v2925 = vrot.slane %v2879, 7
      %v2926 = vrot.slane %v2880, 7
      %v2927 = vsel %vm800, %v2925, %v2926
      %v2928 = vsel %vm468, %v2859, 0
      %v2930 = vsel %vm468, %v2862, 0
      %v2932 = vsel %vm468, %v2865, 0
      %v2934 = vsel %vm468, %v2868, 0
      %v2936 = vsel %vm468, %v2871, 0
      %v2938 = vsel %vm468, %v2874, 0
      %v2940 = vsel %vm468, %v2877, 0
      %v2942 = vsel %vm468, %v2880, 0
      %2944 = vmatpush.msra.mxu0 0.0
      %2945 = vmatpush.msra.mxu0 0.0
      %2946 = vmatpush.msra.mxu0 0.0
      %2947 = vmatpush.msra.mxu0 0.0
      %2948 = vmatpush.msra.mxu0 0.0
      %2949 = vmatpush.msra.mxu0 0.0
      %2950 = vmatpush.msra.mxu0 0.0
      %2951 = vmatpush.msra.mxu0 0.0
      %2952 = vmatpush.msra.mxu0 0.0
      %2953 = vmatpush.msra.mxu0 0.0
      %2954 = vmatpush.msra.mxu0 0.0
      %2955 = vmatpush.msra.mxu0 0.0
      %2956 = vmatpush.msra.mxu0 0.0
      %2957 = vmatpush.msra.mxu0 0.0
      %2958 = vmatpush.msra.mxu0 0.0
      %2959 = vmatpush.msra.mxu0 %v2169
      %2960 = vmatmul.f32.gmra.mxu0 %v2928
      %v2961 = vpop.f32.mrf.mxu0
      %v2962 = vadd.f32 0.0, %v2961
      %2963 = vmatmul.f32.gmra.mxu0 %v2930
      %v2964 = vpop.f32.mrf.mxu0
      %v2965 = vadd.f32 0.0, %v2964
      %2966 = vmatmul.f32.gmra.mxu0 %v2932
      %v2967 = vpop.f32.mrf.mxu0
      %v2968 = vadd.f32 0.0, %v2967
      %2969 = vmatmul.f32.gmra.mxu0 %v2934
      %v2970 = vpop.f32.mrf.mxu0
      %v2971 = vadd.f32 0.0, %v2970
      %2972 = vmatmul.f32.gmra.mxu0 %v2936
      %v2973 = vpop.f32.mrf.mxu0
      %v2974 = vadd.f32 0.0, %v2973
      %2975 = vmatmul.f32.gmra.mxu0 %v2938
      %v2976 = vpop.f32.mrf.mxu0
      %v2977 = vadd.f32 0.0, %v2976
      %2978 = vmatmul.f32.gmra.mxu0 %v2940
      %v2979 = vpop.f32.mrf.mxu0
      %v2980 = vadd.f32 0.0, %v2979
      %2981 = vmatmul.f32.gmra.mxu0 %v2942
      %v2982 = vpop.f32.mrf.mxu0
      %v2983 = vadd.f32 0.0, %v2982
      %2984 = vdwg.mxu0
      %v2985 = vsel %vm468, %v2906, 0
      %v2987 = vsel %vm468, %v2909, 0
      %v2989 = vsel %vm468, %v2912, 0
      %v2991 = vsel %vm468, %v2915, 0
      %v2993 = vsel %vm468, %v2918, 0
      %v2995 = vsel %vm468, %v2921, 0
      %v2997 = vsel %vm468, %v2924, 0
      %v2999 = vsel %vm468, %v2927, 0
      %3001 = vmatpush.msra.mxu0 0.0
      %3002 = vmatpush.msra.mxu0 0.0
      %3003 = vmatpush.msra.mxu0 0.0
      %3004 = vmatpush.msra.mxu0 0.0
      %3005 = vmatpush.msra.mxu0 0.0
      %3006 = vmatpush.msra.mxu0 0.0
      %3007 = vmatpush.msra.mxu0 0.0
      %3008 = vmatpush.msra.mxu0 0.0
      %3009 = vmatpush.msra.mxu0 0.0
      %3010 = vmatpush.msra.mxu0 0.0
      %3011 = vmatpush.msra.mxu0 0.0
      %3012 = vmatpush.msra.mxu0 0.0
      %3013 = vmatpush.msra.mxu0 0.0
      %3014 = vmatpush.msra.mxu0 0.0
      %3015 = vmatpush.msra.mxu0 0.0
      %3016 = vmatpush.msra.mxu0 %v2168
      %3017 = vmatmul.f32.gmra.mxu0 %v2985
      %v3018 = vpop.f32.mrf.mxu0
      %v3019 = vadd.f32 %v2962, %v3018
      %3020 = vmatmul.f32.gmra.mxu0 %v2987
      %v3021 = vpop.f32.mrf.mxu0
      %v3022 = vadd.f32 %v2965, %v3021
      %3023 = vmatmul.f32.gmra.mxu0 %v2989
      %v3024 = vpop.f32.mrf.mxu0
      %v3025 = vadd.f32 %v2968, %v3024
      %3026 = vmatmul.f32.gmra.mxu0 %v2991
      %v3027 = vpop.f32.mrf.mxu0
      %v3028 = vadd.f32 %v2971, %v3027
      %3029 = vmatmul.f32.gmra.mxu0 %v2993
      %v3030 = vpop.f32.mrf.mxu0
      %v3031 = vadd.f32 %v2974, %v3030
      %3032 = vmatmul.f32.gmra.mxu0 %v2995
      %v3033 = vpop.f32.mrf.mxu0
      %v3034 = vadd.f32 %v2977, %v3033
      %3035 = vmatmul.f32.gmra.mxu0 %v2997
      %v3036 = vpop.f32.mrf.mxu0
      %v3037 = vadd.f32 %v2980, %v3036
      %3038 = vmatmul.f32.gmra.mxu0 %v2999
      %v3039 = vpop.f32.mrf.mxu0
      %v3040 = vadd.f32 %v2983, %v3039
      %3041 = vdwg.mxu0
      %v3050 = vrot.slane %v2859, 1
      %v3051 = vrot.slane %v2860, 1
      %v3052 = vsel %vm1673, %v3050, %v3051
      %v3053 = vrot.slane %v2862, 1
      %v3054 = vrot.slane %v2863, 1
      %v3055 = vsel %vm1673, %v3053, %v3054
      %v3056 = vrot.slane %v2865, 1
      %v3057 = vrot.slane %v2866, 1
      %v3058 = vsel %vm1673, %v3056, %v3057
      %v3059 = vrot.slane %v2868, 1
      %v3060 = vrot.slane %v2869, 1
      %v3061 = vsel %vm1673, %v3059, %v3060
      %v3062 = vrot.slane %v2871, 1
      %v3063 = vrot.slane %v2872, 1
      %v3064 = vsel %vm1673, %v3062, %v3063
      %v3065 = vrot.slane %v2874, 1
      %v3066 = vrot.slane %v2875, 1
      %v3067 = vsel %vm1673, %v3065, %v3066
      %v3068 = vrot.slane %v2877, 1
      %v3069 = vrot.slane %v2878, 1
      %v3070 = vsel %vm1673, %v3068, %v3069
      %v3071 = vrot.slane %v2880, 1
      %v3072 = vrot.slane %v2881, 1
      %v3073 = vsel %vm1673, %v3071, %v3072
      %v3074 = vsel %vm468, %v3052, 0
      %v3076 = vsel %vm468, %v3055, 0
      %v3078 = vsel %vm468, %v3058, 0
      %v3080 = vsel %vm468, %v3061, 0
      %v3082 = vsel %vm468, %v3064, 0
      %v3084 = vsel %vm468, %v3067, 0
      %v3086 = vsel %vm468, %v3070, 0
      %v3088 = vsel %vm468, %v3073, 0
      %3090 = vmatpush.msra.mxu0 0.0
      %3091 = vmatpush.msra.mxu0 0.0
      %3092 = vmatpush.msra.mxu0 0.0
      %3093 = vmatpush.msra.mxu0 0.0
      %3094 = vmatpush.msra.mxu0 0.0
      %3095 = vmatpush.msra.mxu0 0.0
      %3096 = vmatpush.msra.mxu0 0.0
      %3097 = vmatpush.msra.mxu0 0.0
      %3098 = vmatpush.msra.mxu0 0.0
      %3099 = vmatpush.msra.mxu0 0.0
      %3100 = vmatpush.msra.mxu0 0.0
      %3101 = vmatpush.msra.mxu0 0.0
      %3102 = vmatpush.msra.mxu0 0.0
      %3103 = vmatpush.msra.mxu0 0.0
      %3104 = vmatpush.msra.mxu0 0.0
      %3105 = vmatpush.msra.mxu0 %v2170
      %3106 = vmatmul.f32.gmra.mxu0 %v3074
      %v3107 = vpop.f32.mrf.mxu0
      %v3108 = vadd.f32 0.0, %v3107
      %3109 = vmatmul.f32.gmra.mxu0 %v3076
      %v3110 = vpop.f32.mrf.mxu0
      %v3111 = vadd.f32 0.0, %v3110
      %3112 = vmatmul.f32.gmra.mxu0 %v3078
      %v3113 = vpop.f32.mrf.mxu0
      %v3114 = vadd.f32 0.0, %v3113
      %3115 = vmatmul.f32.gmra.mxu0 %v3080
      %v3116 = vpop.f32.mrf.mxu0
      %v3117 = vadd.f32 0.0, %v3116
      %3118 = vmatmul.f32.gmra.mxu0 %v3082
      %v3119 = vpop.f32.mrf.mxu0
      %v3120 = vadd.f32 0.0, %v3119
      %3121 = vmatmul.f32.gmra.mxu0 %v3084
      %v3122 = vpop.f32.mrf.mxu0
      %v3123 = vadd.f32 0.0, %v3122
      %3124 = vmatmul.f32.gmra.mxu0 %v3086
      %v3125 = vpop.f32.mrf.mxu0
      %v3126 = vadd.f32 0.0, %v3125
      %3127 = vmatmul.f32.gmra.mxu0 %v3088
      %v3128 = vpop.f32.mrf.mxu0
      %v3129 = vadd.f32 0.0, %v3128
      %3130 = vdwg.mxu0
      %v3131 = vadd.f32 %v3019, %v3108
      %v3132 = vadd.f32 %v3022, %v3111
      %v3133 = vadd.f32 %v3025, %v3114
      %v3134 = vadd.f32 %v3028, %v3117
      %v3135 = vadd.f32 %v3031, %v3120
      %v3136 = vadd.f32 %v3034, %v3123
      %v3137 = vadd.f32 %v3037, %v3126
      %v3138 = vadd.f32 %v3040, %v3129
      %v3141 = vrot.slane %v2882, 7
      %v3142 = vrot.slane %v2883, 7
      %v3143 = vsel %vm800, %v3141, %v3142
      %v3144 = vsel %vm468, %v3143, 0
      %3146 = vmatpush.msra.mxu0 0.0
      %3147 = vmatpush.msra.mxu0 0.0
      %3148 = vmatpush.msra.mxu0 0.0
      %3149 = vmatpush.msra.mxu0 0.0
      %3150 = vmatpush.msra.mxu0 0.0
      %3151 = vmatpush.msra.mxu0 0.0
      %3152 = vmatpush.msra.mxu0 0.0
      %3153 = vmatpush.msra.mxu0 0.0
      %3154 = vmatpush.msra.mxu0 0.0
      %3155 = vmatpush.msra.mxu0 0.0
      %3156 = vmatpush.msra.mxu0 0.0
      %3157 = vmatpush.msra.mxu0 0.0
      %3158 = vmatpush.msra.mxu0 0.0
      %3159 = vmatpush.msra.mxu0 0.0
      %3160 = vmatpush.msra.mxu0 0.0
      %3161 = vmatpush.msra.mxu0 %v2171
      %3162 = vmatmul.f32.gmra.mxu0 %v2987
      %v3163 = vpop.f32.mrf.mxu0
      %v3164 = vadd.f32 0.0, %v3163
      %3165 = vmatmul.f32.gmra.mxu0 %v2989
      %v3166 = vpop.f32.mrf.mxu0
      %v3167 = vadd.f32 0.0, %v3166
      %3168 = vmatmul.f32.gmra.mxu0 %v2991
      %v3169 = vpop.f32.mrf.mxu0
      %v3170 = vadd.f32 0.0, %v3169
      %3171 = vmatmul.f32.gmra.mxu0 %v2993
      %v3172 = vpop.f32.mrf.mxu0
      %v3173 = vadd.f32 0.0, %v3172
      %3174 = vmatmul.f32.gmra.mxu0 %v2995
      %v3175 = vpop.f32.mrf.mxu0
      %v3176 = vadd.f32 0.0, %v3175
      %3177 = vmatmul.f32.gmra.mxu0 %v2997
      %v3178 = vpop.f32.mrf.mxu0
      %v3179 = vadd.f32 0.0, %v3178
      %3180 = vmatmul.f32.gmra.mxu0 %v2999
      %v3181 = vpop.f32.mrf.mxu0
      %v3182 = vadd.f32 0.0, %v3181
      %3183 = vmatmul.f32.gmra.mxu0 %v3144
      %v3184 = vpop.f32.mrf.mxu0
      %v3185 = vadd.f32 0.0, %v3184
      %3186 = vdwg.mxu0
      %v3187 = vadd.f32 %v3131, %v3164
      %v3188 = vadd.f32 %v3132, %v3167
      %v3189 = vadd.f32 %v3133, %v3170
      %v3190 = vadd.f32 %v3134, %v3173
      %v3191 = vadd.f32 %v3135, %v3176
      %v3192 = vadd.f32 %v3136, %v3179
      %v3193 = vadd.f32 %v3137, %v3182
      %v3194 = vadd.f32 %v3138, %v3185
      %v3195 = vsel %vm468, %v2883, 0
      %3197 = vmatpush.msra.mxu0 0.0
      %3198 = vmatpush.msra.mxu0 0.0
      %3199 = vmatpush.msra.mxu0 0.0
      %3200 = vmatpush.msra.mxu0 0.0
      %3201 = vmatpush.msra.mxu0 0.0
      %3202 = vmatpush.msra.mxu0 0.0
      %3203 = vmatpush.msra.mxu0 0.0
      %3204 = vmatpush.msra.mxu0 0.0
      %3205 = vmatpush.msra.mxu0 0.0
      %3206 = vmatpush.msra.mxu0 0.0
      %3207 = vmatpush.msra.mxu0 0.0
      %3208 = vmatpush.msra.mxu0 0.0
      %3209 = vmatpush.msra.mxu0 0.0
      %3210 = vmatpush.msra.mxu0 0.0
      %3211 = vmatpush.msra.mxu0 0.0
      %3212 = vmatpush.msra.mxu0 %v2172
      %3213 = vmatmul.f32.gmra.mxu0 %v2930
      %v3214 = vpop.f32.mrf.mxu0
      %v3215 = vadd.f32 0.0, %v3214
      %3216 = vmatmul.f32.gmra.mxu0 %v2932
      %v3217 = vpop.f32.mrf.mxu0
      %v3218 = vadd.f32 0.0, %v3217
      %3219 = vmatmul.f32.gmra.mxu0 %v2934
      %v3220 = vpop.f32.mrf.mxu0
      %v3221 = vadd.f32 0.0, %v3220
      %3222 = vmatmul.f32.gmra.mxu0 %v2936
      %v3223 = vpop.f32.mrf.mxu0
      %v3224 = vadd.f32 0.0, %v3223
      %3225 = vmatmul.f32.gmra.mxu0 %v2938
      %v3226 = vpop.f32.mrf.mxu0
      %v3227 = vadd.f32 0.0, %v3226
      %3228 = vmatmul.f32.gmra.mxu0 %v2940
      %v3229 = vpop.f32.mrf.mxu0
      %v3230 = vadd.f32 0.0, %v3229
      %3231 = vmatmul.f32.gmra.mxu0 %v2942
      %v3232 = vpop.f32.mrf.mxu0
      %v3233 = vadd.f32 0.0, %v3232
      %3234 = vmatmul.f32.gmra.mxu0 %v3195
      %v3235 = vpop.f32.mrf.mxu0
      %v3236 = vadd.f32 0.0, %v3235
      %3237 = vdwg.mxu0
      %v3238 = vadd.f32 %v3187, %v3215
      %v3239 = vadd.f32 %v3188, %v3218
      %v3240 = vadd.f32 %v3189, %v3221
      %v3241 = vadd.f32 %v3190, %v3224
      %v3242 = vadd.f32 %v3191, %v3227
      %v3243 = vadd.f32 %v3192, %v3230
      %v3244 = vadd.f32 %v3193, %v3233
      %v3245 = vadd.f32 %v3194, %v3236
      %v3247 = vrot.slane %v2883, 1
      %v3248 = vrot.slane %v2884, 1
      %v3249 = vsel %vm1673, %v3247, %v3248
      %v3250 = vsel %vm468, %v3249, 0
      %3252 = vmatpush.msra.mxu0 0.0
      %3253 = vmatpush.msra.mxu0 0.0
      %3254 = vmatpush.msra.mxu0 0.0
      %3255 = vmatpush.msra.mxu0 0.0
      %3256 = vmatpush.msra.mxu0 0.0
      %3257 = vmatpush.msra.mxu0 0.0
      %3258 = vmatpush.msra.mxu0 0.0
      %3259 = vmatpush.msra.mxu0 0.0
      %3260 = vmatpush.msra.mxu0 0.0
      %3261 = vmatpush.msra.mxu0 0.0
      %3262 = vmatpush.msra.mxu0 0.0
      %3263 = vmatpush.msra.mxu0 0.0
      %3264 = vmatpush.msra.mxu0 0.0
      %3265 = vmatpush.msra.mxu0 0.0
      %3266 = vmatpush.msra.mxu0 0.0
      %3267 = vmatpush.msra.mxu0 %v2173
      %3268 = vmatmul.f32.gmra.mxu0 %v3076
      %v3269 = vpop.f32.mrf.mxu0
      %v3270 = vadd.f32 0.0, %v3269
      %3271 = vmatmul.f32.gmra.mxu0 %v3078
      %v3272 = vpop.f32.mrf.mxu0
      %v3273 = vadd.f32 0.0, %v3272
      %3274 = vmatmul.f32.gmra.mxu0 %v3080
      %v3275 = vpop.f32.mrf.mxu0
      %v3276 = vadd.f32 0.0, %v3275
      %3277 = vmatmul.f32.gmra.mxu0 %v3082
      %v3278 = vpop.f32.mrf.mxu0
      %v3279 = vadd.f32 0.0, %v3278
      %3280 = vmatmul.f32.gmra.mxu0 %v3084
      %v3281 = vpop.f32.mrf.mxu0
      %v3282 = vadd.f32 0.0, %v3281
      %3283 = vmatmul.f32.gmra.mxu0 %v3086
      %v3284 = vpop.f32.mrf.mxu0
      %v3285 = vadd.f32 0.0, %v3284
      %3286 = vmatmul.f32.gmra.mxu0 %v3088
      %v3287 = vpop.f32.mrf.mxu0
      %v3288 = vadd.f32 0.0, %v3287
      %3289 = vmatmul.f32.gmra.mxu0 %v3250
      %v3290 = vpop.f32.mrf.mxu0
      %v3291 = vadd.f32 0.0, %v3290
      %3292 = vdwg.mxu0
      %v3293 = vadd.f32 %v3238, %v3270
      %v3294 = vadd.f32 %v3239, %v3273
      %v3295 = vadd.f32 %v3240, %v3276
      %v3296 = vadd.f32 %v3241, %v3279
      %v3297 = vadd.f32 %v3242, %v3282
      %v3298 = vadd.f32 %v3243, %v3285
      %v3299 = vadd.f32 %v3244, %v3288
      %v3300 = vadd.f32 %v3245, %v3291
      %v3303 = vrot.slane %v2885, 7
      %v3304 = vrot.slane %v2886, 7
      %v3305 = vsel %vm800, %v3303, %v3304
      %v3306 = vsel %vm468, %v3305, 0
      %3308 = vmatpush.msra.mxu0 0.0
      %3309 = vmatpush.msra.mxu0 0.0
      %3310 = vmatpush.msra.mxu0 0.0
      %3311 = vmatpush.msra.mxu0 0.0
      %3312 = vmatpush.msra.mxu0 0.0
      %3313 = vmatpush.msra.mxu0 0.0
      %3314 = vmatpush.msra.mxu0 0.0
      %3315 = vmatpush.msra.mxu0 0.0
      %3316 = vmatpush.msra.mxu0 0.0
      %3317 = vmatpush.msra.mxu0 0.0
      %3318 = vmatpush.msra.mxu0 0.0
      %3319 = vmatpush.msra.mxu0 0.0
      %3320 = vmatpush.msra.mxu0 0.0
      %3321 = vmatpush.msra.mxu0 0.0
      %3322 = vmatpush.msra.mxu0 0.0
      %3323 = vmatpush.msra.mxu0 %v2174
      %3324 = vmatmul.f32.gmra.mxu0 %v2989
      %v3325 = vpop.f32.mrf.mxu0
      %v3326 = vadd.f32 0.0, %v3325
      %3327 = vmatmul.f32.gmra.mxu0 %v2991
      %v3328 = vpop.f32.mrf.mxu0
      %v3329 = vadd.f32 0.0, %v3328
      %3330 = vmatmul.f32.gmra.mxu0 %v2993
      %v3331 = vpop.f32.mrf.mxu0
      %v3332 = vadd.f32 0.0, %v3331
      %3333 = vmatmul.f32.gmra.mxu0 %v2995
      %v3334 = vpop.f32.mrf.mxu0
      %v3335 = vadd.f32 0.0, %v3334
      %3336 = vmatmul.f32.gmra.mxu0 %v2997
      %v3337 = vpop.f32.mrf.mxu0
      %v3338 = vadd.f32 0.0, %v3337
      %3339 = vmatmul.f32.gmra.mxu0 %v2999
      %v3340 = vpop.f32.mrf.mxu0
      %v3341 = vadd.f32 0.0, %v3340
      %3342 = vmatmul.f32.gmra.mxu0 %v3144
      %v3343 = vpop.f32.mrf.mxu0
      %v3344 = vadd.f32 0.0, %v3343
      %3345 = vmatmul.f32.gmra.mxu0 %v3306
      %v3346 = vpop.f32.mrf.mxu0
      %v3347 = vadd.f32 0.0, %v3346
      %3348 = vdwg.mxu0
      %v3349 = vadd.f32 %v3293, %v3326
      %v3350 = vadd.f32 %v3294, %v3329
      %v3351 = vadd.f32 %v3295, %v3332
      %v3352 = vadd.f32 %v3296, %v3335
      %v3353 = vadd.f32 %v3297, %v3338
      %v3354 = vadd.f32 %v3298, %v3341
      %v3355 = vadd.f32 %v3299, %v3344
      %v3356 = vadd.f32 %v3300, %v3347
      %v3357 = vsel %vm468, %v2886, 0
      %3359 = vmatpush.msra.mxu0 0.0
      %3360 = vmatpush.msra.mxu0 0.0
      %3361 = vmatpush.msra.mxu0 0.0
      %3362 = vmatpush.msra.mxu0 0.0
      %3363 = vmatpush.msra.mxu0 0.0
      %3364 = vmatpush.msra.mxu0 0.0
      %3365 = vmatpush.msra.mxu0 0.0
      %3366 = vmatpush.msra.mxu0 0.0
      %3367 = vmatpush.msra.mxu0 0.0
      %3368 = vmatpush.msra.mxu0 0.0
      %3369 = vmatpush.msra.mxu0 0.0
      %3370 = vmatpush.msra.mxu0 0.0
      %3371 = vmatpush.msra.mxu0 0.0
      %3372 = vmatpush.msra.mxu0 0.0
      %3373 = vmatpush.msra.mxu0 0.0
      %3374 = vmatpush.msra.mxu0 %v2175
      %3375 = vmatmul.f32.gmra.mxu0 %v2932
      %v3376 = vpop.f32.mrf.mxu0
      %v3377 = vadd.f32 0.0, %v3376
      %3378 = vmatmul.f32.gmra.mxu0 %v2934
      %v3379 = vpop.f32.mrf.mxu0
      %v3380 = vadd.f32 0.0, %v3379
      %3381 = vmatmul.f32.gmra.mxu0 %v2936
      %v3382 = vpop.f32.mrf.mxu0
      %v3383 = vadd.f32 0.0, %v3382
      %3384 = vmatmul.f32.gmra.mxu0 %v2938
      %v3385 = vpop.f32.mrf.mxu0
      %v3386 = vadd.f32 0.0, %v3385
      %3387 = vmatmul.f32.gmra.mxu0 %v2940
      %v3388 = vpop.f32.mrf.mxu0
      %v3389 = vadd.f32 0.0, %v3388
      %3390 = vmatmul.f32.gmra.mxu0 %v2942
      %v3391 = vpop.f32.mrf.mxu0
      %v3392 = vadd.f32 0.0, %v3391
      %3393 = vmatmul.f32.gmra.mxu0 %v3195
      %v3394 = vpop.f32.mrf.mxu0
      %v3395 = vadd.f32 0.0, %v3394
      %3396 = vmatmul.f32.gmra.mxu0 %v3357
      %v3397 = vpop.f32.mrf.mxu0
      %v3398 = vadd.f32 0.0, %v3397
      %3399 = vdwg.mxu0
      %v3400 = vadd.f32 %v3349, %v3377
      %v3401 = vadd.f32 %v3350, %v3380
      %v3402 = vadd.f32 %v3351, %v3383
      %v3403 = vadd.f32 %v3352, %v3386
      %v3404 = vadd.f32 %v3353, %v3389
      %v3405 = vadd.f32 %v3354, %v3392
      %v3406 = vadd.f32 %v3355, %v3395
      %v3407 = vadd.f32 %v3356, %v3398
      %v3409 = vrot.slane %v2886, 1
      %v3410 = vrot.slane %v2887, 1
      %v3411 = vsel %vm1673, %v3409, %v3410
      %v3412 = vsel %vm468, %v3411, 0
      %3414 = vmatpush.msra.mxu0 0.0
      %3415 = vmatpush.msra.mxu0 0.0
      %3416 = vmatpush.msra.mxu0 0.0
      %3417 = vmatpush.msra.mxu0 0.0
      %3418 = vmatpush.msra.mxu0 0.0
      %3419 = vmatpush.msra.mxu0 0.0
      %3420 = vmatpush.msra.mxu0 0.0
      %3421 = vmatpush.msra.mxu0 0.0
      %3422 = vmatpush.msra.mxu0 0.0
      %3423 = vmatpush.msra.mxu0 0.0
      %3424 = vmatpush.msra.mxu0 0.0
      %3425 = vmatpush.msra.mxu0 0.0
      %3426 = vmatpush.msra.mxu0 0.0
      %3427 = vmatpush.msra.mxu0 0.0
      %3428 = vmatpush.msra.mxu0 0.0
      %3429 = vmatpush.msra.mxu0 %v2176
      %3430 = vmatmul.f32.gmra.mxu0 %v3078
      %v3431 = vpop.f32.mrf.mxu0
      %v3432 = vadd.f32 0.0, %v3431
      %3433 = vmatmul.f32.gmra.mxu0 %v3080
      %v3434 = vpop.f32.mrf.mxu0
      %v3435 = vadd.f32 0.0, %v3434
      %3436 = vmatmul.f32.gmra.mxu0 %v3082
      %v3437 = vpop.f32.mrf.mxu0
      %v3438 = vadd.f32 0.0, %v3437
      %3439 = vmatmul.f32.gmra.mxu0 %v3084
      %v3440 = vpop.f32.mrf.mxu0
      %v3441 = vadd.f32 0.0, %v3440
      %3442 = vmatmul.f32.gmra.mxu0 %v3086
      %v3443 = vpop.f32.mrf.mxu0
      %v3444 = vadd.f32 0.0, %v3443
      %3445 = vmatmul.f32.gmra.mxu0 %v3088
      %v3446 = vpop.f32.mrf.mxu0
      %v3447 = vadd.f32 0.0, %v3446
      %3448 = vmatmul.f32.gmra.mxu0 %v3250
      %v3449 = vpop.f32.mrf.mxu0
      %v3450 = vadd.f32 0.0, %v3449
      %3451 = vmatmul.f32.gmra.mxu0 %v3412
      %v3452 = vpop.f32.mrf.mxu0
      %v3453 = vadd.f32 0.0, %v3452
      %3454 = vdwg.mxu0
      %v3455 = vadd.f32 %v3400, %v3432
      %v3456 = vadd.f32 %v3401, %v3435
      %v3457 = vadd.f32 %v3402, %v3438
      %v3458 = vadd.f32 %v3403, %v3441
      %v3459 = vadd.f32 %v3404, %v3444
      %v3460 = vadd.f32 %v3405, %v3447
      %v3461 = vadd.f32 %v3406, %v3450
      %v3462 = vadd.f32 %v3407, %v3453
      %v3463 = vadd.f32 %v2132, %v3455
      %v3464 = vadd.f32 %v2135, %v3456
      %v3465 = vadd.f32 %v2138, %v3457
      %v3466 = vadd.f32 %v2141, %v3458
      %v3467 = vadd.f32 %v2144, %v3459
      %v3468 = vadd.f32 %v2147, %v3460
      %v3469 = vadd.f32 %v2150, %v3461
      %v3470 = vadd.f32 %v2153, %v3462
      %3471 = vst.msk [vmem:[%s467] sm:$0xff] %vm468, %v3463
      %3472 = vst.msk [vmem:[%s467 + $0x8] sm:$0xff] %vm468, %v3464
      %3473 = vst.msk [vmem:[%s467 + $0x10] sm:$0xff] %vm468, %v3465
      %3474 = vst.msk [vmem:[%s467 + $0x18] sm:$0xff] %vm468, %v3466
      %3475 = vst.msk [vmem:[%s467 + $0x20] sm:$0xff] %vm468, %v3467
      %3476 = vst.msk [vmem:[%s467 + $0x28] sm:$0xff] %vm468, %v3468
      %3477 = vst.msk [vmem:[%s467 + $0x30] sm:$0xff] %vm468, %v3469
      %3478 = vst.msk [vmem:[%s467 + $0x38] sm:$0xff] %vm468, %v3470
      %p3479 = scmp.lt.s32.totalorder %s25, 1
      %s3480 = scalar_select %p3479, %s25, 1
      %s3481 = smul.addr %s3480, 8
      %s3482 = smul.addr %s3481, 8
      %s3483 = scalar_lea.vmem %s14, %s3482
      // Predicated region
      $region77: #{network_block_forward.1} parent=75 // pred_check
        %p3484 = pneg %p342
      $region78: #{network_block_forward.1} parent=75 // pred_check_branch
        %3486 = sbr.rel (%p3484) target = $region80
      $region79: #{network_block_forward.1} parent=75 // pred_region
        _
      $region80: #{network_block_forward.1} parent=75 // pred_fallthru
        _
    $region76: #{network_block_forward.1} parent=5 // pred_fallthru
      _
    %p3487 = scmp.le.s32.totalorder 2, %s20
    // Predicated region
    $region81: #{network_block_forward.1} parent=5 // pred_check
      %p3488 = pneg %p3487
    $region82: #{network_block_forward.1} parent=5 // pred_check_branch
      %3490 = sbr.rel (%p3488) target = $region84
    $region83: #{network_block_forward.1} parent=5 // pred_region
      %s3491 = ssub.s32 %s20, 2
      // Predicated region
      $region85: #{network_block_forward.1} parent=83 // pred_check
        %p3492 = pneg %p348
      $region86: #{network_block_forward.1} parent=83 // pred_check_branch
        %3494 = sbr.rel (%p3492) target = $region88
      $region87: #{network_block_forward.1} parent=83 // pred_region
        %p3495 = scmp.lt.s32.totalorder %s26, 1
        %s3496 = scalar_select %p3495, %s26, 1
        %s3497 = smul.addr %s3496, 8
        %s3498 = smul.addr %s3497, 8
        %s3499 = scalar_lea.vmem %s14, %s3498
      $region88: #{network_block_forward.1} parent=83 // pred_fallthru
        _
    $region84: #{network_block_forward.1} parent=5 // pred_fallthru
      _
  $region6: #{network_block_forward.1} parent=0 // loop_footer
    %s24 = sadd.s32 1, %s20
  $region7: #{network_block_forward.1} parent=0 // loop_footer_branch
    %19 = sbr.rel target = $region3
  $region8: #{network_block_forward.1} parent=0 // loop_exit
    _

</llo_original>
